<compile_context>
chip_gen: v7x
topology: tpu7x:2x2x1
jax: 0.10.0
libtpu: 0.0.40
codegen_flags: <defaults>
</compile_context>

<pallas_src>
import numpy as np

import jax
import jax.numpy as jnp
from jax import lax
from jax.experimental import pallas as pl
from jax.experimental.pallas import tpu as pltpu


# ---------------------------------------------------------------------------
# One-hot gather matrices for in-kernel im2col of the stride-2 hidden convs.
# g[t, m, r] = 1  iff  patch-row m (= b*Ho*Wo + ho*Wo + wo) at tap t (= ky*kw+kx)
# reads input row r (= b*Hin*Win + h*Win + w); zero rows encode the padding.
# NOTE: the batch size is baked into these constants.
# ---------------------------------------------------------------------------
def _gather_matrices(batch, hin, win, kh, kw, stride, pad):
    ho = (hin + 2 * pad - kh) // stride + 1
    wo = (win + 2 * pad - kw) // stride + 1
    g = np.zeros((kh * kw, batch * ho * wo, batch * hin * win), np.float32)
    for b in range(batch):
        for i in range(ho):
            for j in range(wo):
                m = (b * ho + i) * wo + j
                for ky in range(kh):
                    for kx in range(kw):
                        h = stride * i + ky - pad
                        w = stride * j + kx - pad
                        if 0 <= h < hin and 0 <= w < win:
                            g[ky * kw + kx, m, (b * hin + h) * win + w] = 1.0
    return jnp.asarray(g), ho, wo


# ---------------------------------------------------------------------------
# Parameters (deterministic DCGAN-style init), already in matmul layout.
# ---------------------------------------------------------------------------
def init_params(key, *, patch_size, nc, nef, batch):
    # First conv: nc -> nef, k4 s2 p1.  Rows of the matmul weight are ordered
    # (cin, ky, kx) to match lax.conv_general_dilated_patches feature order.
    k1, key = jax.random.split(key)
    w = 0.02 * jax.random.normal(k1, (nef, nc, 4, 4), jnp.float32)
    w_first = jnp.transpose(w, (1, 2, 3, 0)).reshape(nc * 16, nef)

    csize, cnef = patch_size // 2, nef   # spatial size / channels after conv1
    mid = []
    while csize > 4:
        k1, key = jax.random.split(key)
        w = 0.02 * jax.random.normal(k1, (cnef * 2, cnef, 4, 4), jnp.float32)
        # rows ordered (ky, kx, cin) -> contiguous (cin)-blocks per tap
        w_mat = jnp.transpose(w, (2, 3, 1, 0)).reshape(16 * cnef, cnef * 2)
        g, ho, wo = _gather_matrices(batch, csize, csize, 4, 4, 2, 1)
        mid.append((g, w_mat))
        cnef *= 2
        csize //= 2

    # Final conv: cnef -> 1, kernel csize x csize, stride 1, pad 0.
    # Stored as (csize*csize, cnef): row = ky*csize + kx, col = cin.
    k1, key = jax.random.split(key)
    w = 0.02 * jax.random.normal(k1, (1, cnef, csize, csize), jnp.float32)
    w_last = jnp.transpose(w, (2, 3, 1, 0)).reshape(csize * csize, cnef)

    return {"w_first": w_first, "mid": tuple(mid), "w_last": w_last}


# ---------------------------------------------------------------------------
# Fused Pallas kernel: conv1 -> lrelu -> [convK -> BN -> lrelu]* -> conv_last
# -> sigmoid, everything resident in VMEM.
# ---------------------------------------------------------------------------
def _build_fused_kernel(n_mid, batch, rows_last, neg_slope=0.2, bn_eps=1e-5):
    def kernel(*refs):
        # refs layout: patches1, w_first, (g_l, w_l) * n_mid, w_last, out
        y = jnp.dot(refs[0][...], refs[1][...],
                    preferred_element_type=jnp.float32)          # (M1, nef)
        y = jnp.where(y >= 0.0, y, neg_slope * y)                # LeakyReLU

        for l in range(n_mid):
            g_ref = refs[2 + 2 * l]       # (16, M_out, M_in) one-hot gather
            w = refs[3 + 2 * l][...]      # (16*Cin, Cout)
            taps = g_ref.shape[0]
            cin = y.shape[1]
            acc = None
            for t in range(taps):
                # strided im2col as a row-gather matmul, then per-tap weights
                gathered = jnp.dot(g_ref[t], y,
                                   preferred_element_type=jnp.float32)
                part = jnp.dot(gathered, w[t * cin:(t + 1) * cin, :],
                               preferred_element_type=jnp.float32)
                acc = part if acc is None else acc + part
            y = acc                                              # (M_out, Cout)

            # BatchNorm2d (training-mode batch stats, weight=1, bias=0):
            # per-channel reduction over all rows, single pass.
            mean = jnp.mean(y, axis=0, keepdims=True)
            var = jnp.mean(y * y, axis=0, keepdims=True) - mean * mean
            var = jnp.maximum(var, 0.0)
            y = (y - mean) * lax.rsqrt(var + bn_eps)
            y = jnp.where(y >= 0.0, y, neg_slope * y)            # LeakyReLU

        # Final conv (csize x csize -> 1x1, Cout=1): VPU multiply + reduce.
        w_last = refs[2 + 2 * n_mid][...]                        # (rows_last, C)
        o_ref = refs[3 + 2 * n_mid]                              # (batch, 1)
        outs = []
        for b in range(batch):
            blk = y[b * rows_last:(b + 1) * rows_last, :]        # (rows_last, C)
            s = jnp.sum(blk * w_last, axis=1, keepdims=True)     # (rows_last, 1)
            s = jnp.sum(s, axis=0, keepdims=True)                # (1, 1)
            outs.append(1.0 / (1.0 + jnp.exp(-s)))               # Sigmoid
        o_ref[...] = jnp.concatenate(outs, axis=0)

    return kernel


# ---------------------------------------------------------------------------
# Forward pass (public wrapper, NCHW like PyTorch).
# ---------------------------------------------------------------------------
@jax.jit
def netlocalD_forward(x_nchw, params):
    B = x_nchw.shape[0]
    x = jnp.transpose(x_nchw, (0, 2, 3, 1))                      # NCHW -> NHWC

    # Layer-1 im2col in a single XLA op; feature order is (cin, ky, kx),
    # matching the precomputed w_first layout.
    patches = lax.conv_general_dilated_patches(
        x, filter_shape=(4, 4), window_strides=(2, 2),
        padding=((1, 1), (1, 1)),
        dimension_numbers=("NHWC", "HWIO", "NHWC"))
    _, ho, wo, kdim = patches.shape
    patches = patches.reshape(B * ho * wo, kdim)                 # (M1, K1)

    mid = params["mid"]
    w_first = params["w_first"]
    w_last = params["w_last"]
    n_mid = len(mid)
    rows_last = w_last.shape[0]

    inputs = [patches, w_first]
    in_specs = [
        pl.BlockSpec(patches.shape, lambda i: (0, 0)),
        pl.BlockSpec(w_first.shape, lambda i: (0, 0)),
    ]
    for g, w in mid:
        inputs += [g, w]
        in_specs += [
            pl.BlockSpec(g.shape, lambda i: (0, 0, 0)),
            pl.BlockSpec(w.shape, lambda i: (0, 0)),
        ]
    inputs.append(w_last)
    in_specs.append(pl.BlockSpec(w_last.shape, lambda i: (0, 0)))

    kernel = _build_fused_kernel(n_mid, B, rows_last)
    out = pl.pallas_call(
        kernel,
        out_shape=jax.ShapeDtypeStruct((B, 1), jnp.float32),
        grid=(1,),
        in_specs=in_specs,
        out_specs=pl.BlockSpec((B, 1), lambda i: (0, 0)),
        compiler_params=pltpu.CompilerParams(
            dimension_semantics=("arbitrary",)),
    )(*inputs)
    # final layer spatial size is 1x1 with 1 channel -> equivalent of .view(-1, 1)
    return out


if __name__ == "__main__":
    patch_size, nc, nef, batch = 16, 4, 8, 2

    key = jax.random.PRNGKey(0)
    kx, kp = jax.random.split(key)
    x = jax.random.normal(kx, (batch, nc, patch_size, patch_size), jnp.float32)
    params = init_params(kp, patch_size=patch_size, nc=nc, nef=nef, batch=batch)

    out = jax.block_until_ready(netlocalD_forward(x, params))
    assert out.shape == (batch, 1), out.shape
    assert bool(jnp.all(jnp.isfinite(out)))
    assert bool(jnp.all((out >= 0.0) & (out <= 1.0)))
    print("KERNEL_OK")
</pallas_src>

<mosaic_0001>
module attributes {stable_mosaic.version = 11 : i64} {
  func.func @kernel(%arg0: i32, %arg1: memref<128x64xf32, #tpu.memory_space<vmem>>, %arg2: memref<64x8xf32, #tpu.memory_space<vmem>>, %arg3: memref<16x32x128xf32, #tpu.memory_space<vmem>>, %arg4: memref<128x16xf32, #tpu.memory_space<vmem>>, %arg5: memref<16x16xf32, #tpu.memory_space<vmem>>, %arg6: memref<2x1xf32, #tpu.memory_space<vmem>>) attributes {dimension_semantics = [#tpu.dimension_semantics<arbitrary>], iteration_bounds = array<i64: 1>, scalar_prefetch = 0 : i64, scratch_operands = 0 : i64, tpu.core_type = #tpu.core_type<tc>, window_params = [{pipeline_mode = #tpu.pipeline_mode<synchronous>, transform_indices = @transform_0, window_bounds = array<i64: 128, 64>}, {pipeline_mode = #tpu.pipeline_mode<synchronous>, transform_indices = @transform_1, window_bounds = array<i64: 64, 8>}, {pipeline_mode = #tpu.pipeline_mode<synchronous>, transform_indices = @transform_2, window_bounds = array<i64: 16, 32, 128>}, {pipeline_mode = #tpu.pipeline_mode<synchronous>, transform_indices = @transform_3, window_bounds = array<i64: 128, 16>}, {pipeline_mode = #tpu.pipeline_mode<synchronous>, transform_indices = @transform_4, window_bounds = array<i64: 16, 16>}, {pipeline_mode = #tpu.pipeline_mode<synchronous>, transform_indices = @transform_5, window_bounds = array<i64: 2, 1>}]} {
    %c0 = arith.constant 0 : index
    %c0_0 = arith.constant 0 : index
    %0 = vector.load %arg1[%c0, %c0_0] : memref<128x64xf32, #tpu.memory_space<vmem>>, vector<128x64xf32>
    %c0_1 = arith.constant 0 : index
    %c0_2 = arith.constant 0 : index
    %1 = vector.load %arg2[%c0_1, %c0_2] : memref<64x8xf32, #tpu.memory_space<vmem>>, vector<64x8xf32>
    %cst = arith.constant dense<0.000000e+00> : vector<128x8xf32>
    %2 = tpu.matmul %0, %1, %cst {dimension_numbers = #tpu.dot_dimension_numbers<[1], [0], [0], [1], [0, 0, 1, 1], [], []>} : vector<128x64xf32>, vector<64x8xf32>, vector<128x8xf32> -> vector<128x8xf32>
    %cst_3 = arith.constant 0.000000e+00 : f32
    %3 = vector.broadcast %cst_3 : f32 to vector<128x8xf32>
    %4 = arith.cmpf oge, %2, %3 : vector<128x8xf32>
    %cst_4 = arith.constant 2.000000e-01 : f32
    %5 = vector.broadcast %cst_4 : f32 to vector<128x8xf32>
    %6 = arith.mulf %5, %2 : vector<128x8xf32>
    %7 = arith.select %4, %2, %6 : vector<128x8xi1>, vector<128x8xf32>
    %c0_5 = arith.constant 0 : index
    %c0_6 = arith.constant 0 : index
    %8 = vector.load %arg4[%c0_5, %c0_6] : memref<128x16xf32, #tpu.memory_space<vmem>>, vector<128x16xf32>
    %c0_7 = arith.constant 0 : index
    %c0_8 = arith.constant 0 : index
    %c0_9 = arith.constant 0 : index
    %9 = vector.load %arg3[%c0_7, %c0_8, %c0_9] : memref<16x32x128xf32, #tpu.memory_space<vmem>>, vector<1x32x128xf32>
    %10 = vector.shape_cast %9 : vector<1x32x128xf32> to vector<32x128xf32>
    %cst_10 = arith.constant dense<0.000000e+00> : vector<32x8xf32>
    %11 = tpu.matmul %10, %7, %cst_10 {dimension_numbers = #tpu.dot_dimension_numbers<[1], [0], [0], [1], [0, 0, 1, 1], [], []>} : vector<32x128xf32>, vector<128x8xf32>, vector<32x8xf32> -> vector<32x8xf32>
    %12 = vector.extract_strided_slice %8 {offsets = [0, 0], sizes = [8, 16], strides = [1, 1]} : vector<128x16xf32> to vector<8x16xf32>
    %cst_11 = arith.constant dense<0.000000e+00> : vector<32x16xf32>
    %13 = tpu.matmul %11, %12, %cst_11 {dimension_numbers = #tpu.dot_dimension_numbers<[1], [0], [0], [1], [0, 0, 1, 1], [], []>} : vector<32x8xf32>, vector<8x16xf32>, vector<32x16xf32> -> vector<32x16xf32>
    %c1 = arith.constant 1 : index
    %c0_12 = arith.constant 0 : index
    %c0_13 = arith.constant 0 : index
    %14 = vector.load %arg3[%c1, %c0_12, %c0_13] : memref<16x32x128xf32, #tpu.memory_space<vmem>>, vector<1x32x128xf32>
    %15 = vector.shape_cast %14 : vector<1x32x128xf32> to vector<32x128xf32>
    %cst_14 = arith.constant dense<0.000000e+00> : vector<32x8xf32>
    %16 = tpu.matmul %15, %7, %cst_14 {dimension_numbers = #tpu.dot_dimension_numbers<[1], [0], [0], [1], [0, 0, 1, 1], [], []>} : vector<32x128xf32>, vector<128x8xf32>, vector<32x8xf32> -> vector<32x8xf32>
    %17 = vector.extract_strided_slice %8 {offsets = [8, 0], sizes = [8, 16], strides = [1, 1]} : vector<128x16xf32> to vector<8x16xf32>
    %cst_15 = arith.constant dense<0.000000e+00> : vector<32x16xf32>
    %18 = tpu.matmul %16, %17, %cst_15 {dimension_numbers = #tpu.dot_dimension_numbers<[1], [0], [0], [1], [0, 0, 1, 1], [], []>} : vector<32x8xf32>, vector<8x16xf32>, vector<32x16xf32> -> vector<32x16xf32>
    %19 = arith.addf %13, %18 : vector<32x16xf32>
    %c2 = arith.constant 2 : index
    %c0_16 = arith.constant 0 : index
    %c0_17 = arith.constant 0 : index
    %20 = vector.load %arg3[%c2, %c0_16, %c0_17] : memref<16x32x128xf32, #tpu.memory_space<vmem>>, vector<1x32x128xf32>
    %21 = vector.shape_cast %20 : vector<1x32x128xf32> to vector<32x128xf32>
    %cst_18 = arith.constant dense<0.000000e+00> : vector<32x8xf32>
    %22 = tpu.matmul %21, %7, %cst_18 {dimension_numbers = #tpu.dot_dimension_numbers<[1], [0], [0], [1], [0, 0, 1, 1], [], []>} : vector<32x128xf32>, vector<128x8xf32>, vector<32x8xf32> -> vector<32x8xf32>
    %23 = vector.extract_strided_slice %8 {offsets = [16, 0], sizes = [8, 16], strides = [1, 1]} : vector<128x16xf32> to vector<8x16xf32>
    %cst_19 = arith.constant dense<0.000000e+00> : vector<32x16xf32>
    %24 = tpu.matmul %22, %23, %cst_19 {dimension_numbers = #tpu.dot_dimension_numbers<[1], [0], [0], [1], [0, 0, 1, 1], [], []>} : vector<32x8xf32>, vector<8x16xf32>, vector<32x16xf32> -> vector<32x16xf32>
    %25 = arith.addf %19, %24 : vector<32x16xf32>
    %c3 = arith.constant 3 : index
    %c0_20 = arith.constant 0 : index
    %c0_21 = arith.constant 0 : index
    %26 = vector.load %arg3[%c3, %c0_20, %c0_21] : memref<16x32x128xf32, #tpu.memory_space<vmem>>, vector<1x32x128xf32>
    %27 = vector.shape_cast %26 : vector<1x32x128xf32> to vector<32x128xf32>
    %cst_22 = arith.constant dense<0.000000e+00> : vector<32x8xf32>
    %28 = tpu.matmul %27, %7, %cst_22 {dimension_numbers = #tpu.dot_dimension_numbers<[1], [0], [0], [1], [0, 0, 1, 1], [], []>} : vector<32x128xf32>, vector<128x8xf32>, vector<32x8xf32> -> vector<32x8xf32>
    %29 = vector.extract_strided_slice %8 {offsets = [24, 0], sizes = [8, 16], strides = [1, 1]} : vector<128x16xf32> to vector<8x16xf32>
    %cst_23 = arith.constant dense<0.000000e+00> : vector<32x16xf32>
    %30 = tpu.matmul %28, %29, %cst_23 {dimension_numbers = #tpu.dot_dimension_numbers<[1], [0], [0], [1], [0, 0, 1, 1], [], []>} : vector<32x8xf32>, vector<8x16xf32>, vector<32x16xf32> -> vector<32x16xf32>
    %31 = arith.addf %25, %30 : vector<32x16xf32>
    %c4 = arith.constant 4 : index
    %c0_24 = arith.constant 0 : index
    %c0_25 = arith.constant 0 : index
    %32 = vector.load %arg3[%c4, %c0_24, %c0_25] : memref<16x32x128xf32, #tpu.memory_space<vmem>>, vector<1x32x128xf32>
    %33 = vector.shape_cast %32 : vector<1x32x128xf32> to vector<32x128xf32>
    %cst_26 = arith.constant dense<0.000000e+00> : vector<32x8xf32>
    %34 = tpu.matmul %33, %7, %cst_26 {dimension_numbers = #tpu.dot_dimension_numbers<[1], [0], [0], [1], [0, 0, 1, 1], [], []>} : vector<32x128xf32>, vector<128x8xf32>, vector<32x8xf32> -> vector<32x8xf32>
    %35 = vector.extract_strided_slice %8 {offsets = [32, 0], sizes = [8, 16], strides = [1, 1]} : vector<128x16xf32> to vector<8x16xf32>
    %cst_27 = arith.constant dense<0.000000e+00> : vector<32x16xf32>
    %36 = tpu.matmul %34, %35, %cst_27 {dimension_numbers = #tpu.dot_dimension_numbers<[1], [0], [0], [1], [0, 0, 1, 1], [], []>} : vector<32x8xf32>, vector<8x16xf32>, vector<32x16xf32> -> vector<32x16xf32>
    %37 = arith.addf %31, %36 : vector<32x16xf32>
    %c5 = arith.constant 5 : index
    %c0_28 = arith.constant 0 : index
    %c0_29 = arith.constant 0 : index
    %38 = vector.load %arg3[%c5, %c0_28, %c0_29] : memref<16x32x128xf32, #tpu.memory_space<vmem>>, vector<1x32x128xf32>
    %39 = vector.shape_cast %38 : vector<1x32x128xf32> to vector<32x128xf32>
    %cst_30 = arith.constant dense<0.000000e+00> : vector<32x8xf32>
    %40 = tpu.matmul %39, %7, %cst_30 {dimension_numbers = #tpu.dot_dimension_numbers<[1], [0], [0], [1], [0, 0, 1, 1], [], []>} : vector<32x128xf32>, vector<128x8xf32>, vector<32x8xf32> -> vector<32x8xf32>
    %41 = vector.extract_strided_slice %8 {offsets = [40, 0], sizes = [8, 16], strides = [1, 1]} : vector<128x16xf32> to vector<8x16xf32>
    %cst_31 = arith.constant dense<0.000000e+00> : vector<32x16xf32>
    %42 = tpu.matmul %40, %41, %cst_31 {dimension_numbers = #tpu.dot_dimension_numbers<[1], [0], [0], [1], [0, 0, 1, 1], [], []>} : vector<32x8xf32>, vector<8x16xf32>, vector<32x16xf32> -> vector<32x16xf32>
    %43 = arith.addf %37, %42 : vector<32x16xf32>
    %c6 = arith.constant 6 : index
    %c0_32 = arith.constant 0 : index
    %c0_33 = arith.constant 0 : index
    %44 = vector.load %arg3[%c6, %c0_32, %c0_33] : memref<16x32x128xf32, #tpu.memory_space<vmem>>, vector<1x32x128xf32>
    %45 = vector.shape_cast %44 : vector<1x32x128xf32> to vector<32x128xf32>
    %cst_34 = arith.constant dense<0.000000e+00> : vector<32x8xf32>
    %46 = tpu.matmul %45, %7, %cst_34 {dimension_numbers = #tpu.dot_dimension_numbers<[1], [0], [0], [1], [0, 0, 1, 1], [], []>} : vector<32x128xf32>, vector<128x8xf32>, vector<32x8xf32> -> vector<32x8xf32>
    %47 = vector.extract_strided_slice %8 {offsets = [48, 0], sizes = [8, 16], strides = [1, 1]} : vector<128x16xf32> to vector<8x16xf32>
    %cst_35 = arith.constant dense<0.000000e+00> : vector<32x16xf32>
    %48 = tpu.matmul %46, %47, %cst_35 {dimension_numbers = #tpu.dot_dimension_numbers<[1], [0], [0], [1], [0, 0, 1, 1], [], []>} : vector<32x8xf32>, vector<8x16xf32>, vector<32x16xf32> -> vector<32x16xf32>
    %49 = arith.addf %43, %48 : vector<32x16xf32>
    %c7 = arith.constant 7 : index
    %c0_36 = arith.constant 0 : index
    %c0_37 = arith.constant 0 : index
    %50 = vector.load %arg3[%c7, %c0_36, %c0_37] : memref<16x32x128xf32, #tpu.memory_space<vmem>>, vector<1x32x128xf32>
    %51 = vector.shape_cast %50 : vector<1x32x128xf32> to vector<32x128xf32>
    %cst_38 = arith.constant dense<0.000000e+00> : vector<32x8xf32>
    %52 = tpu.matmul %51, %7, %cst_38 {dimension_numbers = #tpu.dot_dimension_numbers<[1], [0], [0], [1], [0, 0, 1, 1], [], []>} : vector<32x128xf32>, vector<128x8xf32>, vector<32x8xf32> -> vector<32x8xf32>
    %53 = vector.extract_strided_slice %8 {offsets = [56, 0], sizes = [8, 16], strides = [1, 1]} : vector<128x16xf32> to vector<8x16xf32>
    %cst_39 = arith.constant dense<0.000000e+00> : vector<32x16xf32>
    %54 = tpu.matmul %52, %53, %cst_39 {dimension_numbers = #tpu.dot_dimension_numbers<[1], [0], [0], [1], [0, 0, 1, 1], [], []>} : vector<32x8xf32>, vector<8x16xf32>, vector<32x16xf32> -> vector<32x16xf32>
    %55 = arith.addf %49, %54 : vector<32x16xf32>
    %c8 = arith.constant 8 : index
    %c0_40 = arith.constant 0 : index
    %c0_41 = arith.constant 0 : index
    %56 = vector.load %arg3[%c8, %c0_40, %c0_41] : memref<16x32x128xf32, #tpu.memory_space<vmem>>, vector<1x32x128xf32>
    %57 = vector.shape_cast %56 : vector<1x32x128xf32> to vector<32x128xf32>
    %cst_42 = arith.constant dense<0.000000e+00> : vector<32x8xf32>
    %58 = tpu.matmul %57, %7, %cst_42 {dimension_numbers = #tpu.dot_dimension_numbers<[1], [0], [0], [1], [0, 0, 1, 1], [], []>} : vector<32x128xf32>, vector<128x8xf32>, vector<32x8xf32> -> vector<32x8xf32>
    %59 = vector.extract_strided_slice %8 {offsets = [64, 0], sizes = [8, 16], strides = [1, 1]} : vector<128x16xf32> to vector<8x16xf32>
    %cst_43 = arith.constant dense<0.000000e+00> : vector<32x16xf32>
    %60 = tpu.matmul %58, %59, %cst_43 {dimension_numbers = #tpu.dot_dimension_numbers<[1], [0], [0], [1], [0, 0, 1, 1], [], []>} : vector<32x8xf32>, vector<8x16xf32>, vector<32x16xf32> -> vector<32x16xf32>
    %61 = arith.addf %55, %60 : vector<32x16xf32>
    %c9 = arith.constant 9 : index
    %c0_44 = arith.constant 0 : index
    %c0_45 = arith.constant 0 : index
    %62 = vector.load %arg3[%c9, %c0_44, %c0_45] : memref<16x32x128xf32, #tpu.memory_space<vmem>>, vector<1x32x128xf32>
    %63 = vector.shape_cast %62 : vector<1x32x128xf32> to vector<32x128xf32>
    %cst_46 = arith.constant dense<0.000000e+00> : vector<32x8xf32>
    %64 = tpu.matmul %63, %7, %cst_46 {dimension_numbers = #tpu.dot_dimension_numbers<[1], [0], [0], [1], [0, 0, 1, 1], [], []>} : vector<32x128xf32>, vector<128x8xf32>, vector<32x8xf32> -> vector<32x8xf32>
    %65 = vector.extract_strided_slice %8 {offsets = [72, 0], sizes = [8, 16], strides = [1, 1]} : vector<128x16xf32> to vector<8x16xf32>
    %cst_47 = arith.constant dense<0.000000e+00> : vector<32x16xf32>
    %66 = tpu.matmul %64, %65, %cst_47 {dimension_numbers = #tpu.dot_dimension_numbers<[1], [0], [0], [1], [0, 0, 1, 1], [], []>} : vector<32x8xf32>, vector<8x16xf32>, vector<32x16xf32> -> vector<32x16xf32>
    %67 = arith.addf %61, %66 : vector<32x16xf32>
    %c10 = arith.constant 10 : index
    %c0_48 = arith.constant 0 : index
    %c0_49 = arith.constant 0 : index
    %68 = vector.load %arg3[%c10, %c0_48, %c0_49] : memref<16x32x128xf32, #tpu.memory_space<vmem>>, vector<1x32x128xf32>
    %69 = vector.shape_cast %68 : vector<1x32x128xf32> to vector<32x128xf32>
    %cst_50 = arith.constant dense<0.000000e+00> : vector<32x8xf32>
    %70 = tpu.matmul %69, %7, %cst_50 {dimension_numbers = #tpu.dot_dimension_numbers<[1], [0], [0], [1], [0, 0, 1, 1], [], []>} : vector<32x128xf32>, vector<128x8xf32>, vector<32x8xf32> -> vector<32x8xf32>
    %71 = vector.extract_strided_slice %8 {offsets = [80, 0], sizes = [8, 16], strides = [1, 1]} : vector<128x16xf32> to vector<8x16xf32>
    %cst_51 = arith.constant dense<0.000000e+00> : vector<32x16xf32>
    %72 = tpu.matmul %70, %71, %cst_51 {dimension_numbers = #tpu.dot_dimension_numbers<[1], [0], [0], [1], [0, 0, 1, 1], [], []>} : vector<32x8xf32>, vector<8x16xf32>, vector<32x16xf32> -> vector<32x16xf32>
    %73 = arith.addf %67, %72 : vector<32x16xf32>
    %c11 = arith.constant 11 : index
    %c0_52 = arith.constant 0 : index
    %c0_53 = arith.constant 0 : index
    %74 = vector.load %arg3[%c11, %c0_52, %c0_53] : memref<16x32x128xf32, #tpu.memory_space<vmem>>, vector<1x32x128xf32>
    %75 = vector.shape_cast %74 : vector<1x32x128xf32> to vector<32x128xf32>
    %cst_54 = arith.constant dense<0.000000e+00> : vector<32x8xf32>
    %76 = tpu.matmul %75, %7, %cst_54 {dimension_numbers = #tpu.dot_dimension_numbers<[1], [0], [0], [1], [0, 0, 1, 1], [], []>} : vector<32x128xf32>, vector<128x8xf32>, vector<32x8xf32> -> vector<32x8xf32>
    %77 = vector.extract_strided_slice %8 {offsets = [88, 0], sizes = [8, 16], strides = [1, 1]} : vector<128x16xf32> to vector<8x16xf32>
    %cst_55 = arith.constant dense<0.000000e+00> : vector<32x16xf32>
    %78 = tpu.matmul %76, %77, %cst_55 {dimension_numbers = #tpu.dot_dimension_numbers<[1], [0], [0], [1], [0, 0, 1, 1], [], []>} : vector<32x8xf32>, vector<8x16xf32>, vector<32x16xf32> -> vector<32x16xf32>
    %79 = arith.addf %73, %78 : vector<32x16xf32>
    %c12 = arith.constant 12 : index
    %c0_56 = arith.constant 0 : index
    %c0_57 = arith.constant 0 : index
    %80 = vector.load %arg3[%c12, %c0_56, %c0_57] : memref<16x32x128xf32, #tpu.memory_space<vmem>>, vector<1x32x128xf32>
    %81 = vector.shape_cast %80 : vector<1x32x128xf32> to vector<32x128xf32>
    %cst_58 = arith.constant dense<0.000000e+00> : vector<32x8xf32>
    %82 = tpu.matmul %81, %7, %cst_58 {dimension_numbers = #tpu.dot_dimension_numbers<[1], [0], [0], [1], [0, 0, 1, 1], [], []>} : vector<32x128xf32>, vector<128x8xf32>, vector<32x8xf32> -> vector<32x8xf32>
    %83 = vector.extract_strided_slice %8 {offsets = [96, 0], sizes = [8, 16], strides = [1, 1]} : vector<128x16xf32> to vector<8x16xf32>
    %cst_59 = arith.constant dense<0.000000e+00> : vector<32x16xf32>
    %84 = tpu.matmul %82, %83, %cst_59 {dimension_numbers = #tpu.dot_dimension_numbers<[1], [0], [0], [1], [0, 0, 1, 1], [], []>} : vector<32x8xf32>, vector<8x16xf32>, vector<32x16xf32> -> vector<32x16xf32>
    %85 = arith.addf %79, %84 : vector<32x16xf32>
    %c13 = arith.constant 13 : index
    %c0_60 = arith.constant 0 : index
    %c0_61 = arith.constant 0 : index
    %86 = vector.load %arg3[%c13, %c0_60, %c0_61] : memref<16x32x128xf32, #tpu.memory_space<vmem>>, vector<1x32x128xf32>
    %87 = vector.shape_cast %86 : vector<1x32x128xf32> to vector<32x128xf32>
    %cst_62 = arith.constant dense<0.000000e+00> : vector<32x8xf32>
    %88 = tpu.matmul %87, %7, %cst_62 {dimension_numbers = #tpu.dot_dimension_numbers<[1], [0], [0], [1], [0, 0, 1, 1], [], []>} : vector<32x128xf32>, vector<128x8xf32>, vector<32x8xf32> -> vector<32x8xf32>
    %89 = vector.extract_strided_slice %8 {offsets = [104, 0], sizes = [8, 16], strides = [1, 1]} : vector<128x16xf32> to vector<8x16xf32>
    %cst_63 = arith.constant dense<0.000000e+00> : vector<32x16xf32>
    %90 = tpu.matmul %88, %89, %cst_63 {dimension_numbers = #tpu.dot_dimension_numbers<[1], [0], [0], [1], [0, 0, 1, 1], [], []>} : vector<32x8xf32>, vector<8x16xf32>, vector<32x16xf32> -> vector<32x16xf32>
    %91 = arith.addf %85, %90 : vector<32x16xf32>
    %c14 = arith.constant 14 : index
    %c0_64 = arith.constant 0 : index
    %c0_65 = arith.constant 0 : index
    %92 = vector.load %arg3[%c14, %c0_64, %c0_65] : memref<16x32x128xf32, #tpu.memory_space<vmem>>, vector<1x32x128xf32>
    %93 = vector.shape_cast %92 : vector<1x32x128xf32> to vector<32x128xf32>
    %cst_66 = arith.constant dense<0.000000e+00> : vector<32x8xf32>
    %94 = tpu.matmul %93, %7, %cst_66 {dimension_numbers = #tpu.dot_dimension_numbers<[1], [0], [0], [1], [0, 0, 1, 1], [], []>} : vector<32x128xf32>, vector<128x8xf32>, vector<32x8xf32> -> vector<32x8xf32>
    %95 = vector.extract_strided_slice %8 {offsets = [112, 0], sizes = [8, 16], strides = [1, 1]} : vector<128x16xf32> to vector<8x16xf32>
    %cst_67 = arith.constant dense<0.000000e+00> : vector<32x16xf32>
    %96 = tpu.matmul %94, %95, %cst_67 {dimension_numbers = #tpu.dot_dimension_numbers<[1], [0], [0], [1], [0, 0, 1, 1], [], []>} : vector<32x8xf32>, vector<8x16xf32>, vector<32x16xf32> -> vector<32x16xf32>
    %97 = arith.addf %91, %96 : vector<32x16xf32>
    %c15 = arith.constant 15 : index
    %c0_68 = arith.constant 0 : index
    %c0_69 = arith.constant 0 : index
    %98 = vector.load %arg3[%c15, %c0_68, %c0_69] : memref<16x32x128xf32, #tpu.memory_space<vmem>>, vector<1x32x128xf32>
    %99 = vector.shape_cast %98 : vector<1x32x128xf32> to vector<32x128xf32>
    %cst_70 = arith.constant dense<0.000000e+00> : vector<32x8xf32>
    %100 = tpu.matmul %99, %7, %cst_70 {dimension_numbers = #tpu.dot_dimension_numbers<[1], [0], [0], [1], [0, 0, 1, 1], [], []>} : vector<32x128xf32>, vector<128x8xf32>, vector<32x8xf32> -> vector<32x8xf32>
    %101 = vector.extract_strided_slice %8 {offsets = [120, 0], sizes = [8, 16], strides = [1, 1]} : vector<128x16xf32> to vector<8x16xf32>
    %cst_71 = arith.constant dense<0.000000e+00> : vector<32x16xf32>
    %102 = tpu.matmul %100, %101, %cst_71 {dimension_numbers = #tpu.dot_dimension_numbers<[1], [0], [0], [1], [0, 0, 1, 1], [], []>} : vector<32x8xf32>, vector<8x16xf32>, vector<32x16xf32> -> vector<32x16xf32>
    %103 = arith.addf %97, %102 : vector<32x16xf32>
    %cst_72 = arith.constant dense<0.000000e+00> : vector<16xf32>
    %104 = vector.multi_reduction <add>, %103, %cst_72 [0] : vector<32x16xf32> to vector<16xf32>
    %105 = vector.shape_cast %104 : vector<16xf32> to vector<1x16xf32>
    %cst_73 = arith.constant 3.200000e+01 : f32
    %106 = vector.broadcast %cst_73 : f32 to vector<1x16xf32>
    %107 = arith.divf %105, %106 : vector<1x16xf32>
    %108 = arith.mulf %103, %103 : vector<32x16xf32>
    %cst_74 = arith.constant dense<0.000000e+00> : vector<16xf32>
    %109 = vector.multi_reduction <add>, %108, %cst_74 [0] : vector<32x16xf32> to vector<16xf32>
    %110 = vector.shape_cast %109 : vector<16xf32> to vector<1x16xf32>
    %cst_75 = arith.constant 3.200000e+01 : f32
    %111 = vector.broadcast %cst_75 : f32 to vector<1x16xf32>
    %112 = arith.divf %110, %111 : vector<1x16xf32>
    %113 = arith.mulf %107, %107 : vector<1x16xf32>
    %114 = arith.subf %112, %113 : vector<1x16xf32>
    %cst_76 = arith.constant 0.000000e+00 : f32
    %115 = vector.broadcast %cst_76 : f32 to vector<1x16xf32>
    %116 = arith.maximumf %114, %115 : vector<1x16xf32>
    %117 = vector.broadcast %107 : vector<1x16xf32> to vector<32x16xf32>
    %118 = arith.subf %103, %117 : vector<32x16xf32>
    %cst_77 = arith.constant 9.99999974E-6 : f32
    %119 = vector.broadcast %cst_77 : f32 to vector<1x16xf32>
    %120 = arith.addf %116, %119 : vector<1x16xf32>
    %121 = math.rsqrt %120 : vector<1x16xf32>
    %122 = vector.broadcast %121 : vector<1x16xf32> to vector<32x16xf32>
    %123 = arith.mulf %118, %122 : vector<32x16xf32>
    %cst_78 = arith.constant 0.000000e+00 : f32
    %124 = vector.broadcast %cst_78 : f32 to vector<32x16xf32>
    %125 = arith.cmpf oge, %123, %124 : vector<32x16xf32>
    %cst_79 = arith.constant 2.000000e-01 : f32
    %126 = vector.broadcast %cst_79 : f32 to vector<32x16xf32>
    %127 = arith.mulf %126, %123 : vector<32x16xf32>
    %128 = arith.select %125, %123, %127 : vector<32x16xi1>, vector<32x16xf32>
    %c0_80 = arith.constant 0 : index
    %c0_81 = arith.constant 0 : index
    %129 = vector.load %arg5[%c0_80, %c0_81] : memref<16x16xf32, #tpu.memory_space<vmem>>, vector<16x16xf32>
    %130 = vector.extract_strided_slice %128 {offsets = [0, 0], sizes = [16, 16], strides = [1, 1]} : vector<32x16xf32> to vector<16x16xf32>
    %131 = arith.mulf %130, %129 : vector<16x16xf32>
    %cst_82 = arith.constant dense<0.000000e+00> : vector<16xf32>
    %132 = vector.multi_reduction <add>, %131, %cst_82 [1] : vector<16x16xf32> to vector<16xf32>
    %133 = vector.shape_cast %132 : vector<16xf32> to vector<16x1xf32>
    %cst_83 = arith.constant dense<0.000000e+00> : vector<1xf32>
    %134 = vector.multi_reduction <add>, %133, %cst_83 [0] : vector<16x1xf32> to vector<1xf32>
    %135 = vector.shape_cast %134 : vector<1xf32> to vector<1x1xf32>
    %cst_84 = arith.constant 0.000000e+00 : f32
    %136 = vector.broadcast %cst_84 : f32 to vector<1x1xf32>
    %137 = arith.subf %136, %135 : vector<1x1xf32>
    %138 = math.exp %137 : vector<1x1xf32>
    %cst_85 = arith.constant 1.000000e+00 : f32
    %139 = vector.broadcast %cst_85 : f32 to vector<1x1xf32>
    %140 = arith.addf %139, %138 : vector<1x1xf32>
    %cst_86 = arith.constant 1.000000e+00 : f32
    %141 = vector.broadcast %cst_86 : f32 to vector<1x1xf32>
    %142 = arith.divf %141, %140 : vector<1x1xf32>
    %143 = vector.extract_strided_slice %128 {offsets = [16, 0], sizes = [16, 16], strides = [1, 1]} : vector<32x16xf32> to vector<16x16xf32>
    %144 = arith.mulf %143, %129 : vector<16x16xf32>
    %cst_87 = arith.constant dense<0.000000e+00> : vector<16xf32>
    %145 = vector.multi_reduction <add>, %144, %cst_87 [1] : vector<16x16xf32> to vector<16xf32>
    %146 = vector.shape_cast %145 : vector<16xf32> to vector<16x1xf32>
    %cst_88 = arith.constant dense<0.000000e+00> : vector<1xf32>
    %147 = vector.multi_reduction <add>, %146, %cst_88 [0] : vector<16x1xf32> to vector<1xf32>
    %148 = vector.shape_cast %147 : vector<1xf32> to vector<1x1xf32>
    %cst_89 = arith.constant 0.000000e+00 : f32
    %149 = vector.broadcast %cst_89 : f32 to vector<1x1xf32>
    %150 = arith.subf %149, %148 : vector<1x1xf32>
    %151 = math.exp %150 : vector<1x1xf32>
    %cst_90 = arith.constant 1.000000e+00 : f32
    %152 = vector.broadcast %cst_90 : f32 to vector<1x1xf32>
    %153 = arith.addf %152, %151 : vector<1x1xf32>
    %cst_91 = arith.constant 1.000000e+00 : f32
    %154 = vector.broadcast %cst_91 : f32 to vector<1x1xf32>
    %155 = arith.divf %154, %153 : vector<1x1xf32>
    %156 = tpu.concatenate %142, %155 in 0 : vector<1x1xf32>, vector<1x1xf32> -> vector<2x1xf32>
    %c0_92 = arith.constant 0 : index
    %c0_93 = arith.constant 0 : index
    %157 = vector.load %arg6[%c0_92, %c0_93] : memref<2x1xf32, #tpu.memory_space<vmem>>, vector<2x1xf32>
    tpu.vector_store %arg6[%c0_92, %c0_93], %156 {strides = array<i32>} : memref<2x1xf32, #tpu.memory_space<vmem>>, vector<2x1xf32>,
    return
  }
  func.func @transform_0(%arg0: i32) -> (i32, i32) {
    %c0_i32 = arith.constant 0 : i32
    %c0_i32_0 = arith.constant 0 : i32
    %c0_i32_1 = arith.constant 0 : i32
    return %c0_i32, %c0_i32_0 : i32, i32
  }
  func.func @transform_1(%arg0: i32) -> (i32, i32) {
    %c0_i32 = arith.constant 0 : i32
    %c0_i32_0 = arith.constant 0 : i32
    %c0_i32_1 = arith.constant 0 : i32
    return %c0_i32, %c0_i32_0 : i32, i32
  }
  func.func @transform_2(%arg0: i32) -> (i32, i32, i32) {
    %c0_i32 = arith.constant 0 : i32
    %c0_i32_0 = arith.constant 0 : i32
    %c0_i32_1 = arith.constant 0 : i32
    %c0_i32_2 = arith.constant 0 : i32
    return %c0_i32, %c0_i32_0, %c0_i32_1 : i32, i32, i32
  }
  func.func @transform_3(%arg0: i32) -> (i32, i32) {
    %c0_i32 = arith.constant 0 : i32
    %c0_i32_0 = arith.constant 0 : i32
    %c0_i32_1 = arith.constant 0 : i32
    return %c0_i32, %c0_i32_0 : i32, i32
  }
  func.func @transform_4(%arg0: i32) -> (i32, i32) {
    %c0_i32 = arith.constant 0 : i32
    %c0_i32_0 = arith.constant 0 : i32
    %c0_i32_1 = arith.constant 0 : i32
    return %c0_i32, %c0_i32_0 : i32, i32
  }
  func.func @transform_5(%arg0: i32) -> (i32, i32) {
    %c0_i32 = arith.constant 0 : i32
    %c0_i32_0 = arith.constant 0 : i32
    %c0_i32_1 = arith.constant 0 : i32
    return %c0_i32, %c0_i32_0 : i32, i32
  }
}

</mosaic_0001>

<llo_original>
// kernel: netlocalD_forward.1
$region0: #{netlocalD_forward.1}
  #allocation0 [shape = 'u32[]', space=smem, size = 0x4, offset = 0x4, fixed_abs, tag = 'smem constant byte address 0x4 - core index']
  #allocation1 [shape = 'u32[144,128]{1,0:T(1,128)}', space=vmem, size = 0x12000, scoped, tag = 'internal scratch']
  %s0 = inlined_call_operand.vmem [shape: f32[128,64], index: 0, kind: input, shape index: {}]
  %s1 = inlined_call_operand.vmem [shape: f32[64,8], index: 1, kind: input, shape index: {}]
  %s2 = inlined_call_operand.vmem [shape: f32[16,32,128], index: 2, kind: input, shape index: {}]
  %s3 = inlined_call_operand.vmem [shape: f32[128,16], index: 3, kind: input, shape index: {}]
  %s4 = inlined_call_operand.vmem [shape: f32[16,16], index: 4, kind: input, shape index: {}]
  %s5 = inlined_call_operand.vmem [shape: f32[2,1], index: 5, kind: output, shape index: {}]
  %s6 = sld [smem:[#allocation0]]
  $region30: #{netlocalD_forward.1} parent=0
    _
  %s8 = ssub.s32 1, %s6
  %s9 = scalar_select 0, %s8, %s6
  // Predicated region
  $region2: #{netlocalD_forward.1} parent=0 // pred_check
    _
  $region3: #{netlocalD_forward.1} parent=0 // pred_check_branch
    %11 = sbr.rel (0) target = $region5
  $region4: #{netlocalD_forward.1} parent=0 // pred_region
    _
  $region5: #{netlocalD_forward.1} parent=0 // pred_fallthru
    _
  // Predicated region
  $region6: #{netlocalD_forward.1} parent=0 // pred_check
    _
  $region7: #{netlocalD_forward.1} parent=0 // pred_check_branch
    %13 = sbr.rel (0) target = $region9
  $region8: #{netlocalD_forward.1} parent=0 // pred_region
    _
  $region9: #{netlocalD_forward.1} parent=0 // pred_fallthru
    _
  // Predicated region
  $region10: #{netlocalD_forward.1} parent=0 // pred_check
    _
  $region11: #{netlocalD_forward.1} parent=0 // pred_check_branch
    %15 = sbr.rel (0) target = $region13
  $region12: #{netlocalD_forward.1} parent=0 // pred_region
    _
  $region13: #{netlocalD_forward.1} parent=0 // pred_fallthru
    _
  // Predicated region
  $region14: #{netlocalD_forward.1} parent=0 // pred_check
    _
  $region15: #{netlocalD_forward.1} parent=0 // pred_check_branch
    %17 = sbr.rel (0) target = $region17
  $region16: #{netlocalD_forward.1} parent=0 // pred_region
    _
  $region17: #{netlocalD_forward.1} parent=0 // pred_fallthru
    _
  // Predicated region
  $region18: #{netlocalD_forward.1} parent=0 // pred_check
    _
  $region19: #{netlocalD_forward.1} parent=0 // pred_check_branch
    %19 = sbr.rel (0) target = $region21
  $region20: #{netlocalD_forward.1} parent=0 // pred_region
    _
  $region21: #{netlocalD_forward.1} parent=0 // pred_fallthru
    _
  %v20 = vld [vmem:[%s0] sm:$0xff]
  %v21 = vld [vmem:[%s0 + $0x8] sm:$0xff]
  %v22 = vld [vmem:[%s0 + $0x10] sm:$0xff]
  %v23 = vld [vmem:[%s0 + $0x18] sm:$0xff]
  %v24 = vld [vmem:[%s0 + $0x20] sm:$0xff]
  %v25 = vld [vmem:[%s0 + $0x28] sm:$0xff]
  %v26 = vld [vmem:[%s0 + $0x30] sm:$0xff]
  %v27 = vld [vmem:[%s0 + $0x38] sm:$0xff]
  %v28 = vld [vmem:[%s0 + $0x40] sm:$0xff]
  %v29 = vld [vmem:[%s0 + $0x48] sm:$0xff]
  %v30 = vld [vmem:[%s0 + $0x50] sm:$0xff]
  %v31 = vld [vmem:[%s0 + $0x58] sm:$0xff]
  %v32 = vld [vmem:[%s0 + $0x60] sm:$0xff]
  %v33 = vld [vmem:[%s0 + $0x68] sm:$0xff]
  %v34 = vld [vmem:[%s0 + $0x70] sm:$0xff]
  %v35 = vld [vmem:[%s0 + $0x78] sm:$0xff]
  %v36 = vld [vmem:[%s1] sm:$0xff]
  %v37 = vld [vmem:[%s1 + $0x8] sm:$0xff]
  %v38 = vld [vmem:[%s1 + $0x10] sm:$0xff]
  %v39 = vld [vmem:[%s1 + $0x18] sm:$0xff]
  %v40 = vld [vmem:[%s1 + $0x20] sm:$0xff]
  %v41 = vld [vmem:[%s1 + $0x28] sm:$0xff]
  %v42 = vld [vmem:[%s1 + $0x30] sm:$0xff]
  %v43 = vld [vmem:[%s1 + $0x38] sm:$0xff]
  %vm44 = vcmask 523264
  %v46 = vsel %vm44, %v20, 0
  %v49 = vsel %vm44, %v21, 0
  %v52 = vsel %vm44, %v22, 0
  %v55 = vsel %vm44, %v23, 0
  %v58 = vsel %vm44, %v24, 0
  %v61 = vsel %vm44, %v25, 0
  %v64 = vsel %vm44, %v26, 0
  %v67 = vsel %vm44, %v27, 0
  %v70 = vsel %vm44, %v28, 0
  %v73 = vsel %vm44, %v29, 0
  %v76 = vsel %vm44, %v30, 0
  %v79 = vsel %vm44, %v31, 0
  %v82 = vsel %vm44, %v32, 0
  %v85 = vsel %vm44, %v33, 0
  %v88 = vsel %vm44, %v34, 0
  %v91 = vsel %vm44, %v35, 0
  %93 = vmatprep.subr.mxu0 0.0
  %94 = vmatpush1.msra.mxu0 %v36
  %95 = vmatprep.subr.mxu0 0.0
  %96 = vmatpush1.msra.mxu0 %v37
  %97 = vmatprep.subr.mxu0 0.0
  %98 = vmatpush1.msra.mxu0 %v38
  %99 = vmatprep.subr.mxu0 0.0
  %100 = vmatpush1.msra.mxu0 %v39
  %101 = vmatprep.subr.mxu0 0.0
  %102 = vmatpush1.msra.mxu0 %v40
  %103 = vmatprep.subr.mxu0 0.0
  %104 = vmatpush1.msra.mxu0 %v41
  %105 = vmatprep.subr.mxu0 0.0
  %106 = vmatpush1.msra.mxu0 %v42
  %107 = vmatprep.subr.mxu0 0.0
  %108 = vmatpush1.msra.mxu0 %v43
  %109 = vmatprep.subr.mxu0 0.0
  %110 = vmatpush1.msra.mxu0 0.0
  %111 = vmatprep.subr.mxu0 0.0
  %112 = vmatpush1.msra.mxu0 0.0
  %113 = vmatprep.subr.mxu0 0.0
  %114 = vmatpush1.msra.mxu0 0.0
  %115 = vmatprep.subr.mxu0 0.0
  %116 = vmatpush1.msra.mxu0 0.0
  %117 = vmatprep.subr.mxu0 0.0
  %118 = vmatpush1.msra.mxu0 0.0
  %119 = vmatprep.subr.mxu0 0.0
  %120 = vmatpush1.msra.mxu0 0.0
  %121 = vmatprep.subr.mxu0 0.0
  %122 = vmatpush1.msra.mxu0 0.0
  %123 = vmatprep.subr.mxu0 0.0
  %124 = vmatpush1.msra.mxu0 0.0
  %125 = vmatprep.subr.mxu0 0.0
  %126 = vmatpush1.msra.mxu0 0.0
  %127 = vmatprep.subr.mxu0 0.0
  %128 = vmatpush1.msra.mxu0 0.0
  %129 = vmatprep.subr.mxu0 0.0
  %130 = vmatpush1.msra.mxu0 0.0
  %131 = vmatprep.subr.mxu0 0.0
  %132 = vmatpush1.msra.mxu0 0.0
  %133 = vmatprep.subr.mxu0 0.0
  %134 = vmatpush1.msra.mxu0 0.0
  %135 = vmatprep.subr.mxu0 0.0
  %136 = vmatpush1.msra.mxu0 0.0
  %137 = vmatprep.subr.mxu0 0.0
  %138 = vmatpush1.msra.mxu0 0.0
  %139 = vmatprep.subr.mxu0 0.0
  %140 = vmatpush1.msra.mxu0 0.0
  %141 = vmatprep.subr.mxu0 0.0
  %142 = vmatpush1.msra.mxu0 0.0
  %143 = vmatprep.subr.mxu0 0.0
  %144 = vmatpush1.msra.mxu0 0.0
  %145 = vmatprep.subr.mxu0 0.0
  %146 = vmatpush1.msra.mxu0 0.0
  %147 = vmatprep.subr.mxu0 0.0
  %148 = vmatpush1.msra.mxu0 0.0
  %149 = vmatprep.subr.mxu0 0.0
  %150 = vmatpush1.msra.mxu0 0.0
  %151 = vmatprep.subr.mxu0 0.0
  %152 = vmatpush1.msra.mxu0 0.0
  %153 = vmatprep.subr.mxu0 0.0
  %154 = vmatpush1.msra.mxu0 0.0
  %155 = vmatprep.subr.mxu0 0.0
  %156 = vmatpush1.msra.mxu0 0.0
  %157 = vmatprep.mubr.f32.mxu0 0.0
  %158 = vmatmul.mubr.f32.gmra.mrb[0].mxu0 %v46
  %v159 = vpop.f32.mrb[0].mxu0
  %v160 = vadd.f32 0.0, %v159
  %v161 = vpop.f32.mrb[0].mxu0
  %162 = vmatprep.mubr.f32.mxu0 0.0
  %163 = vmatmul.mubr.f32.gmra.mrb[0].mxu0 %v49
  %v164 = vpop.f32.mrb[0].mxu0
  %v165 = vadd.f32 0.0, %v164
  %v166 = vpop.f32.mrb[0].mxu0
  %167 = vmatprep.mubr.f32.mxu0 0.0
  %168 = vmatmul.mubr.f32.gmra.mrb[0].mxu0 %v52
  %v169 = vpop.f32.mrb[0].mxu0
  %v170 = vadd.f32 0.0, %v169
  %v171 = vpop.f32.mrb[0].mxu0
  %172 = vmatprep.mubr.f32.mxu0 0.0
  %173 = vmatmul.mubr.f32.gmra.mrb[0].mxu0 %v55
  %v174 = vpop.f32.mrb[0].mxu0
  %v175 = vadd.f32 0.0, %v174
  %v176 = vpop.f32.mrb[0].mxu0
  %177 = vmatprep.mubr.f32.mxu0 0.0
  %178 = vmatmul.mubr.f32.gmra.mrb[0].mxu0 %v58
  %v179 = vpop.f32.mrb[0].mxu0
  %v180 = vadd.f32 0.0, %v179
  %v181 = vpop.f32.mrb[0].mxu0
  %182 = vmatprep.mubr.f32.mxu0 0.0
  %183 = vmatmul.mubr.f32.gmra.mrb[0].mxu0 %v61
  %v184 = vpop.f32.mrb[0].mxu0
  %v185 = vadd.f32 0.0, %v184
  %v186 = vpop.f32.mrb[0].mxu0
  %187 = vmatprep.mubr.f32.mxu0 0.0
  %188 = vmatmul.mubr.f32.gmra.mrb[0].mxu0 %v64
  %v189 = vpop.f32.mrb[0].mxu0
  %v190 = vadd.f32 0.0, %v189
  %v191 = vpop.f32.mrb[0].mxu0
  %192 = vmatprep.mubr.f32.mxu0 0.0
  %193 = vmatmul.mubr.f32.gmra.mrb[0].mxu0 %v67
  %v194 = vpop.f32.mrb[0].mxu0
  %v195 = vadd.f32 0.0, %v194
  %v196 = vpop.f32.mrb[0].mxu0
  %197 = vmatprep.mubr.f32.mxu0 0.0
  %198 = vmatmul.mubr.f32.gmra.mrb[0].mxu0 %v70
  %v199 = vpop.f32.mrb[0].mxu0
  %v200 = vadd.f32 0.0, %v199
  %v201 = vpop.f32.mrb[0].mxu0
  %202 = vmatprep.mubr.f32.mxu0 0.0
  %203 = vmatmul.mubr.f32.gmra.mrb[0].mxu0 %v73
  %v204 = vpop.f32.mrb[0].mxu0
  %v205 = vadd.f32 0.0, %v204
  %v206 = vpop.f32.mrb[0].mxu0
  %207 = vmatprep.mubr.f32.mxu0 0.0
  %208 = vmatmul.mubr.f32.gmra.mrb[0].mxu0 %v76
  %v209 = vpop.f32.mrb[0].mxu0
  %v210 = vadd.f32 0.0, %v209
  %v211 = vpop.f32.mrb[0].mxu0
  %212 = vmatprep.mubr.f32.mxu0 0.0
  %213 = vmatmul.mubr.f32.gmra.mrb[0].mxu0 %v79
  %v214 = vpop.f32.mrb[0].mxu0
  %v215 = vadd.f32 0.0, %v214
  %v216 = vpop.f32.mrb[0].mxu0
  %217 = vmatprep.mubr.f32.mxu0 0.0
  %218 = vmatmul.mubr.f32.gmra.mrb[0].mxu0 %v82
  %v219 = vpop.f32.mrb[0].mxu0
  %v220 = vadd.f32 0.0, %v219
  %v221 = vpop.f32.mrb[0].mxu0
  %222 = vmatprep.mubr.f32.mxu0 0.0
  %223 = vmatmul.mubr.f32.gmra.mrb[0].mxu0 %v85
  %v224 = vpop.f32.mrb[0].mxu0
  %v225 = vadd.f32 0.0, %v224
  %v226 = vpop.f32.mrb[0].mxu0
  %227 = vmatprep.mubr.f32.mxu0 0.0
  %228 = vmatmul.mubr.f32.gmra.mrb[0].mxu0 %v88
  %v229 = vpop.f32.mrb[0].mxu0
  %v230 = vadd.f32 0.0, %v229
  %v231 = vpop.f32.mrb[0].mxu0
  %232 = vmatprep.mubr.f32.mxu0 0.0
  %233 = vmatmul.mubr.f32.gmra.mrb[0].mxu0 %v91
  %v234 = vpop.f32.mrb[0].mxu0
  %v235 = vadd.f32 0.0, %v234
  %v236 = vpop.f32.mrb[0].mxu0
  %237 = vdwg.mxu0
  %vm238 = vcmp.ge.f32.partialorder %v160, 0.0
  %vm239 = vcmp.ge.f32.partialorder %v165, 0.0
  %vm240 = vcmp.ge.f32.partialorder %v170, 0.0
  %vm241 = vcmp.ge.f32.partialorder %v175, 0.0
  %vm242 = vcmp.ge.f32.partialorder %v180, 0.0
  %vm243 = vcmp.ge.f32.partialorder %v185, 0.0
  %vm244 = vcmp.ge.f32.partialorder %v190, 0.0
  %vm245 = vcmp.ge.f32.partialorder %v195, 0.0
  %vm246 = vcmp.ge.f32.partialorder %v200, 0.0
  %vm247 = vcmp.ge.f32.partialorder %v205, 0.0
  %vm248 = vcmp.ge.f32.partialorder %v210, 0.0
  %vm249 = vcmp.ge.f32.partialorder %v215, 0.0
  %vm250 = vcmp.ge.f32.partialorder %v220, 0.0
  %vm251 = vcmp.ge.f32.partialorder %v225, 0.0
  %vm252 = vcmp.ge.f32.partialorder %v230, 0.0
  %vm253 = vcmp.ge.f32.partialorder %v235, 0.0
  %v254 = vmul.f32 %v160, 0.2
  %v255 = vmul.f32 %v165, 0.2
  %v256 = vmul.f32 %v170, 0.2
  %v257 = vmul.f32 %v175, 0.2
  %v258 = vmul.f32 %v180, 0.2
  %v259 = vmul.f32 %v185, 0.2
  %v260 = vmul.f32 %v190, 0.2
  %v261 = vmul.f32 %v195, 0.2
  %v262 = vmul.f32 %v200, 0.2
  %v263 = vmul.f32 %v205, 0.2
  %v264 = vmul.f32 %v210, 0.2
  %v265 = vmul.f32 %v215, 0.2
  %v266 = vmul.f32 %v220, 0.2
  %v267 = vmul.f32 %v225, 0.2
  %v268 = vmul.f32 %v230, 0.2
  %v269 = vmul.f32 %v235, 0.2
  %v270 = vsel %vm238, %v160, %v254
  %v271 = vsel %vm239, %v165, %v255
  %v272 = vsel %vm240, %v170, %v256
  %v273 = vsel %vm241, %v175, %v257
  %v274 = vsel %vm242, %v180, %v258
  %v275 = vsel %vm243, %v185, %v259
  %v276 = vsel %vm244, %v190, %v260
  %v277 = vsel %vm245, %v195, %v261
  %v278 = vsel %vm246, %v200, %v262
  %v279 = vsel %vm247, %v205, %v263
  %v280 = vsel %vm248, %v210, %v264
  %v281 = vsel %vm249, %v215, %v265
  %v282 = vsel %vm250, %v220, %v266
  %v283 = vsel %vm251, %v225, %v267
  %v284 = vsel %vm252, %v230, %v268
  %v285 = vsel %vm253, %v235, %v269
  %v286 = vld [vmem:[%s3] sm:$0xff]
  %v287 = vld [vmem:[%s3 + $0x8] sm:$0xff]
  %v288 = vld [vmem:[%s3 + $0x10] sm:$0xff]
  %v289 = vld [vmem:[%s3 + $0x18] sm:$0xff]
  %v290 = vld [vmem:[%s3 + $0x20] sm:$0xff]
  %v291 = vld [vmem:[%s3 + $0x28] sm:$0xff]
  %v292 = vld [vmem:[%s3 + $0x30] sm:$0xff]
  %v293 = vld [vmem:[%s3 + $0x38] sm:$0xff]
  %v294 = vld [vmem:[%s3 + $0x40] sm:$0xff]
  %v295 = vld [vmem:[%s3 + $0x48] sm:$0xff]
  %v296 = vld [vmem:[%s3 + $0x50] sm:$0xff]
  %v297 = vld [vmem:[%s3 + $0x58] sm:$0xff]
  %v298 = vld [vmem:[%s3 + $0x60] sm:$0xff]
  %v299 = vld [vmem:[%s3 + $0x68] sm:$0xff]
  %v300 = vld [vmem:[%s3 + $0x70] sm:$0xff]
  %v301 = vld [vmem:[%s3 + $0x78] sm:$0xff]
  %v302 = vld [vmem:[%s2] sm:$0xff]
  %v303 = vld [vmem:[%s2 + $0x8] sm:$0xff]
  %v304 = vld [vmem:[%s2 + $0x10] sm:$0xff]
  %v305 = vld [vmem:[%s2 + $0x18] sm:$0xff]
  %306 = vmatprep.subr.mxu0 0.0
  %307 = vmatpush1.msra.mxu0 %v270
  %308 = vmatprep.subr.mxu0 0.0
  %309 = vmatpush1.msra.mxu0 %v271
  %310 = vmatprep.subr.mxu0 0.0
  %311 = vmatpush1.msra.mxu0 %v272
  %312 = vmatprep.subr.mxu0 0.0
  %313 = vmatpush1.msra.mxu0 %v273
  %314 = vmatprep.subr.mxu0 0.0
  %315 = vmatpush1.msra.mxu0 %v274
  %316 = vmatprep.subr.mxu0 0.0
  %317 = vmatpush1.msra.mxu0 %v275
  %318 = vmatprep.subr.mxu0 0.0
  %319 = vmatpush1.msra.mxu0 %v276
  %320 = vmatprep.subr.mxu0 0.0
  %321 = vmatpush1.msra.mxu0 %v277
  %322 = vmatprep.subr.mxu0 0.0
  %323 = vmatpush1.msra.mxu0 %v278
  %324 = vmatprep.subr.mxu0 0.0
  %325 = vmatpush1.msra.mxu0 %v279
  %326 = vmatprep.subr.mxu0 0.0
  %327 = vmatpush1.msra.mxu0 %v280
  %328 = vmatprep.subr.mxu0 0.0
  %329 = vmatpush1.msra.mxu0 %v281
  %330 = vmatprep.subr.mxu0 0.0
  %331 = vmatpush1.msra.mxu0 %v282
  %332 = vmatprep.subr.mxu0 0.0
  %333 = vmatpush1.msra.mxu0 %v283
  %334 = vmatprep.subr.mxu0 0.0
  %335 = vmatpush1.msra.mxu0 %v284
  %336 = vmatprep.subr.mxu0 0.0
  %337 = vmatpush1.msra.mxu0 %v285
  %338 = vmatprep.subr.mxu0 0.0
  %339 = vmatpush1.msra.mxu0 0.0
  %340 = vmatprep.subr.mxu0 0.0
  %341 = vmatpush1.msra.mxu0 0.0
  %342 = vmatprep.subr.mxu0 0.0
  %343 = vmatpush1.msra.mxu0 0.0
  %344 = vmatprep.subr.mxu0 0.0
  %345 = vmatpush1.msra.mxu0 0.0
  %346 = vmatprep.subr.mxu0 0.0
  %347 = vmatpush1.msra.mxu0 0.0
  %348 = vmatprep.subr.mxu0 0.0
  %349 = vmatpush1.msra.mxu0 0.0
  %350 = vmatprep.subr.mxu0 0.0
  %351 = vmatpush1.msra.mxu0 0.0
  %352 = vmatprep.subr.mxu0 0.0
  %353 = vmatpush1.msra.mxu0 0.0
  %354 = vmatprep.subr.mxu0 0.0
  %355 = vmatpush1.msra.mxu0 0.0
  %356 = vmatprep.subr.mxu0 0.0
  %357 = vmatpush1.msra.mxu0 0.0
  %358 = vmatprep.subr.mxu0 0.0
  %359 = vmatpush1.msra.mxu0 0.0
  %360 = vmatprep.subr.mxu0 0.0
  %361 = vmatpush1.msra.mxu0 0.0
  %362 = vmatprep.subr.mxu0 0.0
  %363 = vmatpush1.msra.mxu0 0.0
  %364 = vmatprep.subr.mxu0 0.0
  %365 = vmatpush1.msra.mxu0 0.0
  %366 = vmatprep.subr.mxu0 0.0
  %367 = vmatpush1.msra.mxu0 0.0
  %368 = vmatprep.subr.mxu0 0.0
  %369 = vmatpush1.msra.mxu0 0.0
  %370 = vmatprep.mubr.f32.mxu0 0.0
  %371 = vmatmul.mubr.f32.gmra.mrb[0].mxu0 %v302
  %v372 = vpop.f32.mrb[0].mxu0
  %v373 = vadd.f32 0.0, %v372
  %v374 = vpop.f32.mrb[0].mxu0
  %375 = vmatprep.mubr.f32.mxu0 0.0
  %376 = vmatmul.mubr.f32.gmra.mrb[0].mxu0 %v303
  %v377 = vpop.f32.mrb[0].mxu0
  %v378 = vadd.f32 0.0, %v377
  %v379 = vpop.f32.mrb[0].mxu0
  %380 = vmatprep.mubr.f32.mxu0 0.0
  %381 = vmatmul.mubr.f32.gmra.mrb[0].mxu0 %v304
  %v382 = vpop.f32.mrb[0].mxu0
  %v383 = vadd.f32 0.0, %v382
  %v384 = vpop.f32.mrb[0].mxu0
  %385 = vmatprep.mubr.f32.mxu0 0.0
  %386 = vmatmul.mubr.f32.gmra.mrb[0].mxu0 %v305
  %v387 = vpop.f32.mrb[0].mxu0
  %v388 = vadd.f32 0.0, %v387
  %v389 = vpop.f32.mrb[0].mxu0
  %390 = vdwg.mxu0
  %s391 = scalar_lea.vmem %s2, 32
  %v392 = vld [vmem:[%s391] sm:$0xff]
  %v393 = vld [vmem:[%s391 + $0x8] sm:$0xff]
  %v394 = vld [vmem:[%s391 + $0x10] sm:$0xff]
  %v395 = vld [vmem:[%s391 + $0x18] sm:$0xff]
  %396 = vmatprep.subr.mxu0 0.0
  %397 = vmatpush1.msra.mxu0 %v270
  %398 = vmatprep.subr.mxu0 0.0
  %399 = vmatpush1.msra.mxu0 %v271
  %400 = vmatprep.subr.mxu0 0.0
  %401 = vmatpush1.msra.mxu0 %v272
  %402 = vmatprep.subr.mxu0 0.0
  %403 = vmatpush1.msra.mxu0 %v273
  %404 = vmatprep.subr.mxu0 0.0
  %405 = vmatpush1.msra.mxu0 %v274
  %406 = vmatprep.subr.mxu0 0.0
  %407 = vmatpush1.msra.mxu0 %v275
  %408 = vmatprep.subr.mxu0 0.0
  %409 = vmatpush1.msra.mxu0 %v276
  %410 = vmatprep.subr.mxu0 0.0
  %411 = vmatpush1.msra.mxu0 %v277
  %412 = vmatprep.subr.mxu0 0.0
  %413 = vmatpush1.msra.mxu0 %v278
  %414 = vmatprep.subr.mxu0 0.0
  %415 = vmatpush1.msra.mxu0 %v279
  %416 = vmatprep.subr.mxu0 0.0
  %417 = vmatpush1.msra.mxu0 %v280
  %418 = vmatprep.subr.mxu0 0.0
  %419 = vmatpush1.msra.mxu0 %v281
  %420 = vmatprep.subr.mxu0 0.0
  %421 = vmatpush1.msra.mxu0 %v282
  %422 = vmatprep.subr.mxu0 0.0
  %423 = vmatpush1.msra.mxu0 %v283
  %424 = vmatprep.subr.mxu0 0.0
  %425 = vmatpush1.msra.mxu0 %v284
  %426 = vmatprep.subr.mxu0 0.0
  %427 = vmatpush1.msra.mxu0 %v285
  %428 = vmatprep.subr.mxu0 0.0
  %429 = vmatpush1.msra.mxu0 0.0
  %430 = vmatprep.subr.mxu0 0.0
  %431 = vmatpush1.msra.mxu0 0.0
  %432 = vmatprep.subr.mxu0 0.0
  %433 = vmatpush1.msra.mxu0 0.0
  %434 = vmatprep.subr.mxu0 0.0
  %435 = vmatpush1.msra.mxu0 0.0
  %436 = vmatprep.subr.mxu0 0.0
  %437 = vmatpush1.msra.mxu0 0.0
  %438 = vmatprep.subr.mxu0 0.0
  %439 = vmatpush1.msra.mxu0 0.0
  %440 = vmatprep.subr.mxu0 0.0
  %441 = vmatpush1.msra.mxu0 0.0
  %442 = vmatprep.subr.mxu0 0.0
  %443 = vmatpush1.msra.mxu0 0.0
  %444 = vmatprep.subr.mxu0 0.0
  %445 = vmatpush1.msra.mxu0 0.0
  %446 = vmatprep.subr.mxu0 0.0
  %447 = vmatpush1.msra.mxu0 0.0
  %448 = vmatprep.subr.mxu0 0.0
  %449 = vmatpush1.msra.mxu0 0.0
  %450 = vmatprep.subr.mxu0 0.0
  %451 = vmatpush1.msra.mxu0 0.0
  %452 = vmatprep.subr.mxu0 0.0
  %453 = vmatpush1.msra.mxu0 0.0
  %454 = vmatprep.subr.mxu0 0.0
  %455 = vmatpush1.msra.mxu0 0.0
  %456 = vmatprep.subr.mxu0 0.0
  %457 = vmatpush1.msra.mxu0 0.0
  %458 = vmatprep.subr.mxu0 0.0
  %459 = vmatpush1.msra.mxu0 0.0
  %460 = vmatprep.mubr.f32.mxu0 0.0
  %461 = vmatmul.mubr.f32.gmra.mrb[0].mxu0 %v392
  %v462 = vpop.f32.mrb[0].mxu0
  %v463 = vadd.f32 0.0, %v462
  %v464 = vpop.f32.mrb[0].mxu0
  %465 = vmatprep.mubr.f32.mxu0 0.0
  %466 = vmatmul.mubr.f32.gmra.mrb[0].mxu0 %v393
  %v467 = vpop.f32.mrb[0].mxu0
  %v468 = vadd.f32 0.0, %v467
  %v469 = vpop.f32.mrb[0].mxu0
  %470 = vmatprep.mubr.f32.mxu0 0.0
  %471 = vmatmul.mubr.f32.gmra.mrb[0].mxu0 %v394
  %v472 = vpop.f32.mrb[0].mxu0
  %v473 = vadd.f32 0.0, %v472
  %v474 = vpop.f32.mrb[0].mxu0
  %475 = vmatprep.mubr.f32.mxu0 0.0
  %476 = vmatmul.mubr.f32.gmra.mrb[0].mxu0 %v395
  %v477 = vpop.f32.mrb[0].mxu0
  %v478 = vadd.f32 0.0, %v477
  %v479 = vpop.f32.mrb[0].mxu0
  %480 = vdwg.mxu0
  %vm481 = vcmask 64512
  %v483 = vsel %vm481, %v463, 0
  %v486 = vsel %vm481, %v468, 0
  %v489 = vsel %vm481, %v473, 0
  %v492 = vsel %vm481, %v478, 0
  %494 = vmatprep.subr.mxu0 0.0
  %495 = vmatpush1.msra.mxu0 %v287
  %496 = vmatprep.subr.mxu0 0.0
  %497 = vmatpush1.msra.mxu0 0.0
  %498 = vmatprep.subr.mxu0 0.0
  %499 = vmatpush1.msra.mxu0 0.0
  %500 = vmatprep.subr.mxu0 0.0
  %501 = vmatpush1.msra.mxu0 0.0
  %502 = vmatprep.subr.mxu0 0.0
  %503 = vmatpush1.msra.mxu0 0.0
  %504 = vmatprep.subr.mxu0 0.0
  %505 = vmatpush1.msra.mxu0 0.0
  %506 = vmatprep.subr.mxu0 0.0
  %507 = vmatpush1.msra.mxu0 0.0
  %508 = vmatprep.subr.mxu0 0.0
  %509 = vmatpush1.msra.mxu0 0.0
  %510 = vmatprep.subr.mxu0 0.0
  %511 = vmatpush1.msra.mxu0 0.0
  %512 = vmatprep.subr.mxu0 0.0
  %513 = vmatpush1.msra.mxu0 0.0
  %514 = vmatprep.subr.mxu0 0.0
  %515 = vmatpush1.msra.mxu0 0.0
  %516 = vmatprep.subr.mxu0 0.0
  %517 = vmatpush1.msra.mxu0 0.0
  %518 = vmatprep.subr.mxu0 0.0
  %519 = vmatpush1.msra.mxu0 0.0
  %520 = vmatprep.subr.mxu0 0.0
  %521 = vmatpush1.msra.mxu0 0.0
  %522 = vmatprep.subr.mxu0 0.0
  %523 = vmatpush1.msra.mxu0 0.0
  %524 = vmatprep.subr.mxu0 0.0
  %525 = vmatpush1.msra.mxu0 0.0
  %526 = vmatprep.subr.mxu0 0.0
  %527 = vmatpush1.msra.mxu0 0.0
  %528 = vmatprep.subr.mxu0 0.0
  %529 = vmatpush1.msra.mxu0 0.0
  %530 = vmatprep.subr.mxu0 0.0
  %531 = vmatpush1.msra.mxu0 0.0
  %532 = vmatprep.subr.mxu0 0.0
  %533 = vmatpush1.msra.mxu0 0.0
  %534 = vmatprep.subr.mxu0 0.0
  %535 = vmatpush1.msra.mxu0 0.0
  %536 = vmatprep.subr.mxu0 0.0
  %537 = vmatpush1.msra.mxu0 0.0
  %538 = vmatprep.subr.mxu0 0.0
  %539 = vmatpush1.msra.mxu0 0.0
  %540 = vmatprep.subr.mxu0 0.0
  %541 = vmatpush1.msra.mxu0 0.0
  %542 = vmatprep.subr.mxu0 0.0
  %543 = vmatpush1.msra.mxu0 0.0
  %544 = vmatprep.subr.mxu0 0.0
  %545 = vmatpush1.msra.mxu0 0.0
  %546 = vmatprep.subr.mxu0 0.0
  %547 = vmatpush1.msra.mxu0 0.0
  %548 = vmatprep.subr.mxu0 0.0
  %549 = vmatpush1.msra.mxu0 0.0
  %550 = vmatprep.subr.mxu0 0.0
  %551 = vmatpush1.msra.mxu0 0.0
  %552 = vmatprep.subr.mxu0 0.0
  %553 = vmatpush1.msra.mxu0 0.0
  %554 = vmatprep.subr.mxu0 0.0
  %555 = vmatpush1.msra.mxu0 0.0
  %556 = vmatprep.subr.mxu0 0.0
  %557 = vmatpush1.msra.mxu0 0.0
  %558 = vmatprep.mubr.f32.mxu0 0.0
  %559 = vmatmul.mubr.f32.gmra.mrb[0].mxu0 %v483
  %v560 = vpop.f32.mrb[0].mxu0
  %v561 = vadd.f32 0.0, %v560
  %v562 = vpop.f32.mrb[0].mxu0
  %563 = vmatprep.mubr.f32.mxu0 0.0
  %564 = vmatmul.mubr.f32.gmra.mrb[0].mxu0 %v486
  %v565 = vpop.f32.mrb[0].mxu0
  %v566 = vadd.f32 0.0, %v565
  %v567 = vpop.f32.mrb[0].mxu0
  %568 = vmatprep.mubr.f32.mxu0 0.0
  %569 = vmatmul.mubr.f32.gmra.mrb[0].mxu0 %v489
  %v570 = vpop.f32.mrb[0].mxu0
  %v571 = vadd.f32 0.0, %v570
  %v572 = vpop.f32.mrb[0].mxu0
  %573 = vmatprep.mubr.f32.mxu0 0.0
  %574 = vmatmul.mubr.f32.gmra.mrb[0].mxu0 %v492
  %v575 = vpop.f32.mrb[0].mxu0
  %v576 = vadd.f32 0.0, %v575
  %v577 = vpop.f32.mrb[0].mxu0
  %578 = vdwg.mxu0
  %v580 = vsel %vm481, %v373, 0
  %v583 = vsel %vm481, %v378, 0
  %v586 = vsel %vm481, %v383, 0
  %v589 = vsel %vm481, %v388, 0
  %591 = vmatprep.subr.mxu0 0.0
  %592 = vmatpush1.msra.mxu0 %v286
  %593 = vmatprep.subr.mxu0 0.0
  %594 = vmatpush1.msra.mxu0 0.0
  %595 = vmatprep.subr.mxu0 0.0
  %596 = vmatpush1.msra.mxu0 0.0
  %597 = vmatprep.subr.mxu0 0.0
  %598 = vmatpush1.msra.mxu0 0.0
  %599 = vmatprep.subr.mxu0 0.0
  %600 = vmatpush1.msra.mxu0 0.0
  %601 = vmatprep.subr.mxu0 0.0
  %602 = vmatpush1.msra.mxu0 0.0
  %603 = vmatprep.subr.mxu0 0.0
  %604 = vmatpush1.msra.mxu0 0.0
  %605 = vmatprep.subr.mxu0 0.0
  %606 = vmatpush1.msra.mxu0 0.0
  %607 = vmatprep.subr.mxu0 0.0
  %608 = vmatpush1.msra.mxu0 0.0
  %609 = vmatprep.subr.mxu0 0.0
  %610 = vmatpush1.msra.mxu0 0.0
  %611 = vmatprep.subr.mxu0 0.0
  %612 = vmatpush1.msra.mxu0 0.0
  %613 = vmatprep.subr.mxu0 0.0
  %614 = vmatpush1.msra.mxu0 0.0
  %615 = vmatprep.subr.mxu0 0.0
  %616 = vmatpush1.msra.mxu0 0.0
  %617 = vmatprep.subr.mxu0 0.0
  %618 = vmatpush1.msra.mxu0 0.0
  %619 = vmatprep.subr.mxu0 0.0
  %620 = vmatpush1.msra.mxu0 0.0
  %621 = vmatprep.subr.mxu0 0.0
  %622 = vmatpush1.msra.mxu0 0.0
  %623 = vmatprep.subr.mxu0 0.0
  %624 = vmatpush1.msra.mxu0 0.0
  %625 = vmatprep.subr.mxu0 0.0
  %626 = vmatpush1.msra.mxu0 0.0
  %627 = vmatprep.subr.mxu0 0.0
  %628 = vmatpush1.msra.mxu0 0.0
  %629 = vmatprep.subr.mxu0 0.0
  %630 = vmatpush1.msra.mxu0 0.0
  %631 = vmatprep.subr.mxu0 0.0
  %632 = vmatpush1.msra.mxu0 0.0
  %633 = vmatprep.subr.mxu0 0.0
  %634 = vmatpush1.msra.mxu0 0.0
  %635 = vmatprep.subr.mxu0 0.0
  %636 = vmatpush1.msra.mxu0 0.0
  %637 = vmatprep.subr.mxu0 0.0
  %638 = vmatpush1.msra.mxu0 0.0
  %639 = vmatprep.subr.mxu0 0.0
  %640 = vmatpush1.msra.mxu0 0.0
  %641 = vmatprep.subr.mxu0 0.0
  %642 = vmatpush1.msra.mxu0 0.0
  %643 = vmatprep.subr.mxu0 0.0
  %644 = vmatpush1.msra.mxu0 0.0
  %645 = vmatprep.subr.mxu0 0.0
  %646 = vmatpush1.msra.mxu0 0.0
  %647 = vmatprep.subr.mxu0 0.0
  %648 = vmatpush1.msra.mxu0 0.0
  %649 = vmatprep.subr.mxu0 0.0
  %650 = vmatpush1.msra.mxu0 0.0
  %651 = vmatprep.subr.mxu0 0.0
  %652 = vmatpush1.msra.mxu0 0.0
  %653 = vmatprep.subr.mxu0 0.0
  %654 = vmatpush1.msra.mxu0 0.0
  %655 = vmatprep.mubr.f32.mxu0 0.0
  %656 = vmatmul.mubr.f32.gmra.mrb[0].mxu0 %v580
  %v657 = vpop.f32.mrb[0].mxu0
  %v658 = vadd.f32 %v561, %v657
  %v659 = vpop.f32.mrb[0].mxu0
  %660 = vmatprep.mubr.f32.mxu0 0.0
  %661 = vmatmul.mubr.f32.gmra.mrb[0].mxu0 %v583
  %v662 = vpop.f32.mrb[0].mxu0
  %v663 = vadd.f32 %v566, %v662
  %v664 = vpop.f32.mrb[0].mxu0
  %665 = vmatprep.mubr.f32.mxu0 0.0
  %666 = vmatmul.mubr.f32.gmra.mrb[0].mxu0 %v586
  %v667 = vpop.f32.mrb[0].mxu0
  %v668 = vadd.f32 %v571, %v667
  %v669 = vpop.f32.mrb[0].mxu0
  %670 = vmatprep.mubr.f32.mxu0 0.0
  %671 = vmatmul.mubr.f32.gmra.mrb[0].mxu0 %v589
  %v672 = vpop.f32.mrb[0].mxu0
  %v673 = vadd.f32 %v576, %v672
  %v674 = vpop.f32.mrb[0].mxu0
  %675 = vdwg.mxu0
  %s676 = scalar_lea.vmem %s2, 64
  %v677 = vld [vmem:[%s676] sm:$0xff]
  %v678 = vld [vmem:[%s676 + $0x8] sm:$0xff]
  %v679 = vld [vmem:[%s676 + $0x10] sm:$0xff]
  %v680 = vld [vmem:[%s676 + $0x18] sm:$0xff]
  %681 = vmatprep.subr.mxu0 0.0
  %682 = vmatpush1.msra.mxu0 %v270
  %683 = vmatprep.subr.mxu0 0.0
  %684 = vmatpush1.msra.mxu0 %v271
  %685 = vmatprep.subr.mxu0 0.0
  %686 = vmatpush1.msra.mxu0 %v272
  %687 = vmatprep.subr.mxu0 0.0
  %688 = vmatpush1.msra.mxu0 %v273
  %689 = vmatprep.subr.mxu0 0.0
  %690 = vmatpush1.msra.mxu0 %v274
  %691 = vmatprep.subr.mxu0 0.0
  %692 = vmatpush1.msra.mxu0 %v275
  %693 = vmatprep.subr.mxu0 0.0
  %694 = vmatpush1.msra.mxu0 %v276
  %695 = vmatprep.subr.mxu0 0.0
  %696 = vmatpush1.msra.mxu0 %v277
  %697 = vmatprep.subr.mxu0 0.0
  %698 = vmatpush1.msra.mxu0 %v278
  %699 = vmatprep.subr.mxu0 0.0
  %700 = vmatpush1.msra.mxu0 %v279
  %701 = vmatprep.subr.mxu0 0.0
  %702 = vmatpush1.msra.mxu0 %v280
  %703 = vmatprep.subr.mxu0 0.0
  %704 = vmatpush1.msra.mxu0 %v281
  %705 = vmatprep.subr.mxu0 0.0
  %706 = vmatpush1.msra.mxu0 %v282
  %707 = vmatprep.subr.mxu0 0.0
  %708 = vmatpush1.msra.mxu0 %v283
  %709 = vmatprep.subr.mxu0 0.0
  %710 = vmatpush1.msra.mxu0 %v284
  %711 = vmatprep.subr.mxu0 0.0
  %712 = vmatpush1.msra.mxu0 %v285
  %713 = vmatprep.subr.mxu0 0.0
  %714 = vmatpush1.msra.mxu0 0.0
  %715 = vmatprep.subr.mxu0 0.0
  %716 = vmatpush1.msra.mxu0 0.0
  %717 = vmatprep.subr.mxu0 0.0
  %718 = vmatpush1.msra.mxu0 0.0
  %719 = vmatprep.subr.mxu0 0.0
  %720 = vmatpush1.msra.mxu0 0.0
  %721 = vmatprep.subr.mxu0 0.0
  %722 = vmatpush1.msra.mxu0 0.0
  %723 = vmatprep.subr.mxu0 0.0
  %724 = vmatpush1.msra.mxu0 0.0
  %725 = vmatprep.subr.mxu0 0.0
  %726 = vmatpush1.msra.mxu0 0.0
  %727 = vmatprep.subr.mxu0 0.0
  %728 = vmatpush1.msra.mxu0 0.0
  %729 = vmatprep.subr.mxu0 0.0
  %730 = vmatpush1.msra.mxu0 0.0
  %731 = vmatprep.subr.mxu0 0.0
  %732 = vmatpush1.msra.mxu0 0.0
  %733 = vmatprep.subr.mxu0 0.0
  %734 = vmatpush1.msra.mxu0 0.0
  %735 = vmatprep.subr.mxu0 0.0
  %736 = vmatpush1.msra.mxu0 0.0
  %737 = vmatprep.subr.mxu0 0.0
  %738 = vmatpush1.msra.mxu0 0.0
  %739 = vmatprep.subr.mxu0 0.0
  %740 = vmatpush1.msra.mxu0 0.0
  %741 = vmatprep.subr.mxu0 0.0
  %742 = vmatpush1.msra.mxu0 0.0
  %743 = vmatprep.subr.mxu0 0.0
  %744 = vmatpush1.msra.mxu0 0.0
  %745 = vmatprep.mubr.f32.mxu0 0.0
  %746 = vmatmul.mubr.f32.gmra.mrb[0].mxu0 %v677
  %v747 = vpop.f32.mrb[0].mxu0
  %v748 = vadd.f32 0.0, %v747
  %v749 = vpop.f32.mrb[0].mxu0
  %750 = vmatprep.mubr.f32.mxu0 0.0
  %751 = vmatmul.mubr.f32.gmra.mrb[0].mxu0 %v678
  %v752 = vpop.f32.mrb[0].mxu0
  %v753 = vadd.f32 0.0, %v752
  %v754 = vpop.f32.mrb[0].mxu0
  %755 = vmatprep.mubr.f32.mxu0 0.0
  %756 = vmatmul.mubr.f32.gmra.mrb[0].mxu0 %v679
  %v757 = vpop.f32.mrb[0].mxu0
  %v758 = vadd.f32 0.0, %v757
  %v759 = vpop.f32.mrb[0].mxu0
  %760 = vmatprep.mubr.f32.mxu0 0.0
  %761 = vmatmul.mubr.f32.gmra.mrb[0].mxu0 %v680
  %v762 = vpop.f32.mrb[0].mxu0
  %v763 = vadd.f32 0.0, %v762
  %v764 = vpop.f32.mrb[0].mxu0
  %765 = vdwg.mxu0
  %v767 = vsel %vm481, %v748, 0
  %v770 = vsel %vm481, %v753, 0
  %v773 = vsel %vm481, %v758, 0
  %v776 = vsel %vm481, %v763, 0
  %778 = vmatprep.subr.mxu0 0.0
  %779 = vmatpush1.msra.mxu0 %v288
  %780 = vmatprep.subr.mxu0 0.0
  %781 = vmatpush1.msra.mxu0 0.0
  %782 = vmatprep.subr.mxu0 0.0
  %783 = vmatpush1.msra.mxu0 0.0
  %784 = vmatprep.subr.mxu0 0.0
  %785 = vmatpush1.msra.mxu0 0.0
  %786 = vmatprep.subr.mxu0 0.0
  %787 = vmatpush1.msra.mxu0 0.0
  %788 = vmatprep.subr.mxu0 0.0
  %789 = vmatpush1.msra.mxu0 0.0
  %790 = vmatprep.subr.mxu0 0.0
  %791 = vmatpush1.msra.mxu0 0.0
  %792 = vmatprep.subr.mxu0 0.0
  %793 = vmatpush1.msra.mxu0 0.0
  %794 = vmatprep.subr.mxu0 0.0
  %795 = vmatpush1.msra.mxu0 0.0
  %796 = vmatprep.subr.mxu0 0.0
  %797 = vmatpush1.msra.mxu0 0.0
  %798 = vmatprep.subr.mxu0 0.0
  %799 = vmatpush1.msra.mxu0 0.0
  %800 = vmatprep.subr.mxu0 0.0
  %801 = vmatpush1.msra.mxu0 0.0
  %802 = vmatprep.subr.mxu0 0.0
  %803 = vmatpush1.msra.mxu0 0.0
  %804 = vmatprep.subr.mxu0 0.0
  %805 = vmatpush1.msra.mxu0 0.0
  %806 = vmatprep.subr.mxu0 0.0
  %807 = vmatpush1.msra.mxu0 0.0
  %808 = vmatprep.subr.mxu0 0.0
  %809 = vmatpush1.msra.mxu0 0.0
  %810 = vmatprep.subr.mxu0 0.0
  %811 = vmatpush1.msra.mxu0 0.0
  %812 = vmatprep.subr.mxu0 0.0
  %813 = vmatpush1.msra.mxu0 0.0
  %814 = vmatprep.subr.mxu0 0.0
  %815 = vmatpush1.msra.mxu0 0.0
  %816 = vmatprep.subr.mxu0 0.0
  %817 = vmatpush1.msra.mxu0 0.0
  %818 = vmatprep.subr.mxu0 0.0
  %819 = vmatpush1.msra.mxu0 0.0
  %820 = vmatprep.subr.mxu0 0.0
  %821 = vmatpush1.msra.mxu0 0.0
  %822 = vmatprep.subr.mxu0 0.0
  %823 = vmatpush1.msra.mxu0 0.0
  %824 = vmatprep.subr.mxu0 0.0
  %825 = vmatpush1.msra.mxu0 0.0
  %826 = vmatprep.subr.mxu0 0.0
  %827 = vmatpush1.msra.mxu0 0.0
  %828 = vmatprep.subr.mxu0 0.0
  %829 = vmatpush1.msra.mxu0 0.0
  %830 = vmatprep.subr.mxu0 0.0
  %831 = vmatpush1.msra.mxu0 0.0
  %832 = vmatprep.subr.mxu0 0.0
  %833 = vmatpush1.msra.mxu0 0.0
  %834 = vmatprep.subr.mxu0 0.0
  %835 = vmatpush1.msra.mxu0 0.0
  %836 = vmatprep.subr.mxu0 0.0
  %837 = vmatpush1.msra.mxu0 0.0
  %838 = vmatprep.subr.mxu0 0.0
  %839 = vmatpush1.msra.mxu0 0.0
  %840 = vmatprep.subr.mxu0 0.0
  %841 = vmatpush1.msra.mxu0 0.0
  %842 = vmatprep.mubr.f32.mxu0 0.0
  %843 = vmatmul.mubr.f32.gmra.mrb[0].mxu0 %v767
  %v844 = vpop.f32.mrb[0].mxu0
  %v845 = vadd.f32 0.0, %v844
  %v846 = vpop.f32.mrb[0].mxu0
  %847 = vmatprep.mubr.f32.mxu0 0.0
  %848 = vmatmul.mubr.f32.gmra.mrb[0].mxu0 %v770
  %v849 = vpop.f32.mrb[0].mxu0
  %v850 = vadd.f32 0.0, %v849
  %v851 = vpop.f32.mrb[0].mxu0
  %852 = vmatprep.mubr.f32.mxu0 0.0
  %853 = vmatmul.mubr.f32.gmra.mrb[0].mxu0 %v773
  %v854 = vpop.f32.mrb[0].mxu0
  %v855 = vadd.f32 0.0, %v854
  %v856 = vpop.f32.mrb[0].mxu0
  %857 = vmatprep.mubr.f32.mxu0 0.0
  %858 = vmatmul.mubr.f32.gmra.mrb[0].mxu0 %v776
  %v859 = vpop.f32.mrb[0].mxu0
  %v860 = vadd.f32 0.0, %v859
  %v861 = vpop.f32.mrb[0].mxu0
  %862 = vdwg.mxu0
  %v863 = vadd.f32 %v658, %v845
  %v864 = vadd.f32 %v663, %v850
  %v865 = vadd.f32 %v668, %v855
  %v866 = vadd.f32 %v673, %v860
  %s867 = scalar_lea.vmem %s2, 96
  %v868 = vld [vmem:[%s867] sm:$0xff]
  %v869 = vld [vmem:[%s867 + $0x8] sm:$0xff]
  %v870 = vld [vmem:[%s867 + $0x10] sm:$0xff]
  %v871 = vld [vmem:[%s867 + $0x18] sm:$0xff]
  %872 = vmatprep.subr.mxu0 0.0
  %873 = vmatpush1.msra.mxu0 %v270
  %874 = vmatprep.subr.mxu0 0.0
  %875 = vmatpush1.msra.mxu0 %v271
  %876 = vmatprep.subr.mxu0 0.0
  %877 = vmatpush1.msra.mxu0 %v272
  %878 = vmatprep.subr.mxu0 0.0
  %879 = vmatpush1.msra.mxu0 %v273
  %880 = vmatprep.subr.mxu0 0.0
  %881 = vmatpush1.msra.mxu0 %v274
  %882 = vmatprep.subr.mxu0 0.0
  %883 = vmatpush1.msra.mxu0 %v275
  %884 = vmatprep.subr.mxu0 0.0
  %885 = vmatpush1.msra.mxu0 %v276
  %886 = vmatprep.subr.mxu0 0.0
  %887 = vmatpush1.msra.mxu0 %v277
  %888 = vmatprep.subr.mxu0 0.0
  %889 = vmatpush1.msra.mxu0 %v278
  %890 = vmatprep.subr.mxu0 0.0
  %891 = vmatpush1.msra.mxu0 %v279
  %892 = vmatprep.subr.mxu0 0.0
  %893 = vmatpush1.msra.mxu0 %v280
  %894 = vmatprep.subr.mxu0 0.0
  %895 = vmatpush1.msra.mxu0 %v281
  %896 = vmatprep.subr.mxu0 0.0
  %897 = vmatpush1.msra.mxu0 %v282
  %898 = vmatprep.subr.mxu0 0.0
  %899 = vmatpush1.msra.mxu0 %v283
  %900 = vmatprep.subr.mxu0 0.0
  %901 = vmatpush1.msra.mxu0 %v284
  %902 = vmatprep.subr.mxu0 0.0
  %903 = vmatpush1.msra.mxu0 %v285
  %904 = vmatprep.subr.mxu0 0.0
  %905 = vmatpush1.msra.mxu0 0.0
  %906 = vmatprep.subr.mxu0 0.0
  %907 = vmatpush1.msra.mxu0 0.0
  %908 = vmatprep.subr.mxu0 0.0
  %909 = vmatpush1.msra.mxu0 0.0
  %910 = vmatprep.subr.mxu0 0.0
  %911 = vmatpush1.msra.mxu0 0.0
  %912 = vmatprep.subr.mxu0 0.0
  %913 = vmatpush1.msra.mxu0 0.0
  %914 = vmatprep.subr.mxu0 0.0
  %915 = vmatpush1.msra.mxu0 0.0
  %916 = vmatprep.subr.mxu0 0.0
  %917 = vmatpush1.msra.mxu0 0.0
  %918 = vmatprep.subr.mxu0 0.0
  %919 = vmatpush1.msra.mxu0 0.0
  %920 = vmatprep.subr.mxu0 0.0
  %921 = vmatpush1.msra.mxu0 0.0
  %922 = vmatprep.subr.mxu0 0.0
  %923 = vmatpush1.msra.mxu0 0.0
  %924 = vmatprep.subr.mxu0 0.0
  %925 = vmatpush1.msra.mxu0 0.0
  %926 = vmatprep.subr.mxu0 0.0
  %927 = vmatpush1.msra.mxu0 0.0
  %928 = vmatprep.subr.mxu0 0.0
  %929 = vmatpush1.msra.mxu0 0.0
  %930 = vmatprep.subr.mxu0 0.0
  %931 = vmatpush1.msra.mxu0 0.0
  %932 = vmatprep.subr.mxu0 0.0
  %933 = vmatpush1.msra.mxu0 0.0
  %934 = vmatprep.subr.mxu0 0.0
  %935 = vmatpush1.msra.mxu0 0.0
  %936 = vmatprep.mubr.f32.mxu0 0.0
  %937 = vmatmul.mubr.f32.gmra.mrb[0].mxu0 %v868
  %v938 = vpop.f32.mrb[0].mxu0
  %v939 = vadd.f32 0.0, %v938
  %v940 = vpop.f32.mrb[0].mxu0
  %941 = vmatprep.mubr.f32.mxu0 0.0
  %942 = vmatmul.mubr.f32.gmra.mrb[0].mxu0 %v869
  %v943 = vpop.f32.mrb[0].mxu0
  %v944 = vadd.f32 0.0, %v943
  %v945 = vpop.f32.mrb[0].mxu0
  %946 = vmatprep.mubr.f32.mxu0 0.0
  %947 = vmatmul.mubr.f32.gmra.mrb[0].mxu0 %v870
  %v948 = vpop.f32.mrb[0].mxu0
  %v949 = vadd.f32 0.0, %v948
  %v950 = vpop.f32.mrb[0].mxu0
  %951 = vmatprep.mubr.f32.mxu0 0.0
  %952 = vmatmul.mubr.f32.gmra.mrb[0].mxu0 %v871
  %v953 = vpop.f32.mrb[0].mxu0
  %v954 = vadd.f32 0.0, %v953
  %v955 = vpop.f32.mrb[0].mxu0
  %956 = vdwg.mxu0
  %v958 = vsel %vm481, %v939, 0
  %v961 = vsel %vm481, %v944, 0
  %v964 = vsel %vm481, %v949, 0
  %v967 = vsel %vm481, %v954, 0
  %969 = vmatprep.subr.mxu0 0.0
  %970 = vmatpush1.msra.mxu0 %v289
  %971 = vmatprep.subr.mxu0 0.0
  %972 = vmatpush1.msra.mxu0 0.0
  %973 = vmatprep.subr.mxu0 0.0
  %974 = vmatpush1.msra.mxu0 0.0
  %975 = vmatprep.subr.mxu0 0.0
  %976 = vmatpush1.msra.mxu0 0.0
  %977 = vmatprep.subr.mxu0 0.0
  %978 = vmatpush1.msra.mxu0 0.0
  %979 = vmatprep.subr.mxu0 0.0
  %980 = vmatpush1.msra.mxu0 0.0
  %981 = vmatprep.subr.mxu0 0.0
  %982 = vmatpush1.msra.mxu0 0.0
  %983 = vmatprep.subr.mxu0 0.0
  %984 = vmatpush1.msra.mxu0 0.0
  %985 = vmatprep.subr.mxu0 0.0
  %986 = vmatpush1.msra.mxu0 0.0
  %987 = vmatprep.subr.mxu0 0.0
  %988 = vmatpush1.msra.mxu0 0.0
  %989 = vmatprep.subr.mxu0 0.0
  %990 = vmatpush1.msra.mxu0 0.0
  %991 = vmatprep.subr.mxu0 0.0
  %992 = vmatpush1.msra.mxu0 0.0
  %993 = vmatprep.subr.mxu0 0.0
  %994 = vmatpush1.msra.mxu0 0.0
  %995 = vmatprep.subr.mxu0 0.0
  %996 = vmatpush1.msra.mxu0 0.0
  %997 = vmatprep.subr.mxu0 0.0
  %998 = vmatpush1.msra.mxu0 0.0
  %999 = vmatprep.subr.mxu0 0.0
  %1000 = vmatpush1.msra.mxu0 0.0
  %1001 = vmatprep.subr.mxu0 0.0
  %1002 = vmatpush1.msra.mxu0 0.0
  %1003 = vmatprep.subr.mxu0 0.0
  %1004 = vmatpush1.msra.mxu0 0.0
  %1005 = vmatprep.subr.mxu0 0.0
  %1006 = vmatpush1.msra.mxu0 0.0
  %1007 = vmatprep.subr.mxu0 0.0
  %1008 = vmatpush1.msra.mxu0 0.0
  %1009 = vmatprep.subr.mxu0 0.0
  %1010 = vmatpush1.msra.mxu0 0.0
  %1011 = vmatprep.subr.mxu0 0.0
  %1012 = vmatpush1.msra.mxu0 0.0
  %1013 = vmatprep.subr.mxu0 0.0
  %1014 = vmatpush1.msra.mxu0 0.0
  %1015 = vmatprep.subr.mxu0 0.0
  %1016 = vmatpush1.msra.mxu0 0.0
  %1017 = vmatprep.subr.mxu0 0.0
  %1018 = vmatpush1.msra.mxu0 0.0
  %1019 = vmatprep.subr.mxu0 0.0
  %1020 = vmatpush1.msra.mxu0 0.0
  %1021 = vmatprep.subr.mxu0 0.0
  %1022 = vmatpush1.msra.mxu0 0.0
  %1023 = vmatprep.subr.mxu0 0.0
  %1024 = vmatpush1.msra.mxu0 0.0
  %1025 = vmatprep.subr.mxu0 0.0
  %1026 = vmatpush1.msra.mxu0 0.0
  %1027 = vmatprep.subr.mxu0 0.0
  %1028 = vmatpush1.msra.mxu0 0.0
  %1029 = vmatprep.subr.mxu0 0.0
  %1030 = vmatpush1.msra.mxu0 0.0
  %1031 = vmatprep.subr.mxu0 0.0
  %1032 = vmatpush1.msra.mxu0 0.0
  %1033 = vmatprep.mubr.f32.mxu0 0.0
  %1034 = vmatmul.mubr.f32.gmra.mrb[0].mxu0 %v958
  %v1035 = vpop.f32.mrb[0].mxu0
  %v1036 = vadd.f32 0.0, %v1035
  %v1037 = vpop.f32.mrb[0].mxu0
  %1038 = vmatprep.mubr.f32.mxu0 0.0
  %1039 = vmatmul.mubr.f32.gmra.mrb[0].mxu0 %v961
  %v1040 = vpop.f32.mrb[0].mxu0
  %v1041 = vadd.f32 0.0, %v1040
  %v1042 = vpop.f32.mrb[0].mxu0
  %1043 = vmatprep.mubr.f32.mxu0 0.0
  %1044 = vmatmul.mubr.f32.gmra.mrb[0].mxu0 %v964
  %v1045 = vpop.f32.mrb[0].mxu0
  %v1046 = vadd.f32 0.0, %v1045
  %v1047 = vpop.f32.mrb[0].mxu0
  %1048 = vmatprep.mubr.f32.mxu0 0.0
  %1049 = vmatmul.mubr.f32.gmra.mrb[0].mxu0 %v967
  %v1050 = vpop.f32.mrb[0].mxu0
  %v1051 = vadd.f32 0.0, %v1050
  %v1052 = vpop.f32.mrb[0].mxu0
  %1053 = vdwg.mxu0
  %v1054 = vadd.f32 %v863, %v1036
  %v1055 = vadd.f32 %v864, %v1041
  %v1056 = vadd.f32 %v865, %v1046
  %v1057 = vadd.f32 %v866, %v1051
  %s1058 = scalar_lea.vmem %s2, 128
  %v1059 = vld [vmem:[%s1058] sm:$0xff]
  %v1060 = vld [vmem:[%s1058 + $0x8] sm:$0xff]
  %v1061 = vld [vmem:[%s1058 + $0x10] sm:$0xff]
  %v1062 = vld [vmem:[%s1058 + $0x18] sm:$0xff]
  %1063 = vmatprep.subr.mxu0 0.0
  %1064 = vmatpush1.msra.mxu0 %v270
  %1065 = vmatprep.subr.mxu0 0.0
  %1066 = vmatpush1.msra.mxu0 %v271
  %1067 = vmatprep.subr.mxu0 0.0
  %1068 = vmatpush1.msra.mxu0 %v272
  %1069 = vmatprep.subr.mxu0 0.0
  %1070 = vmatpush1.msra.mxu0 %v273
  %1071 = vmatprep.subr.mxu0 0.0
  %1072 = vmatpush1.msra.mxu0 %v274
  %1073 = vmatprep.subr.mxu0 0.0
  %1074 = vmatpush1.msra.mxu0 %v275
  %1075 = vmatprep.subr.mxu0 0.0
  %1076 = vmatpush1.msra.mxu0 %v276
  %1077 = vmatprep.subr.mxu0 0.0
  %1078 = vmatpush1.msra.mxu0 %v277
  %1079 = vmatprep.subr.mxu0 0.0
  %1080 = vmatpush1.msra.mxu0 %v278
  %1081 = vmatprep.subr.mxu0 0.0
  %1082 = vmatpush1.msra.mxu0 %v279
  %1083 = vmatprep.subr.mxu0 0.0
  %1084 = vmatpush1.msra.mxu0 %v280
  %1085 = vmatprep.subr.mxu0 0.0
  %1086 = vmatpush1.msra.mxu0 %v281
  %1087 = vmatprep.subr.mxu0 0.0
  %1088 = vmatpush1.msra.mxu0 %v282
  %1089 = vmatprep.subr.mxu0 0.0
  %1090 = vmatpush1.msra.mxu0 %v283
  %1091 = vmatprep.subr.mxu0 0.0
  %1092 = vmatpush1.msra.mxu0 %v284
  %1093 = vmatprep.subr.mxu0 0.0
  %1094 = vmatpush1.msra.mxu0 %v285
  %1095 = vmatprep.subr.mxu0 0.0
  %1096 = vmatpush1.msra.mxu0 0.0
  %1097 = vmatprep.subr.mxu0 0.0
  %1098 = vmatpush1.msra.mxu0 0.0
  %1099 = vmatprep.subr.mxu0 0.0
  %1100 = vmatpush1.msra.mxu0 0.0
  %1101 = vmatprep.subr.mxu0 0.0
  %1102 = vmatpush1.msra.mxu0 0.0
  %1103 = vmatprep.subr.mxu0 0.0
  %1104 = vmatpush1.msra.mxu0 0.0
  %1105 = vmatprep.subr.mxu0 0.0
  %1106 = vmatpush1.msra.mxu0 0.0
  %1107 = vmatprep.subr.mxu0 0.0
  %1108 = vmatpush1.msra.mxu0 0.0
  %1109 = vmatprep.subr.mxu0 0.0
  %1110 = vmatpush1.msra.mxu0 0.0
  %1111 = vmatprep.subr.mxu0 0.0
  %1112 = vmatpush1.msra.mxu0 0.0
  %1113 = vmatprep.subr.mxu0 0.0
  %1114 = vmatpush1.msra.mxu0 0.0
  %1115 = vmatprep.subr.mxu0 0.0
  %1116 = vmatpush1.msra.mxu0 0.0
  %1117 = vmatprep.subr.mxu0 0.0
  %1118 = vmatpush1.msra.mxu0 0.0
  %1119 = vmatprep.subr.mxu0 0.0
  %1120 = vmatpush1.msra.mxu0 0.0
  %1121 = vmatprep.subr.mxu0 0.0
  %1122 = vmatpush1.msra.mxu0 0.0
  %1123 = vmatprep.subr.mxu0 0.0
  %1124 = vmatpush1.msra.mxu0 0.0
  %1125 = vmatprep.subr.mxu0 0.0
  %1126 = vmatpush1.msra.mxu0 0.0
  %1127 = vmatprep.mubr.f32.mxu0 0.0
  %1128 = vmatmul.mubr.f32.gmra.mrb[0].mxu0 %v1059
  %v1129 = vpop.f32.mrb[0].mxu0
  %v1130 = vadd.f32 0.0, %v1129
  %v1131 = vpop.f32.mrb[0].mxu0
  %1132 = vmatprep.mubr.f32.mxu0 0.0
  %1133 = vmatmul.mubr.f32.gmra.mrb[0].mxu0 %v1060
  %v1134 = vpop.f32.mrb[0].mxu0
  %v1135 = vadd.f32 0.0, %v1134
  %v1136 = vpop.f32.mrb[0].mxu0
  %1137 = vmatprep.mubr.f32.mxu0 0.0
  %1138 = vmatmul.mubr.f32.gmra.mrb[0].mxu0 %v1061
  %v1139 = vpop.f32.mrb[0].mxu0
  %v1140 = vadd.f32 0.0, %v1139
  %v1141 = vpop.f32.mrb[0].mxu0
  %1142 = vmatprep.mubr.f32.mxu0 0.0
  %1143 = vmatmul.mubr.f32.gmra.mrb[0].mxu0 %v1062
  %v1144 = vpop.f32.mrb[0].mxu0
  %v1145 = vadd.f32 0.0, %v1144
  %v1146 = vpop.f32.mrb[0].mxu0
  %1147 = vdwg.mxu0
  %v1149 = vsel %vm481, %v1130, 0
  %v1152 = vsel %vm481, %v1135, 0
  %v1155 = vsel %vm481, %v1140, 0
  %v1158 = vsel %vm481, %v1145, 0
  %1160 = vmatprep.subr.mxu0 0.0
  %1161 = vmatpush1.msra.mxu0 %v290
  %1162 = vmatprep.subr.mxu0 0.0
  %1163 = vmatpush1.msra.mxu0 0.0
  %1164 = vmatprep.subr.mxu0 0.0
  %1165 = vmatpush1.msra.mxu0 0.0
  %1166 = vmatprep.subr.mxu0 0.0
  %1167 = vmatpush1.msra.mxu0 0.0
  %1168 = vmatprep.subr.mxu0 0.0
  %1169 = vmatpush1.msra.mxu0 0.0
  %1170 = vmatprep.subr.mxu0 0.0
  %1171 = vmatpush1.msra.mxu0 0.0
  %1172 = vmatprep.subr.mxu0 0.0
  %1173 = vmatpush1.msra.mxu0 0.0
  %1174 = vmatprep.subr.mxu0 0.0
  %1175 = vmatpush1.msra.mxu0 0.0
  %1176 = vmatprep.subr.mxu0 0.0
  %1177 = vmatpush1.msra.mxu0 0.0
  %1178 = vmatprep.subr.mxu0 0.0
  %1179 = vmatpush1.msra.mxu0 0.0
  %1180 = vmatprep.subr.mxu0 0.0
  %1181 = vmatpush1.msra.mxu0 0.0
  %1182 = vmatprep.subr.mxu0 0.0
  %1183 = vmatpush1.msra.mxu0 0.0
  %1184 = vmatprep.subr.mxu0 0.0
  %1185 = vmatpush1.msra.mxu0 0.0
  %1186 = vmatprep.subr.mxu0 0.0
  %1187 = vmatpush1.msra.mxu0 0.0
  %1188 = vmatprep.subr.mxu0 0.0
  %1189 = vmatpush1.msra.mxu0 0.0
  %1190 = vmatprep.subr.mxu0 0.0
  %1191 = vmatpush1.msra.mxu0 0.0
  %1192 = vmatprep.subr.mxu0 0.0
  %1193 = vmatpush1.msra.mxu0 0.0
  %1194 = vmatprep.subr.mxu0 0.0
  %1195 = vmatpush1.msra.mxu0 0.0
  %1196 = vmatprep.subr.mxu0 0.0
  %1197 = vmatpush1.msra.mxu0 0.0
  %1198 = vmatprep.subr.mxu0 0.0
  %1199 = vmatpush1.msra.mxu0 0.0
  %1200 = vmatprep.subr.mxu0 0.0
  %1201 = vmatpush1.msra.mxu0 0.0
  %1202 = vmatprep.subr.mxu0 0.0
  %1203 = vmatpush1.msra.mxu0 0.0
  %1204 = vmatprep.subr.mxu0 0.0
  %1205 = vmatpush1.msra.mxu0 0.0
  %1206 = vmatprep.subr.mxu0 0.0
  %1207 = vmatpush1.msra.mxu0 0.0
  %1208 = vmatprep.subr.mxu0 0.0
  %1209 = vmatpush1.msra.mxu0 0.0
  %1210 = vmatprep.subr.mxu0 0.0
  %1211 = vmatpush1.msra.mxu0 0.0
  %1212 = vmatprep.subr.mxu0 0.0
  %1213 = vmatpush1.msra.mxu0 0.0
  %1214 = vmatprep.subr.mxu0 0.0
  %1215 = vmatpush1.msra.mxu0 0.0
  %1216 = vmatprep.subr.mxu0 0.0
  %1217 = vmatpush1.msra.mxu0 0.0
  %1218 = vmatprep.subr.mxu0 0.0
  %1219 = vmatpush1.msra.mxu0 0.0
  %1220 = vmatprep.subr.mxu0 0.0
  %1221 = vmatpush1.msra.mxu0 0.0
  %1222 = vmatprep.subr.mxu0 0.0
  %1223 = vmatpush1.msra.mxu0 0.0
  %1224 = vmatprep.mubr.f32.mxu0 0.0
  %1225 = vmatmul.mubr.f32.gmra.mrb[0].mxu0 %v1149
  %v1226 = vpop.f32.mrb[0].mxu0
  %v1227 = vadd.f32 0.0, %v1226
  %v1228 = vpop.f32.mrb[0].mxu0
  %1229 = vmatprep.mubr.f32.mxu0 0.0
  %1230 = vmatmul.mubr.f32.gmra.mrb[0].mxu0 %v1152
  %v1231 = vpop.f32.mrb[0].mxu0
  %v1232 = vadd.f32 0.0, %v1231
  %v1233 = vpop.f32.mrb[0].mxu0
  %1234 = vmatprep.mubr.f32.mxu0 0.0
  %1235 = vmatmul.mubr.f32.gmra.mrb[0].mxu0 %v1155
  %v1236 = vpop.f32.mrb[0].mxu0
  %v1237 = vadd.f32 0.0, %v1236
  %v1238 = vpop.f32.mrb[0].mxu0
  %1239 = vmatprep.mubr.f32.mxu0 0.0
  %1240 = vmatmul.mubr.f32.gmra.mrb[0].mxu0 %v1158
  %v1241 = vpop.f32.mrb[0].mxu0
  %v1242 = vadd.f32 0.0, %v1241
  %v1243 = vpop.f32.mrb[0].mxu0
  %1244 = vdwg.mxu0
  %v1245 = vadd.f32 %v1054, %v1227
  %v1246 = vadd.f32 %v1055, %v1232
  %v1247 = vadd.f32 %v1056, %v1237
  %v1248 = vadd.f32 %v1057, %v1242
  %s1249 = scalar_lea.vmem %s2, 160
  %v1250 = vld [vmem:[%s1249] sm:$0xff]
  %v1251 = vld [vmem:[%s1249 + $0x8] sm:$0xff]
  %v1252 = vld [vmem:[%s1249 + $0x10] sm:$0xff]
  %v1253 = vld [vmem:[%s1249 + $0x18] sm:$0xff]
  %1254 = vmatprep.subr.mxu0 0.0
  %1255 = vmatpush1.msra.mxu0 %v270
  %1256 = vmatprep.subr.mxu0 0.0
  %1257 = vmatpush1.msra.mxu0 %v271
  %1258 = vmatprep.subr.mxu0 0.0
  %1259 = vmatpush1.msra.mxu0 %v272
  %1260 = vmatprep.subr.mxu0 0.0
  %1261 = vmatpush1.msra.mxu0 %v273
  %1262 = vmatprep.subr.mxu0 0.0
  %1263 = vmatpush1.msra.mxu0 %v274
  %1264 = vmatprep.subr.mxu0 0.0
  %1265 = vmatpush1.msra.mxu0 %v275
  %1266 = vmatprep.subr.mxu0 0.0
  %1267 = vmatpush1.msra.mxu0 %v276
  %1268 = vmatprep.subr.mxu0 0.0
  %1269 = vmatpush1.msra.mxu0 %v277
  %1270 = vmatprep.subr.mxu0 0.0
  %1271 = vmatpush1.msra.mxu0 %v278
  %1272 = vmatprep.subr.mxu0 0.0
  %1273 = vmatpush1.msra.mxu0 %v279
  %1274 = vmatprep.subr.mxu0 0.0
  %1275 = vmatpush1.msra.mxu0 %v280
  %1276 = vmatprep.subr.mxu0 0.0
  %1277 = vmatpush1.msra.mxu0 %v281
  %1278 = vmatprep.subr.mxu0 0.0
  %1279 = vmatpush1.msra.mxu0 %v282
  %1280 = vmatprep.subr.mxu0 0.0
  %1281 = vmatpush1.msra.mxu0 %v283
  %1282 = vmatprep.subr.mxu0 0.0
  %1283 = vmatpush1.msra.mxu0 %v284
  %1284 = vmatprep.subr.mxu0 0.0
  %1285 = vmatpush1.msra.mxu0 %v285
  %1286 = vmatprep.subr.mxu0 0.0
  %1287 = vmatpush1.msra.mxu0 0.0
  %1288 = vmatprep.subr.mxu0 0.0
  %1289 = vmatpush1.msra.mxu0 0.0
  %1290 = vmatprep.subr.mxu0 0.0
  %1291 = vmatpush1.msra.mxu0 0.0
  %1292 = vmatprep.subr.mxu0 0.0
  %1293 = vmatpush1.msra.mxu0 0.0
  %1294 = vmatprep.subr.mxu0 0.0
  %1295 = vmatpush1.msra.mxu0 0.0
  %1296 = vmatprep.subr.mxu0 0.0
  %1297 = vmatpush1.msra.mxu0 0.0
  %1298 = vmatprep.subr.mxu0 0.0
  %1299 = vmatpush1.msra.mxu0 0.0
  %1300 = vmatprep.subr.mxu0 0.0
  %1301 = vmatpush1.msra.mxu0 0.0
  %1302 = vmatprep.subr.mxu0 0.0
  %1303 = vmatpush1.msra.mxu0 0.0
  %1304 = vmatprep.subr.mxu0 0.0
  %1305 = vmatpush1.msra.mxu0 0.0
  %1306 = vmatprep.subr.mxu0 0.0
  %1307 = vmatpush1.msra.mxu0 0.0
  %1308 = vmatprep.subr.mxu0 0.0
  %1309 = vmatpush1.msra.mxu0 0.0
  %1310 = vmatprep.subr.mxu0 0.0
  %1311 = vmatpush1.msra.mxu0 0.0
  %1312 = vmatprep.subr.mxu0 0.0
  %1313 = vmatpush1.msra.mxu0 0.0
  %1314 = vmatprep.subr.mxu0 0.0
  %1315 = vmatpush1.msra.mxu0 0.0
  %1316 = vmatprep.subr.mxu0 0.0
  %1317 = vmatpush1.msra.mxu0 0.0
  %1318 = vmatprep.mubr.f32.mxu0 0.0
  %1319 = vmatmul.mubr.f32.gmra.mrb[0].mxu0 %v1250
  %v1320 = vpop.f32.mrb[0].mxu0
  %v1321 = vadd.f32 0.0, %v1320
  %v1322 = vpop.f32.mrb[0].mxu0
  %1323 = vmatprep.mubr.f32.mxu0 0.0
  %1324 = vmatmul.mubr.f32.gmra.mrb[0].mxu0 %v1251
  %v1325 = vpop.f32.mrb[0].mxu0
  %v1326 = vadd.f32 0.0, %v1325
  %v1327 = vpop.f32.mrb[0].mxu0
  %1328 = vmatprep.mubr.f32.mxu0 0.0
  %1329 = vmatmul.mubr.f32.gmra.mrb[0].mxu0 %v1252
  %v1330 = vpop.f32.mrb[0].mxu0
  %v1331 = vadd.f32 0.0, %v1330
  %v1332 = vpop.f32.mrb[0].mxu0
  %1333 = vmatprep.mubr.f32.mxu0 0.0
  %1334 = vmatmul.mubr.f32.gmra.mrb[0].mxu0 %v1253
  %v1335 = vpop.f32.mrb[0].mxu0
  %v1336 = vadd.f32 0.0, %v1335
  %v1337 = vpop.f32.mrb[0].mxu0
  %1338 = vdwg.mxu0
  %v1340 = vsel %vm481, %v1321, 0
  %v1343 = vsel %vm481, %v1326, 0
  %v1346 = vsel %vm481, %v1331, 0
  %v1349 = vsel %vm481, %v1336, 0
  %1351 = vmatprep.subr.mxu0 0.0
  %1352 = vmatpush1.msra.mxu0 %v291
  %1353 = vmatprep.subr.mxu0 0.0
  %1354 = vmatpush1.msra.mxu0 0.0
  %1355 = vmatprep.subr.mxu0 0.0
  %1356 = vmatpush1.msra.mxu0 0.0
  %1357 = vmatprep.subr.mxu0 0.0
  %1358 = vmatpush1.msra.mxu0 0.0
  %1359 = vmatprep.subr.mxu0 0.0
  %1360 = vmatpush1.msra.mxu0 0.0
  %1361 = vmatprep.subr.mxu0 0.0
  %1362 = vmatpush1.msra.mxu0 0.0
  %1363 = vmatprep.subr.mxu0 0.0
  %1364 = vmatpush1.msra.mxu0 0.0
  %1365 = vmatprep.subr.mxu0 0.0
  %1366 = vmatpush1.msra.mxu0 0.0
  %1367 = vmatprep.subr.mxu0 0.0
  %1368 = vmatpush1.msra.mxu0 0.0
  %1369 = vmatprep.subr.mxu0 0.0
  %1370 = vmatpush1.msra.mxu0 0.0
  %1371 = vmatprep.subr.mxu0 0.0
  %1372 = vmatpush1.msra.mxu0 0.0
  %1373 = vmatprep.subr.mxu0 0.0
  %1374 = vmatpush1.msra.mxu0 0.0
  %1375 = vmatprep.subr.mxu0 0.0
  %1376 = vmatpush1.msra.mxu0 0.0
  %1377 = vmatprep.subr.mxu0 0.0
  %1378 = vmatpush1.msra.mxu0 0.0
  %1379 = vmatprep.subr.mxu0 0.0
  %1380 = vmatpush1.msra.mxu0 0.0
  %1381 = vmatprep.subr.mxu0 0.0
  %1382 = vmatpush1.msra.mxu0 0.0
  %1383 = vmatprep.subr.mxu0 0.0
  %1384 = vmatpush1.msra.mxu0 0.0
  %1385 = vmatprep.subr.mxu0 0.0
  %1386 = vmatpush1.msra.mxu0 0.0
  %1387 = vmatprep.subr.mxu0 0.0
  %1388 = vmatpush1.msra.mxu0 0.0
  %1389 = vmatprep.subr.mxu0 0.0
  %1390 = vmatpush1.msra.mxu0 0.0
  %1391 = vmatprep.subr.mxu0 0.0
  %1392 = vmatpush1.msra.mxu0 0.0
  %1393 = vmatprep.subr.mxu0 0.0
  %1394 = vmatpush1.msra.mxu0 0.0
  %1395 = vmatprep.subr.mxu0 0.0
  %1396 = vmatpush1.msra.mxu0 0.0
  %1397 = vmatprep.subr.mxu0 0.0
  %1398 = vmatpush1.msra.mxu0 0.0
  %1399 = vmatprep.subr.mxu0 0.0
  %1400 = vmatpush1.msra.mxu0 0.0
  %1401 = vmatprep.subr.mxu0 0.0
  %1402 = vmatpush1.msra.mxu0 0.0
  %1403 = vmatprep.subr.mxu0 0.0
  %1404 = vmatpush1.msra.mxu0 0.0
  %1405 = vmatprep.subr.mxu0 0.0
  %1406 = vmatpush1.msra.mxu0 0.0
  %1407 = vmatprep.subr.mxu0 0.0
  %1408 = vmatpush1.msra.mxu0 0.0
  %1409 = vmatprep.subr.mxu0 0.0
  %1410 = vmatpush1.msra.mxu0 0.0
  %1411 = vmatprep.subr.mxu0 0.0
  %1412 = vmatpush1.msra.mxu0 0.0
  %1413 = vmatprep.subr.mxu0 0.0
  %1414 = vmatpush1.msra.mxu0 0.0
  %1415 = vmatprep.mubr.f32.mxu0 0.0
  %1416 = vmatmul.mubr.f32.gmra.mrb[0].mxu0 %v1340
  %v1417 = vpop.f32.mrb[0].mxu0
  %v1418 = vadd.f32 0.0, %v1417
  %v1419 = vpop.f32.mrb[0].mxu0
  %1420 = vmatprep.mubr.f32.mxu0 0.0
  %1421 = vmatmul.mubr.f32.gmra.mrb[0].mxu0 %v1343
  %v1422 = vpop.f32.mrb[0].mxu0
  %v1423 = vadd.f32 0.0, %v1422
  %v1424 = vpop.f32.mrb[0].mxu0
  %1425 = vmatprep.mubr.f32.mxu0 0.0
  %1426 = vmatmul.mubr.f32.gmra.mrb[0].mxu0 %v1346
  %v1427 = vpop.f32.mrb[0].mxu0
  %v1428 = vadd.f32 0.0, %v1427
  %v1429 = vpop.f32.mrb[0].mxu0
  %1430 = vmatprep.mubr.f32.mxu0 0.0
  %1431 = vmatmul.mubr.f32.gmra.mrb[0].mxu0 %v1349
  %v1432 = vpop.f32.mrb[0].mxu0
  %v1433 = vadd.f32 0.0, %v1432
  %v1434 = vpop.f32.mrb[0].mxu0
  %1435 = vdwg.mxu0
  %v1436 = vadd.f32 %v1245, %v1418
  %v1437 = vadd.f32 %v1246, %v1423
  %v1438 = vadd.f32 %v1247, %v1428
  %v1439 = vadd.f32 %v1248, %v1433
  %s1440 = scalar_lea.vmem %s2, 192
  %v1441 = vld [vmem:[%s1440] sm:$0xff]
  %v1442 = vld [vmem:[%s1440 + $0x8] sm:$0xff]
  %v1443 = vld [vmem:[%s1440 + $0x10] sm:$0xff]
  %v1444 = vld [vmem:[%s1440 + $0x18] sm:$0xff]
  %1445 = vmatprep.subr.mxu0 0.0
  %1446 = vmatpush1.msra.mxu0 %v270
  %1447 = vmatprep.subr.mxu0 0.0
  %1448 = vmatpush1.msra.mxu0 %v271
  %1449 = vmatprep.subr.mxu0 0.0
  %1450 = vmatpush1.msra.mxu0 %v272
  %1451 = vmatprep.subr.mxu0 0.0
  %1452 = vmatpush1.msra.mxu0 %v273
  %1453 = vmatprep.subr.mxu0 0.0
  %1454 = vmatpush1.msra.mxu0 %v274
  %1455 = vmatprep.subr.mxu0 0.0
  %1456 = vmatpush1.msra.mxu0 %v275
  %1457 = vmatprep.subr.mxu0 0.0
  %1458 = vmatpush1.msra.mxu0 %v276
  %1459 = vmatprep.subr.mxu0 0.0
  %1460 = vmatpush1.msra.mxu0 %v277
  %1461 = vmatprep.subr.mxu0 0.0
  %1462 = vmatpush1.msra.mxu0 %v278
  %1463 = vmatprep.subr.mxu0 0.0
  %1464 = vmatpush1.msra.mxu0 %v279
  %1465 = vmatprep.subr.mxu0 0.0
  %1466 = vmatpush1.msra.mxu0 %v280
  %1467 = vmatprep.subr.mxu0 0.0
  %1468 = vmatpush1.msra.mxu0 %v281
  %1469 = vmatprep.subr.mxu0 0.0
  %1470 = vmatpush1.msra.mxu0 %v282
  %1471 = vmatprep.subr.mxu0 0.0
  %1472 = vmatpush1.msra.mxu0 %v283
  %1473 = vmatprep.subr.mxu0 0.0
  %1474 = vmatpush1.msra.mxu0 %v284
  %1475 = vmatprep.subr.mxu0 0.0
  %1476 = vmatpush1.msra.mxu0 %v285
  %1477 = vmatprep.subr.mxu0 0.0
  %1478 = vmatpush1.msra.mxu0 0.0
  %1479 = vmatprep.subr.mxu0 0.0
  %1480 = vmatpush1.msra.mxu0 0.0
  %1481 = vmatprep.subr.mxu0 0.0
  %1482 = vmatpush1.msra.mxu0 0.0
  %1483 = vmatprep.subr.mxu0 0.0
  %1484 = vmatpush1.msra.mxu0 0.0
  %1485 = vmatprep.subr.mxu0 0.0
  %1486 = vmatpush1.msra.mxu0 0.0
  %1487 = vmatprep.subr.mxu0 0.0
  %1488 = vmatpush1.msra.mxu0 0.0
  %1489 = vmatprep.subr.mxu0 0.0
  %1490 = vmatpush1.msra.mxu0 0.0
  %1491 = vmatprep.subr.mxu0 0.0
  %1492 = vmatpush1.msra.mxu0 0.0
  %1493 = vmatprep.subr.mxu0 0.0
  %1494 = vmatpush1.msra.mxu0 0.0
  %1495 = vmatprep.subr.mxu0 0.0
  %1496 = vmatpush1.msra.mxu0 0.0
  %1497 = vmatprep.subr.mxu0 0.0
  %1498 = vmatpush1.msra.mxu0 0.0
  %1499 = vmatprep.subr.mxu0 0.0
  %1500 = vmatpush1.msra.mxu0 0.0
  %1501 = vmatprep.subr.mxu0 0.0
  %1502 = vmatpush1.msra.mxu0 0.0
  %1503 = vmatprep.subr.mxu0 0.0
  %1504 = vmatpush1.msra.mxu0 0.0
  %1505 = vmatprep.subr.mxu0 0.0
  %1506 = vmatpush1.msra.mxu0 0.0
  %1507 = vmatprep.subr.mxu0 0.0
  %1508 = vmatpush1.msra.mxu0 0.0
  %1509 = vmatprep.mubr.f32.mxu0 0.0
  %1510 = vmatmul.mubr.f32.gmra.mrb[0].mxu0 %v1441
  %v1511 = vpop.f32.mrb[0].mxu0
  %v1512 = vadd.f32 0.0, %v1511
  %v1513 = vpop.f32.mrb[0].mxu0
  %1514 = vmatprep.mubr.f32.mxu0 0.0
  %1515 = vmatmul.mubr.f32.gmra.mrb[0].mxu0 %v1442
  %v1516 = vpop.f32.mrb[0].mxu0
  %v1517 = vadd.f32 0.0, %v1516
  %v1518 = vpop.f32.mrb[0].mxu0
  %1519 = vmatprep.mubr.f32.mxu0 0.0
  %1520 = vmatmul.mubr.f32.gmra.mrb[0].mxu0 %v1443
  %v1521 = vpop.f32.mrb[0].mxu0
  %v1522 = vadd.f32 0.0, %v1521
  %v1523 = vpop.f32.mrb[0].mxu0
  %1524 = vmatprep.mubr.f32.mxu0 0.0
  %1525 = vmatmul.mubr.f32.gmra.mrb[0].mxu0 %v1444
  %v1526 = vpop.f32.mrb[0].mxu0
  %v1527 = vadd.f32 0.0, %v1526
  %v1528 = vpop.f32.mrb[0].mxu0
  %1529 = vdwg.mxu0
  %v1531 = vsel %vm481, %v1512, 0
  %v1534 = vsel %vm481, %v1517, 0
  %v1537 = vsel %vm481, %v1522, 0
  %v1540 = vsel %vm481, %v1527, 0
  %1542 = vmatprep.subr.mxu0 0.0
  %1543 = vmatpush1.msra.mxu0 %v292
  %1544 = vmatprep.subr.mxu0 0.0
  %1545 = vmatpush1.msra.mxu0 0.0
  %1546 = vmatprep.subr.mxu0 0.0
  %1547 = vmatpush1.msra.mxu0 0.0
  %1548 = vmatprep.subr.mxu0 0.0
  %1549 = vmatpush1.msra.mxu0 0.0
  %1550 = vmatprep.subr.mxu0 0.0
  %1551 = vmatpush1.msra.mxu0 0.0
  %1552 = vmatprep.subr.mxu0 0.0
  %1553 = vmatpush1.msra.mxu0 0.0
  %1554 = vmatprep.subr.mxu0 0.0
  %1555 = vmatpush1.msra.mxu0 0.0
  %1556 = vmatprep.subr.mxu0 0.0
  %1557 = vmatpush1.msra.mxu0 0.0
  %1558 = vmatprep.subr.mxu0 0.0
  %1559 = vmatpush1.msra.mxu0 0.0
  %1560 = vmatprep.subr.mxu0 0.0
  %1561 = vmatpush1.msra.mxu0 0.0
  %1562 = vmatprep.subr.mxu0 0.0
  %1563 = vmatpush1.msra.mxu0 0.0
  %1564 = vmatprep.subr.mxu0 0.0
  %1565 = vmatpush1.msra.mxu0 0.0
  %1566 = vmatprep.subr.mxu0 0.0
  %1567 = vmatpush1.msra.mxu0 0.0
  %1568 = vmatprep.subr.mxu0 0.0
  %1569 = vmatpush1.msra.mxu0 0.0
  %1570 = vmatprep.subr.mxu0 0.0
  %1571 = vmatpush1.msra.mxu0 0.0
  %1572 = vmatprep.subr.mxu0 0.0
  %1573 = vmatpush1.msra.mxu0 0.0
  %1574 = vmatprep.subr.mxu0 0.0
  %1575 = vmatpush1.msra.mxu0 0.0
  %1576 = vmatprep.subr.mxu0 0.0
  %1577 = vmatpush1.msra.mxu0 0.0
  %1578 = vmatprep.subr.mxu0 0.0
  %1579 = vmatpush1.msra.mxu0 0.0
  %1580 = vmatprep.subr.mxu0 0.0
  %1581 = vmatpush1.msra.mxu0 0.0
  %1582 = vmatprep.subr.mxu0 0.0
  %1583 = vmatpush1.msra.mxu0 0.0
  %1584 = vmatprep.subr.mxu0 0.0
  %1585 = vmatpush1.msra.mxu0 0.0
  %1586 = vmatprep.subr.mxu0 0.0
  %1587 = vmatpush1.msra.mxu0 0.0
  %1588 = vmatprep.subr.mxu0 0.0
  %1589 = vmatpush1.msra.mxu0 0.0
  %1590 = vmatprep.subr.mxu0 0.0
  %1591 = vmatpush1.msra.mxu0 0.0
  %1592 = vmatprep.subr.mxu0 0.0
  %1593 = vmatpush1.msra.mxu0 0.0
  %1594 = vmatprep.subr.mxu0 0.0
  %1595 = vmatpush1.msra.mxu0 0.0
  %1596 = vmatprep.subr.mxu0 0.0
  %1597 = vmatpush1.msra.mxu0 0.0
  %1598 = vmatprep.subr.mxu0 0.0
  %1599 = vmatpush1.msra.mxu0 0.0
  %1600 = vmatprep.subr.mxu0 0.0
  %1601 = vmatpush1.msra.mxu0 0.0
  %1602 = vmatprep.subr.mxu0 0.0
  %1603 = vmatpush1.msra.mxu0 0.0
  %1604 = vmatprep.subr.mxu0 0.0
  %1605 = vmatpush1.msra.mxu0 0.0
  %1606 = vmatprep.mubr.f32.mxu0 0.0
  %1607 = vmatmul.mubr.f32.gmra.mrb[0].mxu0 %v1531
  %v1608 = vpop.f32.mrb[0].mxu0
  %v1609 = vadd.f32 0.0, %v1608
  %v1610 = vpop.f32.mrb[0].mxu0
  %1611 = vmatprep.mubr.f32.mxu0 0.0
  %1612 = vmatmul.mubr.f32.gmra.mrb[0].mxu0 %v1534
  %v1613 = vpop.f32.mrb[0].mxu0
  %v1614 = vadd.f32 0.0, %v1613
  %v1615 = vpop.f32.mrb[0].mxu0
  %1616 = vmatprep.mubr.f32.mxu0 0.0
  %1617 = vmatmul.mubr.f32.gmra.mrb[0].mxu0 %v1537
  %v1618 = vpop.f32.mrb[0].mxu0
  %v1619 = vadd.f32 0.0, %v1618
  %v1620 = vpop.f32.mrb[0].mxu0
  %1621 = vmatprep.mubr.f32.mxu0 0.0
  %1622 = vmatmul.mubr.f32.gmra.mrb[0].mxu0 %v1540
  %v1623 = vpop.f32.mrb[0].mxu0
  %v1624 = vadd.f32 0.0, %v1623
  %v1625 = vpop.f32.mrb[0].mxu0
  %1626 = vdwg.mxu0
  %v1627 = vadd.f32 %v1436, %v1609
  %v1628 = vadd.f32 %v1437, %v1614
  %v1629 = vadd.f32 %v1438, %v1619
  %v1630 = vadd.f32 %v1439, %v1624
  %s1631 = scalar_lea.vmem %s2, 224
  %v1632 = vld [vmem:[%s1631] sm:$0xff]
  %v1633 = vld [vmem:[%s1631 + $0x8] sm:$0xff]
  %v1634 = vld [vmem:[%s1631 + $0x10] sm:$0xff]
  %v1635 = vld [vmem:[%s1631 + $0x18] sm:$0xff]
  %1636 = vmatprep.subr.mxu0 0.0
  %1637 = vmatpush1.msra.mxu0 %v270
  %1638 = vmatprep.subr.mxu0 0.0
  %1639 = vmatpush1.msra.mxu0 %v271
  %1640 = vmatprep.subr.mxu0 0.0
  %1641 = vmatpush1.msra.mxu0 %v272
  %1642 = vmatprep.subr.mxu0 0.0
  %1643 = vmatpush1.msra.mxu0 %v273
  %1644 = vmatprep.subr.mxu0 0.0
  %1645 = vmatpush1.msra.mxu0 %v274
  %1646 = vmatprep.subr.mxu0 0.0
  %1647 = vmatpush1.msra.mxu0 %v275
  %1648 = vmatprep.subr.mxu0 0.0
  %1649 = vmatpush1.msra.mxu0 %v276
  %1650 = vmatprep.subr.mxu0 0.0
  %1651 = vmatpush1.msra.mxu0 %v277
  %1652 = vmatprep.subr.mxu0 0.0
  %1653 = vmatpush1.msra.mxu0 %v278
  %1654 = vmatprep.subr.mxu0 0.0
  %1655 = vmatpush1.msra.mxu0 %v279
  %1656 = vmatprep.subr.mxu0 0.0
  %1657 = vmatpush1.msra.mxu0 %v280
  %1658 = vmatprep.subr.mxu0 0.0
  %1659 = vmatpush1.msra.mxu0 %v281
  %1660 = vmatprep.subr.mxu0 0.0
  %1661 = vmatpush1.msra.mxu0 %v282
  %1662 = vmatprep.subr.mxu0 0.0
  %1663 = vmatpush1.msra.mxu0 %v283
  %1664 = vmatprep.subr.mxu0 0.0
  %1665 = vmatpush1.msra.mxu0 %v284
  %1666 = vmatprep.subr.mxu0 0.0
  %1667 = vmatpush1.msra.mxu0 %v285
  %1668 = vmatprep.subr.mxu0 0.0
  %1669 = vmatpush1.msra.mxu0 0.0
  %1670 = vmatprep.subr.mxu0 0.0
  %1671 = vmatpush1.msra.mxu0 0.0
  %1672 = vmatprep.subr.mxu0 0.0
  %1673 = vmatpush1.msra.mxu0 0.0
  %1674 = vmatprep.subr.mxu0 0.0
  %1675 = vmatpush1.msra.mxu0 0.0
  %1676 = vmatprep.subr.mxu0 0.0
  %1677 = vmatpush1.msra.mxu0 0.0
  %1678 = vmatprep.subr.mxu0 0.0
  %1679 = vmatpush1.msra.mxu0 0.0
  %1680 = vmatprep.subr.mxu0 0.0
  %1681 = vmatpush1.msra.mxu0 0.0
  %1682 = vmatprep.subr.mxu0 0.0
  %1683 = vmatpush1.msra.mxu0 0.0
  %1684 = vmatprep.subr.mxu0 0.0
  %1685 = vmatpush1.msra.mxu0 0.0
  %1686 = vmatprep.subr.mxu0 0.0
  %1687 = vmatpush1.msra.mxu0 0.0
  %1688 = vmatprep.subr.mxu0 0.0
  %1689 = vmatpush1.msra.mxu0 0.0
  %1690 = vmatprep.subr.mxu0 0.0
  %1691 = vmatpush1.msra.mxu0 0.0
  %1692 = vmatprep.subr.mxu0 0.0
  %1693 = vmatpush1.msra.mxu0 0.0
  %1694 = vmatprep.subr.mxu0 0.0
  %1695 = vmatpush1.msra.mxu0 0.0
  %1696 = vmatprep.subr.mxu0 0.0
  %1697 = vmatpush1.msra.mxu0 0.0
  %1698 = vmatprep.subr.mxu0 0.0
  %1699 = vmatpush1.msra.mxu0 0.0
  %1700 = vmatprep.mubr.f32.mxu0 0.0
  %1701 = vmatmul.mubr.f32.gmra.mrb[0].mxu0 %v1632
  %v1702 = vpop.f32.mrb[0].mxu0
  %v1703 = vadd.f32 0.0, %v1702
  %v1704 = vpop.f32.mrb[0].mxu0
  %1705 = vmatprep.mubr.f32.mxu0 0.0
  %1706 = vmatmul.mubr.f32.gmra.mrb[0].mxu0 %v1633
  %v1707 = vpop.f32.mrb[0].mxu0
  %v1708 = vadd.f32 0.0, %v1707
  %v1709 = vpop.f32.mrb[0].mxu0
  %1710 = vmatprep.mubr.f32.mxu0 0.0
  %1711 = vmatmul.mubr.f32.gmra.mrb[0].mxu0 %v1634
  %v1712 = vpop.f32.mrb[0].mxu0
  %v1713 = vadd.f32 0.0, %v1712
  %v1714 = vpop.f32.mrb[0].mxu0
  %1715 = vmatprep.mubr.f32.mxu0 0.0
  %1716 = vmatmul.mubr.f32.gmra.mrb[0].mxu0 %v1635
  %v1717 = vpop.f32.mrb[0].mxu0
  %v1718 = vadd.f32 0.0, %v1717
  %v1719 = vpop.f32.mrb[0].mxu0
  %1720 = vdwg.mxu0
  %v1722 = vsel %vm481, %v1703, 0
  %v1725 = vsel %vm481, %v1708, 0
  %v1728 = vsel %vm481, %v1713, 0
  %v1731 = vsel %vm481, %v1718, 0
  %1733 = vmatprep.subr.mxu0 0.0
  %1734 = vmatpush1.msra.mxu0 %v293
  %1735 = vmatprep.subr.mxu0 0.0
  %1736 = vmatpush1.msra.mxu0 0.0
  %1737 = vmatprep.subr.mxu0 0.0
  %1738 = vmatpush1.msra.mxu0 0.0
  %1739 = vmatprep.subr.mxu0 0.0
  %1740 = vmatpush1.msra.mxu0 0.0
  %1741 = vmatprep.subr.mxu0 0.0
  %1742 = vmatpush1.msra.mxu0 0.0
  %1743 = vmatprep.subr.mxu0 0.0
  %1744 = vmatpush1.msra.mxu0 0.0
  %1745 = vmatprep.subr.mxu0 0.0
  %1746 = vmatpush1.msra.mxu0 0.0
  %1747 = vmatprep.subr.mxu0 0.0
  %1748 = vmatpush1.msra.mxu0 0.0
  %1749 = vmatprep.subr.mxu0 0.0
  %1750 = vmatpush1.msra.mxu0 0.0
  %1751 = vmatprep.subr.mxu0 0.0
  %1752 = vmatpush1.msra.mxu0 0.0
  %1753 = vmatprep.subr.mxu0 0.0
  %1754 = vmatpush1.msra.mxu0 0.0
  %1755 = vmatprep.subr.mxu0 0.0
  %1756 = vmatpush1.msra.mxu0 0.0
  %1757 = vmatprep.subr.mxu0 0.0
  %1758 = vmatpush1.msra.mxu0 0.0
  %1759 = vmatprep.subr.mxu0 0.0
  %1760 = vmatpush1.msra.mxu0 0.0
  %1761 = vmatprep.subr.mxu0 0.0
  %1762 = vmatpush1.msra.mxu0 0.0
  %1763 = vmatprep.subr.mxu0 0.0
  %1764 = vmatpush1.msra.mxu0 0.0
  %1765 = vmatprep.subr.mxu0 0.0
  %1766 = vmatpush1.msra.mxu0 0.0
  %1767 = vmatprep.subr.mxu0 0.0
  %1768 = vmatpush1.msra.mxu0 0.0
  %1769 = vmatprep.subr.mxu0 0.0
  %1770 = vmatpush1.msra.mxu0 0.0
  %1771 = vmatprep.subr.mxu0 0.0
  %1772 = vmatpush1.msra.mxu0 0.0
  %1773 = vmatprep.subr.mxu0 0.0
  %1774 = vmatpush1.msra.mxu0 0.0
  %1775 = vmatprep.subr.mxu0 0.0
  %1776 = vmatpush1.msra.mxu0 0.0
  %1777 = vmatprep.subr.mxu0 0.0
  %1778 = vmatpush1.msra.mxu0 0.0
  %1779 = vmatprep.subr.mxu0 0.0
  %1780 = vmatpush1.msra.mxu0 0.0
  %1781 = vmatprep.subr.mxu0 0.0
  %1782 = vmatpush1.msra.mxu0 0.0
  %1783 = vmatprep.subr.mxu0 0.0
  %1784 = vmatpush1.msra.mxu0 0.0
  %1785 = vmatprep.subr.mxu0 0.0
  %1786 = vmatpush1.msra.mxu0 0.0
  %1787 = vmatprep.subr.mxu0 0.0
  %1788 = vmatpush1.msra.mxu0 0.0
  %1789 = vmatprep.subr.mxu0 0.0
  %1790 = vmatpush1.msra.mxu0 0.0
  %1791 = vmatprep.subr.mxu0 0.0
  %1792 = vmatpush1.msra.mxu0 0.0
  %1793 = vmatprep.subr.mxu0 0.0
  %1794 = vmatpush1.msra.mxu0 0.0
  %1795 = vmatprep.subr.mxu0 0.0
  %1796 = vmatpush1.msra.mxu0 0.0
  %1797 = vmatprep.mubr.f32.mxu0 0.0
  %1798 = vmatmul.mubr.f32.gmra.mrb[0].mxu0 %v1722
  %v1799 = vpop.f32.mrb[0].mxu0
  %v1800 = vadd.f32 0.0, %v1799
  %v1801 = vpop.f32.mrb[0].mxu0
  %1802 = vmatprep.mubr.f32.mxu0 0.0
  %1803 = vmatmul.mubr.f32.gmra.mrb[0].mxu0 %v1725
  %v1804 = vpop.f32.mrb[0].mxu0
  %v1805 = vadd.f32 0.0, %v1804
  %v1806 = vpop.f32.mrb[0].mxu0
  %1807 = vmatprep.mubr.f32.mxu0 0.0
  %1808 = vmatmul.mubr.f32.gmra.mrb[0].mxu0 %v1728
  %v1809 = vpop.f32.mrb[0].mxu0
  %v1810 = vadd.f32 0.0, %v1809
  %v1811 = vpop.f32.mrb[0].mxu0
  %1812 = vmatprep.mubr.f32.mxu0 0.0
  %1813 = vmatmul.mubr.f32.gmra.mrb[0].mxu0 %v1731
  %v1814 = vpop.f32.mrb[0].mxu0
  %v1815 = vadd.f32 0.0, %v1814
  %v1816 = vpop.f32.mrb[0].mxu0
  %1817 = vdwg.mxu0
  %v1818 = vadd.f32 %v1627, %v1800
  %v1819 = vadd.f32 %v1628, %v1805
  %v1820 = vadd.f32 %v1629, %v1810
  %v1821 = vadd.f32 %v1630, %v1815
  %s1822 = scalar_lea.vmem %s2, 256
  %v1823 = vld [vmem:[%s1822] sm:$0xff]
  %v1824 = vld [vmem:[%s1822 + $0x8] sm:$0xff]
  %v1825 = vld [vmem:[%s1822 + $0x10] sm:$0xff]
  %v1826 = vld [vmem:[%s1822 + $0x18] sm:$0xff]
  %1827 = vmatprep.subr.mxu0 0.0
  %1828 = vmatpush1.msra.mxu0 %v270
  %1829 = vmatprep.subr.mxu0 0.0
  %1830 = vmatpush1.msra.mxu0 %v271
  %1831 = vmatprep.subr.mxu0 0.0
  %1832 = vmatpush1.msra.mxu0 %v272
  %1833 = vmatprep.subr.mxu0 0.0
  %1834 = vmatpush1.msra.mxu0 %v273
  %1835 = vmatprep.subr.mxu0 0.0
  %1836 = vmatpush1.msra.mxu0 %v274
  %1837 = vmatprep.subr.mxu0 0.0
  %1838 = vmatpush1.msra.mxu0 %v275
  %1839 = vmatprep.subr.mxu0 0.0
  %1840 = vmatpush1.msra.mxu0 %v276
  %1841 = vmatprep.subr.mxu0 0.0
  %1842 = vmatpush1.msra.mxu0 %v277
  %1843 = vmatprep.subr.mxu0 0.0
  %1844 = vmatpush1.msra.mxu0 %v278
  %1845 = vmatprep.subr.mxu0 0.0
  %1846 = vmatpush1.msra.mxu0 %v279
  %1847 = vmatprep.subr.mxu0 0.0
  %1848 = vmatpush1.msra.mxu0 %v280
  %1849 = vmatprep.subr.mxu0 0.0
  %1850 = vmatpush1.msra.mxu0 %v281
  %1851 = vmatprep.subr.mxu0 0.0
  %1852 = vmatpush1.msra.mxu0 %v282
  %1853 = vmatprep.subr.mxu0 0.0
  %1854 = vmatpush1.msra.mxu0 %v283
  %1855 = vmatprep.subr.mxu0 0.0
  %1856 = vmatpush1.msra.mxu0 %v284
  %1857 = vmatprep.subr.mxu0 0.0
  %1858 = vmatpush1.msra.mxu0 %v285
  %1859 = vmatprep.subr.mxu0 0.0
  %1860 = vmatpush1.msra.mxu0 0.0
  %1861 = vmatprep.subr.mxu0 0.0
  %1862 = vmatpush1.msra.mxu0 0.0
  %1863 = vmatprep.subr.mxu0 0.0
  %1864 = vmatpush1.msra.mxu0 0.0
  %1865 = vmatprep.subr.mxu0 0.0
  %1866 = vmatpush1.msra.mxu0 0.0
  %1867 = vmatprep.subr.mxu0 0.0
  %1868 = vmatpush1.msra.mxu0 0.0
  %1869 = vmatprep.subr.mxu0 0.0
  %1870 = vmatpush1.msra.mxu0 0.0
  %1871 = vmatprep.subr.mxu0 0.0
  %1872 = vmatpush1.msra.mxu0 0.0
  %1873 = vmatprep.subr.mxu0 0.0
  %1874 = vmatpush1.msra.mxu0 0.0
  %1875 = vmatprep.subr.mxu0 0.0
  %1876 = vmatpush1.msra.mxu0 0.0
  %1877 = vmatprep.subr.mxu0 0.0
  %1878 = vmatpush1.msra.mxu0 0.0
  %1879 = vmatprep.subr.mxu0 0.0
  %1880 = vmatpush1.msra.mxu0 0.0
  %1881 = vmatprep.subr.mxu0 0.0
  %1882 = vmatpush1.msra.mxu0 0.0
  %1883 = vmatprep.subr.mxu0 0.0
  %1884 = vmatpush1.msra.mxu0 0.0
  %1885 = vmatprep.subr.mxu0 0.0
  %1886 = vmatpush1.msra.mxu0 0.0
  %1887 = vmatprep.subr.mxu0 0.0
  %1888 = vmatpush1.msra.mxu0 0.0
  %1889 = vmatprep.subr.mxu0 0.0
  %1890 = vmatpush1.msra.mxu0 0.0
  %1891 = vmatprep.mubr.f32.mxu0 0.0
  %1892 = vmatmul.mubr.f32.gmra.mrb[0].mxu0 %v1823
  %v1893 = vpop.f32.mrb[0].mxu0
  %v1894 = vadd.f32 0.0, %v1893
  %v1895 = vpop.f32.mrb[0].mxu0
  %1896 = vmatprep.mubr.f32.mxu0 0.0
  %1897 = vmatmul.mubr.f32.gmra.mrb[0].mxu0 %v1824
  %v1898 = vpop.f32.mrb[0].mxu0
  %v1899 = vadd.f32 0.0, %v1898
  %v1900 = vpop.f32.mrb[0].mxu0
  %1901 = vmatprep.mubr.f32.mxu0 0.0
  %1902 = vmatmul.mubr.f32.gmra.mrb[0].mxu0 %v1825
  %v1903 = vpop.f32.mrb[0].mxu0
  %v1904 = vadd.f32 0.0, %v1903
  %v1905 = vpop.f32.mrb[0].mxu0
  %1906 = vmatprep.mubr.f32.mxu0 0.0
  %1907 = vmatmul.mubr.f32.gmra.mrb[0].mxu0 %v1826
  %v1908 = vpop.f32.mrb[0].mxu0
  %v1909 = vadd.f32 0.0, %v1908
  %v1910 = vpop.f32.mrb[0].mxu0
  %1911 = vdwg.mxu0
  %v1913 = vsel %vm481, %v1894, 0
  %v1916 = vsel %vm481, %v1899, 0
  %v1919 = vsel %vm481, %v1904, 0
  %v1922 = vsel %vm481, %v1909, 0
  %1924 = vmatprep.subr.mxu0 0.0
  %1925 = vmatpush1.msra.mxu0 %v294
  %1926 = vmatprep.subr.mxu0 0.0
  %1927 = vmatpush1.msra.mxu0 0.0
  %1928 = vmatprep.subr.mxu0 0.0
  %1929 = vmatpush1.msra.mxu0 0.0
  %1930 = vmatprep.subr.mxu0 0.0
  %1931 = vmatpush1.msra.mxu0 0.0
  %1932 = vmatprep.subr.mxu0 0.0
  %1933 = vmatpush1.msra.mxu0 0.0
  %1934 = vmatprep.subr.mxu0 0.0
  %1935 = vmatpush1.msra.mxu0 0.0
  %1936 = vmatprep.subr.mxu0 0.0
  %1937 = vmatpush1.msra.mxu0 0.0
  %1938 = vmatprep.subr.mxu0 0.0
  %1939 = vmatpush1.msra.mxu0 0.0
  %1940 = vmatprep.subr.mxu0 0.0
  %1941 = vmatpush1.msra.mxu0 0.0
  %1942 = vmatprep.subr.mxu0 0.0
  %1943 = vmatpush1.msra.mxu0 0.0
  %1944 = vmatprep.subr.mxu0 0.0
  %1945 = vmatpush1.msra.mxu0 0.0
  %1946 = vmatprep.subr.mxu0 0.0
  %1947 = vmatpush1.msra.mxu0 0.0
  %1948 = vmatprep.subr.mxu0 0.0
  %1949 = vmatpush1.msra.mxu0 0.0
  %1950 = vmatprep.subr.mxu0 0.0
  %1951 = vmatpush1.msra.mxu0 0.0
  %1952 = vmatprep.subr.mxu0 0.0
  %1953 = vmatpush1.msra.mxu0 0.0
  %1954 = vmatprep.subr.mxu0 0.0
  %1955 = vmatpush1.msra.mxu0 0.0
  %1956 = vmatprep.subr.mxu0 0.0
  %1957 = vmatpush1.msra.mxu0 0.0
  %1958 = vmatprep.subr.mxu0 0.0
  %1959 = vmatpush1.msra.mxu0 0.0
  %1960 = vmatprep.subr.mxu0 0.0
  %1961 = vmatpush1.msra.mxu0 0.0
  %1962 = vmatprep.subr.mxu0 0.0
  %1963 = vmatpush1.msra.mxu0 0.0
  %1964 = vmatprep.subr.mxu0 0.0
  %1965 = vmatpush1.msra.mxu0 0.0
  %1966 = vmatprep.subr.mxu0 0.0
  %1967 = vmatpush1.msra.mxu0 0.0
  %1968 = vmatprep.subr.mxu0 0.0
  %1969 = vmatpush1.msra.mxu0 0.0
  %1970 = vmatprep.subr.mxu0 0.0
  %1971 = vmatpush1.msra.mxu0 0.0
  %1972 = vmatprep.subr.mxu0 0.0
  %1973 = vmatpush1.msra.mxu0 0.0
  %1974 = vmatprep.subr.mxu0 0.0
  %1975 = vmatpush1.msra.mxu0 0.0
  %1976 = vmatprep.subr.mxu0 0.0
  %1977 = vmatpush1.msra.mxu0 0.0
  %1978 = vmatprep.subr.mxu0 0.0
  %1979 = vmatpush1.msra.mxu0 0.0
  %1980 = vmatprep.subr.mxu0 0.0
  %1981 = vmatpush1.msra.mxu0 0.0
  %1982 = vmatprep.subr.mxu0 0.0
  %1983 = vmatpush1.msra.mxu0 0.0
  %1984 = vmatprep.subr.mxu0 0.0
  %1985 = vmatpush1.msra.mxu0 0.0
  %1986 = vmatprep.subr.mxu0 0.0
  %1987 = vmatpush1.msra.mxu0 0.0
  %1988 = vmatprep.mubr.f32.mxu0 0.0
  %1989 = vmatmul.mubr.f32.gmra.mrb[0].mxu0 %v1913
  %v1990 = vpop.f32.mrb[0].mxu0
  %v1991 = vadd.f32 0.0, %v1990
  %v1992 = vpop.f32.mrb[0].mxu0
  %1993 = vmatprep.mubr.f32.mxu0 0.0
  %1994 = vmatmul.mubr.f32.gmra.mrb[0].mxu0 %v1916
  %v1995 = vpop.f32.mrb[0].mxu0
  %v1996 = vadd.f32 0.0, %v1995
  %v1997 = vpop.f32.mrb[0].mxu0
  %1998 = vmatprep.mubr.f32.mxu0 0.0
  %1999 = vmatmul.mubr.f32.gmra.mrb[0].mxu0 %v1919
  %v2000 = vpop.f32.mrb[0].mxu0
  %v2001 = vadd.f32 0.0, %v2000
  %v2002 = vpop.f32.mrb[0].mxu0
  %2003 = vmatprep.mubr.f32.mxu0 0.0
  %2004 = vmatmul.mubr.f32.gmra.mrb[0].mxu0 %v1922
  %v2005 = vpop.f32.mrb[0].mxu0
  %v2006 = vadd.f32 0.0, %v2005
  %v2007 = vpop.f32.mrb[0].mxu0
  %2008 = vdwg.mxu0
  %v2009 = vadd.f32 %v1818, %v1991
  %v2010 = vadd.f32 %v1819, %v1996
  %v2011 = vadd.f32 %v1820, %v2001
  %v2012 = vadd.f32 %v1821, %v2006
  %s2013 = scalar_lea.vmem %s2, 288
  %v2014 = vld [vmem:[%s2013] sm:$0xff]
  %v2015 = vld [vmem:[%s2013 + $0x8] sm:$0xff]
  %v2016 = vld [vmem:[%s2013 + $0x10] sm:$0xff]
  %v2017 = vld [vmem:[%s2013 + $0x18] sm:$0xff]
  %2018 = vmatprep.subr.mxu0 0.0
  %2019 = vmatpush1.msra.mxu0 %v270
  %2020 = vmatprep.subr.mxu0 0.0
  %2021 = vmatpush1.msra.mxu0 %v271
  %2022 = vmatprep.subr.mxu0 0.0
  %2023 = vmatpush1.msra.mxu0 %v272
  %2024 = vmatprep.subr.mxu0 0.0
  %2025 = vmatpush1.msra.mxu0 %v273
  %2026 = vmatprep.subr.mxu0 0.0
  %2027 = vmatpush1.msra.mxu0 %v274
  %2028 = vmatprep.subr.mxu0 0.0
  %2029 = vmatpush1.msra.mxu0 %v275
  %2030 = vmatprep.subr.mxu0 0.0
  %2031 = vmatpush1.msra.mxu0 %v276
  %2032 = vmatprep.subr.mxu0 0.0
  %2033 = vmatpush1.msra.mxu0 %v277
  %2034 = vmatprep.subr.mxu0 0.0
  %2035 = vmatpush1.msra.mxu0 %v278
  %2036 = vmatprep.subr.mxu0 0.0
  %2037 = vmatpush1.msra.mxu0 %v279
  %2038 = vmatprep.subr.mxu0 0.0
  %2039 = vmatpush1.msra.mxu0 %v280
  %2040 = vmatprep.subr.mxu0 0.0
  %2041 = vmatpush1.msra.mxu0 %v281
  %2042 = vmatprep.subr.mxu0 0.0
  %2043 = vmatpush1.msra.mxu0 %v282
  %2044 = vmatprep.subr.mxu0 0.0
  %2045 = vmatpush1.msra.mxu0 %v283
  %2046 = vmatprep.subr.mxu0 0.0
  %2047 = vmatpush1.msra.mxu0 %v284
  %2048 = vmatprep.subr.mxu0 0.0
  %2049 = vmatpush1.msra.mxu0 %v285
  %2050 = vmatprep.subr.mxu0 0.0
  %2051 = vmatpush1.msra.mxu0 0.0
  %2052 = vmatprep.subr.mxu0 0.0
  %2053 = vmatpush1.msra.mxu0 0.0
  %2054 = vmatprep.subr.mxu0 0.0
  %2055 = vmatpush1.msra.mxu0 0.0
  %2056 = vmatprep.subr.mxu0 0.0
  %2057 = vmatpush1.msra.mxu0 0.0
  %2058 = vmatprep.subr.mxu0 0.0
  %2059 = vmatpush1.msra.mxu0 0.0
  %2060 = vmatprep.subr.mxu0 0.0
  %2061 = vmatpush1.msra.mxu0 0.0
  %2062 = vmatprep.subr.mxu0 0.0
  %2063 = vmatpush1.msra.mxu0 0.0
  %2064 = vmatprep.subr.mxu0 0.0
  %2065 = vmatpush1.msra.mxu0 0.0
  %2066 = vmatprep.subr.mxu0 0.0
  %2067 = vmatpush1.msra.mxu0 0.0
  %2068 = vmatprep.subr.mxu0 0.0
  %2069 = vmatpush1.msra.mxu0 0.0
  %2070 = vmatprep.subr.mxu0 0.0
  %2071 = vmatpush1.msra.mxu0 0.0
  %2072 = vmatprep.subr.mxu0 0.0
  %2073 = vmatpush1.msra.mxu0 0.0
  %2074 = vmatprep.subr.mxu0 0.0
  %2075 = vmatpush1.msra.mxu0 0.0
  %2076 = vmatprep.subr.mxu0 0.0
  %2077 = vmatpush1.msra.mxu0 0.0
  %2078 = vmatprep.subr.mxu0 0.0
  %2079 = vmatpush1.msra.mxu0 0.0
  %2080 = vmatprep.subr.mxu0 0.0
  %2081 = vmatpush1.msra.mxu0 0.0
  %2082 = vmatprep.mubr.f32.mxu0 0.0
  %2083 = vmatmul.mubr.f32.gmra.mrb[0].mxu0 %v2014
  %v2084 = vpop.f32.mrb[0].mxu0
  %v2085 = vadd.f32 0.0, %v2084
  %v2086 = vpop.f32.mrb[0].mxu0
  %2087 = vmatprep.mubr.f32.mxu0 0.0
  %2088 = vmatmul.mubr.f32.gmra.mrb[0].mxu0 %v2015
  %v2089 = vpop.f32.mrb[0].mxu0
  %v2090 = vadd.f32 0.0, %v2089
  %v2091 = vpop.f32.mrb[0].mxu0
  %2092 = vmatprep.mubr.f32.mxu0 0.0
  %2093 = vmatmul.mubr.f32.gmra.mrb[0].mxu0 %v2016
  %v2094 = vpop.f32.mrb[0].mxu0
  %v2095 = vadd.f32 0.0, %v2094
  %v2096 = vpop.f32.mrb[0].mxu0
  %2097 = vmatprep.mubr.f32.mxu0 0.0
  %2098 = vmatmul.mubr.f32.gmra.mrb[0].mxu0 %v2017
  %v2099 = vpop.f32.mrb[0].mxu0
  %v2100 = vadd.f32 0.0, %v2099
  %v2101 = vpop.f32.mrb[0].mxu0
  %2102 = vdwg.mxu0
  %v2104 = vsel %vm481, %v2085, 0
  %v2107 = vsel %vm481, %v2090, 0
  %v2110 = vsel %vm481, %v2095, 0
  %v2113 = vsel %vm481, %v2100, 0
  %2115 = vmatprep.subr.mxu0 0.0
  %2116 = vmatpush1.msra.mxu0 %v295
  %2117 = vmatprep.subr.mxu0 0.0
  %2118 = vmatpush1.msra.mxu0 0.0
  %2119 = vmatprep.subr.mxu0 0.0
  %2120 = vmatpush1.msra.mxu0 0.0
  %2121 = vmatprep.subr.mxu0 0.0
  %2122 = vmatpush1.msra.mxu0 0.0
  %2123 = vmatprep.subr.mxu0 0.0
  %2124 = vmatpush1.msra.mxu0 0.0
  %2125 = vmatprep.subr.mxu0 0.0
  %2126 = vmatpush1.msra.mxu0 0.0
  %2127 = vmatprep.subr.mxu0 0.0
  %2128 = vmatpush1.msra.mxu0 0.0
  %2129 = vmatprep.subr.mxu0 0.0
  %2130 = vmatpush1.msra.mxu0 0.0
  %2131 = vmatprep.subr.mxu0 0.0
  %2132 = vmatpush1.msra.mxu0 0.0
  %2133 = vmatprep.subr.mxu0 0.0
  %2134 = vmatpush1.msra.mxu0 0.0
  %2135 = vmatprep.subr.mxu0 0.0
  %2136 = vmatpush1.msra.mxu0 0.0
  %2137 = vmatprep.subr.mxu0 0.0
  %2138 = vmatpush1.msra.mxu0 0.0
  %2139 = vmatprep.subr.mxu0 0.0
  %2140 = vmatpush1.msra.mxu0 0.0
  %2141 = vmatprep.subr.mxu0 0.0
  %2142 = vmatpush1.msra.mxu0 0.0
  %2143 = vmatprep.subr.mxu0 0.0
  %2144 = vmatpush1.msra.mxu0 0.0
  %2145 = vmatprep.subr.mxu0 0.0
  %2146 = vmatpush1.msra.mxu0 0.0
  %2147 = vmatprep.subr.mxu0 0.0
  %2148 = vmatpush1.msra.mxu0 0.0
  %2149 = vmatprep.subr.mxu0 0.0
  %2150 = vmatpush1.msra.mxu0 0.0
  %2151 = vmatprep.subr.mxu0 0.0
  %2152 = vmatpush1.msra.mxu0 0.0
  %2153 = vmatprep.subr.mxu0 0.0
  %2154 = vmatpush1.msra.mxu0 0.0
  %2155 = vmatprep.subr.mxu0 0.0
  %2156 = vmatpush1.msra.mxu0 0.0
  %2157 = vmatprep.subr.mxu0 0.0
  %2158 = vmatpush1.msra.mxu0 0.0
  %2159 = vmatprep.subr.mxu0 0.0
  %2160 = vmatpush1.msra.mxu0 0.0
  %2161 = vmatprep.subr.mxu0 0.0
  %2162 = vmatpush1.msra.mxu0 0.0
  %2163 = vmatprep.subr.mxu0 0.0
  %2164 = vmatpush1.msra.mxu0 0.0
  %2165 = vmatprep.subr.mxu0 0.0
  %2166 = vmatpush1.msra.mxu0 0.0
  %2167 = vmatprep.subr.mxu0 0.0
  %2168 = vmatpush1.msra.mxu0 0.0
  %2169 = vmatprep.subr.mxu0 0.0
  %2170 = vmatpush1.msra.mxu0 0.0
  %2171 = vmatprep.subr.mxu0 0.0
  %2172 = vmatpush1.msra.mxu0 0.0
  %2173 = vmatprep.subr.mxu0 0.0
  %2174 = vmatpush1.msra.mxu0 0.0
  %2175 = vmatprep.subr.mxu0 0.0
  %2176 = vmatpush1.msra.mxu0 0.0
  %2177 = vmatprep.subr.mxu0 0.0
  %2178 = vmatpush1.msra.mxu0 0.0
  %2179 = vmatprep.mubr.f32.mxu0 0.0
  %2180 = vmatmul.mubr.f32.gmra.mrb[0].mxu0 %v2104
  %v2181 = vpop.f32.mrb[0].mxu0
  %v2182 = vadd.f32 0.0, %v2181
  %v2183 = vpop.f32.mrb[0].mxu0
  %2184 = vmatprep.mubr.f32.mxu0 0.0
  %2185 = vmatmul.mubr.f32.gmra.mrb[0].mxu0 %v2107
  %v2186 = vpop.f32.mrb[0].mxu0
  %v2187 = vadd.f32 0.0, %v2186
  %v2188 = vpop.f32.mrb[0].mxu0
  %2189 = vmatprep.mubr.f32.mxu0 0.0
  %2190 = vmatmul.mubr.f32.gmra.mrb[0].mxu0 %v2110
  %v2191 = vpop.f32.mrb[0].mxu0
  %v2192 = vadd.f32 0.0, %v2191
  %v2193 = vpop.f32.mrb[0].mxu0
  %2194 = vmatprep.mubr.f32.mxu0 0.0
  %2195 = vmatmul.mubr.f32.gmra.mrb[0].mxu0 %v2113
  %v2196 = vpop.f32.mrb[0].mxu0
  %v2197 = vadd.f32 0.0, %v2196
  %v2198 = vpop.f32.mrb[0].mxu0
  %2199 = vdwg.mxu0
  %v2200 = vadd.f32 %v2009, %v2182
  %v2201 = vadd.f32 %v2010, %v2187
  %v2202 = vadd.f32 %v2011, %v2192
  %v2203 = vadd.f32 %v2012, %v2197
  %s2204 = scalar_lea.vmem %s2, 320
  %v2205 = vld [vmem:[%s2204] sm:$0xff]
  %v2206 = vld [vmem:[%s2204 + $0x8] sm:$0xff]
  %v2207 = vld [vmem:[%s2204 + $0x10] sm:$0xff]
  %v2208 = vld [vmem:[%s2204 + $0x18] sm:$0xff]
  %2209 = vmatprep.subr.mxu0 0.0
  %2210 = vmatpush1.msra.mxu0 %v270
  %2211 = vmatprep.subr.mxu0 0.0
  %2212 = vmatpush1.msra.mxu0 %v271
  %2213 = vmatprep.subr.mxu0 0.0
  %2214 = vmatpush1.msra.mxu0 %v272
  %2215 = vmatprep.subr.mxu0 0.0
  %2216 = vmatpush1.msra.mxu0 %v273
  %2217 = vmatprep.subr.mxu0 0.0
  %2218 = vmatpush1.msra.mxu0 %v274
  %2219 = vmatprep.subr.mxu0 0.0
  %2220 = vmatpush1.msra.mxu0 %v275
  %2221 = vmatprep.subr.mxu0 0.0
  %2222 = vmatpush1.msra.mxu0 %v276
  %2223 = vmatprep.subr.mxu0 0.0
  %2224 = vmatpush1.msra.mxu0 %v277
  %2225 = vmatprep.subr.mxu0 0.0
  %2226 = vmatpush1.msra.mxu0 %v278
  %2227 = vmatprep.subr.mxu0 0.0
  %2228 = vmatpush1.msra.mxu0 %v279
  %2229 = vmatprep.subr.mxu0 0.0
  %2230 = vmatpush1.msra.mxu0 %v280
  %2231 = vmatprep.subr.mxu0 0.0
  %2232 = vmatpush1.msra.mxu0 %v281
  %2233 = vmatprep.subr.mxu0 0.0
  %2234 = vmatpush1.msra.mxu0 %v282
  %2235 = vmatprep.subr.mxu0 0.0
  %2236 = vmatpush1.msra.mxu0 %v283
  %2237 = vmatprep.subr.mxu0 0.0
  %2238 = vmatpush1.msra.mxu0 %v284
  %2239 = vmatprep.subr.mxu0 0.0
  %2240 = vmatpush1.msra.mxu0 %v285
  %2241 = vmatprep.subr.mxu0 0.0
  %2242 = vmatpush1.msra.mxu0 0.0
  %2243 = vmatprep.subr.mxu0 0.0
  %2244 = vmatpush1.msra.mxu0 0.0
  %2245 = vmatprep.subr.mxu0 0.0
  %2246 = vmatpush1.msra.mxu0 0.0
  %2247 = vmatprep.subr.mxu0 0.0
  %2248 = vmatpush1.msra.mxu0 0.0
  %2249 = vmatprep.subr.mxu0 0.0
  %2250 = vmatpush1.msra.mxu0 0.0
  %2251 = vmatprep.subr.mxu0 0.0
  %2252 = vmatpush1.msra.mxu0 0.0
  %2253 = vmatprep.subr.mxu0 0.0
  %2254 = vmatpush1.msra.mxu0 0.0
  %2255 = vmatprep.subr.mxu0 0.0
  %2256 = vmatpush1.msra.mxu0 0.0
  %2257 = vmatprep.subr.mxu0 0.0
  %2258 = vmatpush1.msra.mxu0 0.0
  %2259 = vmatprep.subr.mxu0 0.0
  %2260 = vmatpush1.msra.mxu0 0.0
  %2261 = vmatprep.subr.mxu0 0.0
  %2262 = vmatpush1.msra.mxu0 0.0
  %2263 = vmatprep.subr.mxu0 0.0
  %2264 = vmatpush1.msra.mxu0 0.0
  %2265 = vmatprep.subr.mxu0 0.0
  %2266 = vmatpush1.msra.mxu0 0.0
  %2267 = vmatprep.subr.mxu0 0.0
  %2268 = vmatpush1.msra.mxu0 0.0
  %2269 = vmatprep.subr.mxu0 0.0
  %2270 = vmatpush1.msra.mxu0 0.0
  %2271 = vmatprep.subr.mxu0 0.0
  %2272 = vmatpush1.msra.mxu0 0.0
  %2273 = vmatprep.mubr.f32.mxu0 0.0
  %2274 = vmatmul.mubr.f32.gmra.mrb[0].mxu0 %v2205
  %v2275 = vpop.f32.mrb[0].mxu0
  %v2276 = vadd.f32 0.0, %v2275
  %v2277 = vpop.f32.mrb[0].mxu0
  %2278 = vmatprep.mubr.f32.mxu0 0.0
  %2279 = vmatmul.mubr.f32.gmra.mrb[0].mxu0 %v2206
  %v2280 = vpop.f32.mrb[0].mxu0
  %v2281 = vadd.f32 0.0, %v2280
  %v2282 = vpop.f32.mrb[0].mxu0
  %2283 = vmatprep.mubr.f32.mxu0 0.0
  %2284 = vmatmul.mubr.f32.gmra.mrb[0].mxu0 %v2207
  %v2285 = vpop.f32.mrb[0].mxu0
  %v2286 = vadd.f32 0.0, %v2285
  %v2287 = vpop.f32.mrb[0].mxu0
  %2288 = vmatprep.mubr.f32.mxu0 0.0
  %2289 = vmatmul.mubr.f32.gmra.mrb[0].mxu0 %v2208
  %v2290 = vpop.f32.mrb[0].mxu0
  %v2291 = vadd.f32 0.0, %v2290
  %v2292 = vpop.f32.mrb[0].mxu0
  %2293 = vdwg.mxu0
  %v2295 = vsel %vm481, %v2276, 0
  %v2298 = vsel %vm481, %v2281, 0
  %v2301 = vsel %vm481, %v2286, 0
  %v2304 = vsel %vm481, %v2291, 0
  %2306 = vmatprep.subr.mxu0 0.0
  %2307 = vmatpush1.msra.mxu0 %v296
  %2308 = vmatprep.subr.mxu0 0.0
  %2309 = vmatpush1.msra.mxu0 0.0
  %2310 = vmatprep.subr.mxu0 0.0
  %2311 = vmatpush1.msra.mxu0 0.0
  %2312 = vmatprep.subr.mxu0 0.0
  %2313 = vmatpush1.msra.mxu0 0.0
  %2314 = vmatprep.subr.mxu0 0.0
  %2315 = vmatpush1.msra.mxu0 0.0
  %2316 = vmatprep.subr.mxu0 0.0
  %2317 = vmatpush1.msra.mxu0 0.0
  %2318 = vmatprep.subr.mxu0 0.0
  %2319 = vmatpush1.msra.mxu0 0.0
  %2320 = vmatprep.subr.mxu0 0.0
  %2321 = vmatpush1.msra.mxu0 0.0
  %2322 = vmatprep.subr.mxu0 0.0
  %2323 = vmatpush1.msra.mxu0 0.0
  %2324 = vmatprep.subr.mxu0 0.0
  %2325 = vmatpush1.msra.mxu0 0.0
  %2326 = vmatprep.subr.mxu0 0.0
  %2327 = vmatpush1.msra.mxu0 0.0
  %2328 = vmatprep.subr.mxu0 0.0
  %2329 = vmatpush1.msra.mxu0 0.0
  %2330 = vmatprep.subr.mxu0 0.0
  %2331 = vmatpush1.msra.mxu0 0.0
  %2332 = vmatprep.subr.mxu0 0.0
  %2333 = vmatpush1.msra.mxu0 0.0
  %2334 = vmatprep.subr.mxu0 0.0
  %2335 = vmatpush1.msra.mxu0 0.0
  %2336 = vmatprep.subr.mxu0 0.0
  %2337 = vmatpush1.msra.mxu0 0.0
  %2338 = vmatprep.subr.mxu0 0.0
  %2339 = vmatpush1.msra.mxu0 0.0
  %2340 = vmatprep.subr.mxu0 0.0
  %2341 = vmatpush1.msra.mxu0 0.0
  %2342 = vmatprep.subr.mxu0 0.0
  %2343 = vmatpush1.msra.mxu0 0.0
  %2344 = vmatprep.subr.mxu0 0.0
  %2345 = vmatpush1.msra.mxu0 0.0
  %2346 = vmatprep.subr.mxu0 0.0
  %2347 = vmatpush1.msra.mxu0 0.0
  %2348 = vmatprep.subr.mxu0 0.0
  %2349 = vmatpush1.msra.mxu0 0.0
  %2350 = vmatprep.subr.mxu0 0.0
  %2351 = vmatpush1.msra.mxu0 0.0
  %2352 = vmatprep.subr.mxu0 0.0
  %2353 = vmatpush1.msra.mxu0 0.0
  %2354 = vmatprep.subr.mxu0 0.0
  %2355 = vmatpush1.msra.mxu0 0.0
  %2356 = vmatprep.subr.mxu0 0.0
  %2357 = vmatpush1.msra.mxu0 0.0
  %2358 = vmatprep.subr.mxu0 0.0
  %2359 = vmatpush1.msra.mxu0 0.0
  %2360 = vmatprep.subr.mxu0 0.0
  %2361 = vmatpush1.msra.mxu0 0.0
  %2362 = vmatprep.subr.mxu0 0.0
  %2363 = vmatpush1.msra.mxu0 0.0
  %2364 = vmatprep.subr.mxu0 0.0
  %2365 = vmatpush1.msra.mxu0 0.0
  %2366 = vmatprep.subr.mxu0 0.0
  %2367 = vmatpush1.msra.mxu0 0.0
  %2368 = vmatprep.subr.mxu0 0.0
  %2369 = vmatpush1.msra.mxu0 0.0
  %2370 = vmatprep.mubr.f32.mxu0 0.0
  %2371 = vmatmul.mubr.f32.gmra.mrb[0].mxu0 %v2295
  %v2372 = vpop.f32.mrb[0].mxu0
  %v2373 = vadd.f32 0.0, %v2372
  %v2374 = vpop.f32.mrb[0].mxu0
  %2375 = vmatprep.mubr.f32.mxu0 0.0
  %2376 = vmatmul.mubr.f32.gmra.mrb[0].mxu0 %v2298
  %v2377 = vpop.f32.mrb[0].mxu0
  %v2378 = vadd.f32 0.0, %v2377
  %v2379 = vpop.f32.mrb[0].mxu0
  %2380 = vmatprep.mubr.f32.mxu0 0.0
  %2381 = vmatmul.mubr.f32.gmra.mrb[0].mxu0 %v2301
  %v2382 = vpop.f32.mrb[0].mxu0
  %v2383 = vadd.f32 0.0, %v2382
  %v2384 = vpop.f32.mrb[0].mxu0
  %2385 = vmatprep.mubr.f32.mxu0 0.0
  %2386 = vmatmul.mubr.f32.gmra.mrb[0].mxu0 %v2304
  %v2387 = vpop.f32.mrb[0].mxu0
  %v2388 = vadd.f32 0.0, %v2387
  %v2389 = vpop.f32.mrb[0].mxu0
  %2390 = vdwg.mxu0
  %v2391 = vadd.f32 %v2200, %v2373
  %v2392 = vadd.f32 %v2201, %v2378
  %v2393 = vadd.f32 %v2202, %v2383
  %v2394 = vadd.f32 %v2203, %v2388
  %s2395 = scalar_lea.vmem %s2, 352
  %v2396 = vld [vmem:[%s2395] sm:$0xff]
  %v2397 = vld [vmem:[%s2395 + $0x8] sm:$0xff]
  %v2398 = vld [vmem:[%s2395 + $0x10] sm:$0xff]
  %v2399 = vld [vmem:[%s2395 + $0x18] sm:$0xff]
  %2400 = vmatprep.subr.mxu0 0.0
  %2401 = vmatpush1.msra.mxu0 %v270
  %2402 = vmatprep.subr.mxu0 0.0
  %2403 = vmatpush1.msra.mxu0 %v271
  %2404 = vmatprep.subr.mxu0 0.0
  %2405 = vmatpush1.msra.mxu0 %v272
  %2406 = vmatprep.subr.mxu0 0.0
  %2407 = vmatpush1.msra.mxu0 %v273
  %2408 = vmatprep.subr.mxu0 0.0
  %2409 = vmatpush1.msra.mxu0 %v274
  %2410 = vmatprep.subr.mxu0 0.0
  %2411 = vmatpush1.msra.mxu0 %v275
  %2412 = vmatprep.subr.mxu0 0.0
  %2413 = vmatpush1.msra.mxu0 %v276
  %2414 = vmatprep.subr.mxu0 0.0
  %2415 = vmatpush1.msra.mxu0 %v277
  %2416 = vmatprep.subr.mxu0 0.0
  %2417 = vmatpush1.msra.mxu0 %v278
  %2418 = vmatprep.subr.mxu0 0.0
  %2419 = vmatpush1.msra.mxu0 %v279
  %2420 = vmatprep.subr.mxu0 0.0
  %2421 = vmatpush1.msra.mxu0 %v280
  %2422 = vmatprep.subr.mxu0 0.0
  %2423 = vmatpush1.msra.mxu0 %v281
  %2424 = vmatprep.subr.mxu0 0.0
  %2425 = vmatpush1.msra.mxu0 %v282
  %2426 = vmatprep.subr.mxu0 0.0
  %2427 = vmatpush1.msra.mxu0 %v283
  %2428 = vmatprep.subr.mxu0 0.0
  %2429 = vmatpush1.msra.mxu0 %v284
  %2430 = vmatprep.subr.mxu0 0.0
  %2431 = vmatpush1.msra.mxu0 %v285
  %2432 = vmatprep.subr.mxu0 0.0
  %2433 = vmatpush1.msra.mxu0 0.0
  %2434 = vmatprep.subr.mxu0 0.0
  %2435 = vmatpush1.msra.mxu0 0.0
  %2436 = vmatprep.subr.mxu0 0.0
  %2437 = vmatpush1.msra.mxu0 0.0
  %2438 = vmatprep.subr.mxu0 0.0
  %2439 = vmatpush1.msra.mxu0 0.0
  %2440 = vmatprep.subr.mxu0 0.0
  %2441 = vmatpush1.msra.mxu0 0.0
  %2442 = vmatprep.subr.mxu0 0.0
  %2443 = vmatpush1.msra.mxu0 0.0
  %2444 = vmatprep.subr.mxu0 0.0
  %2445 = vmatpush1.msra.mxu0 0.0
  %2446 = vmatprep.subr.mxu0 0.0
  %2447 = vmatpush1.msra.mxu0 0.0
  %2448 = vmatprep.subr.mxu0 0.0
  %2449 = vmatpush1.msra.mxu0 0.0
  %2450 = vmatprep.subr.mxu0 0.0
  %2451 = vmatpush1.msra.mxu0 0.0
  %2452 = vmatprep.subr.mxu0 0.0
  %2453 = vmatpush1.msra.mxu0 0.0
  %2454 = vmatprep.subr.mxu0 0.0
  %2455 = vmatpush1.msra.mxu0 0.0
  %2456 = vmatprep.subr.mxu0 0.0
  %2457 = vmatpush1.msra.mxu0 0.0
  %2458 = vmatprep.subr.mxu0 0.0
  %2459 = vmatpush1.msra.mxu0 0.0
  %2460 = vmatprep.subr.mxu0 0.0
  %2461 = vmatpush1.msra.mxu0 0.0
  %2462 = vmatprep.subr.mxu0 0.0
  %2463 = vmatpush1.msra.mxu0 0.0
  %2464 = vmatprep.mubr.f32.mxu0 0.0
  %2465 = vmatmul.mubr.f32.gmra.mrb[0].mxu0 %v2396
  %v2466 = vpop.f32.mrb[0].mxu0
  %v2467 = vadd.f32 0.0, %v2466
  %v2468 = vpop.f32.mrb[0].mxu0
  %2469 = vmatprep.mubr.f32.mxu0 0.0
  %2470 = vmatmul.mubr.f32.gmra.mrb[0].mxu0 %v2397
  %v2471 = vpop.f32.mrb[0].mxu0
  %v2472 = vadd.f32 0.0, %v2471
  %v2473 = vpop.f32.mrb[0].mxu0
  %2474 = vmatprep.mubr.f32.mxu0 0.0
  %2475 = vmatmul.mubr.f32.gmra.mrb[0].mxu0 %v2398
  %v2476 = vpop.f32.mrb[0].mxu0
  %v2477 = vadd.f32 0.0, %v2476
  %v2478 = vpop.f32.mrb[0].mxu0
  %2479 = vmatprep.mubr.f32.mxu0 0.0
  %2480 = vmatmul.mubr.f32.gmra.mrb[0].mxu0 %v2399
  %v2481 = vpop.f32.mrb[0].mxu0
  %v2482 = vadd.f32 0.0, %v2481
  %v2483 = vpop.f32.mrb[0].mxu0
  %2484 = vdwg.mxu0
  %v2486 = vsel %vm481, %v2467, 0
  %v2489 = vsel %vm481, %v2472, 0
  %v2492 = vsel %vm481, %v2477, 0
  %v2495 = vsel %vm481, %v2482, 0
  %2497 = vmatprep.subr.mxu0 0.0
  %2498 = vmatpush1.msra.mxu0 %v297
  %2499 = vmatprep.subr.mxu0 0.0
  %2500 = vmatpush1.msra.mxu0 0.0
  %2501 = vmatprep.subr.mxu0 0.0
  %2502 = vmatpush1.msra.mxu0 0.0
  %2503 = vmatprep.subr.mxu0 0.0
  %2504 = vmatpush1.msra.mxu0 0.0
  %2505 = vmatprep.subr.mxu0 0.0
  %2506 = vmatpush1.msra.mxu0 0.0
  %2507 = vmatprep.subr.mxu0 0.0
  %2508 = vmatpush1.msra.mxu0 0.0
  %2509 = vmatprep.subr.mxu0 0.0
  %2510 = vmatpush1.msra.mxu0 0.0
  %2511 = vmatprep.subr.mxu0 0.0
  %2512 = vmatpush1.msra.mxu0 0.0
  %2513 = vmatprep.subr.mxu0 0.0
  %2514 = vmatpush1.msra.mxu0 0.0
  %2515 = vmatprep.subr.mxu0 0.0
  %2516 = vmatpush1.msra.mxu0 0.0
  %2517 = vmatprep.subr.mxu0 0.0
  %2518 = vmatpush1.msra.mxu0 0.0
  %2519 = vmatprep.subr.mxu0 0.0
  %2520 = vmatpush1.msra.mxu0 0.0
  %2521 = vmatprep.subr.mxu0 0.0
  %2522 = vmatpush1.msra.mxu0 0.0
  %2523 = vmatprep.subr.mxu0 0.0
  %2524 = vmatpush1.msra.mxu0 0.0
  %2525 = vmatprep.subr.mxu0 0.0
  %2526 = vmatpush1.msra.mxu0 0.0
  %2527 = vmatprep.subr.mxu0 0.0
  %2528 = vmatpush1.msra.mxu0 0.0
  %2529 = vmatprep.subr.mxu0 0.0
  %2530 = vmatpush1.msra.mxu0 0.0
  %2531 = vmatprep.subr.mxu0 0.0
  %2532 = vmatpush1.msra.mxu0 0.0
  %2533 = vmatprep.subr.mxu0 0.0
  %2534 = vmatpush1.msra.mxu0 0.0
  %2535 = vmatprep.subr.mxu0 0.0
  %2536 = vmatpush1.msra.mxu0 0.0
  %2537 = vmatprep.subr.mxu0 0.0
  %2538 = vmatpush1.msra.mxu0 0.0
  %2539 = vmatprep.subr.mxu0 0.0
  %2540 = vmatpush1.msra.mxu0 0.0
  %2541 = vmatprep.subr.mxu0 0.0
  %2542 = vmatpush1.msra.mxu0 0.0
  %2543 = vmatprep.subr.mxu0 0.0
  %2544 = vmatpush1.msra.mxu0 0.0
  %2545 = vmatprep.subr.mxu0 0.0
  %2546 = vmatpush1.msra.mxu0 0.0
  %2547 = vmatprep.subr.mxu0 0.0
  %2548 = vmatpush1.msra.mxu0 0.0
  %2549 = vmatprep.subr.mxu0 0.0
  %2550 = vmatpush1.msra.mxu0 0.0
  %2551 = vmatprep.subr.mxu0 0.0
  %2552 = vmatpush1.msra.mxu0 0.0
  %2553 = vmatprep.subr.mxu0 0.0
  %2554 = vmatpush1.msra.mxu0 0.0
  %2555 = vmatprep.subr.mxu0 0.0
  %2556 = vmatpush1.msra.mxu0 0.0
  %2557 = vmatprep.subr.mxu0 0.0
  %2558 = vmatpush1.msra.mxu0 0.0
  %2559 = vmatprep.subr.mxu0 0.0
  %2560 = vmatpush1.msra.mxu0 0.0
  %2561 = vmatprep.mubr.f32.mxu0 0.0
  %2562 = vmatmul.mubr.f32.gmra.mrb[0].mxu0 %v2486
  %v2563 = vpop.f32.mrb[0].mxu0
  %v2564 = vadd.f32 0.0, %v2563
  %v2565 = vpop.f32.mrb[0].mxu0
  %2566 = vmatprep.mubr.f32.mxu0 0.0
  %2567 = vmatmul.mubr.f32.gmra.mrb[0].mxu0 %v2489
  %v2568 = vpop.f32.mrb[0].mxu0
  %v2569 = vadd.f32 0.0, %v2568
  %v2570 = vpop.f32.mrb[0].mxu0
  %2571 = vmatprep.mubr.f32.mxu0 0.0
  %2572 = vmatmul.mubr.f32.gmra.mrb[0].mxu0 %v2492
  %v2573 = vpop.f32.mrb[0].mxu0
  %v2574 = vadd.f32 0.0, %v2573
  %v2575 = vpop.f32.mrb[0].mxu0
  %2576 = vmatprep.mubr.f32.mxu0 0.0
  %2577 = vmatmul.mubr.f32.gmra.mrb[0].mxu0 %v2495
  %v2578 = vpop.f32.mrb[0].mxu0
  %v2579 = vadd.f32 0.0, %v2578
  %v2580 = vpop.f32.mrb[0].mxu0
  %2581 = vdwg.mxu0
  %v2582 = vadd.f32 %v2391, %v2564
  %v2583 = vadd.f32 %v2392, %v2569
  %v2584 = vadd.f32 %v2393, %v2574
  %v2585 = vadd.f32 %v2394, %v2579
  %s2586 = scalar_lea.vmem %s2, 384
  %v2587 = vld [vmem:[%s2586] sm:$0xff]
  %v2588 = vld [vmem:[%s2586 + $0x8] sm:$0xff]
  %v2589 = vld [vmem:[%s2586 + $0x10] sm:$0xff]
  %v2590 = vld [vmem:[%s2586 + $0x18] sm:$0xff]
  %2591 = vmatprep.subr.mxu0 0.0
  %2592 = vmatpush1.msra.mxu0 %v270
  %2593 = vmatprep.subr.mxu0 0.0
  %2594 = vmatpush1.msra.mxu0 %v271
  %2595 = vmatprep.subr.mxu0 0.0
  %2596 = vmatpush1.msra.mxu0 %v272
  %2597 = vmatprep.subr.mxu0 0.0
  %2598 = vmatpush1.msra.mxu0 %v273
  %2599 = vmatprep.subr.mxu0 0.0
  %2600 = vmatpush1.msra.mxu0 %v274
  %2601 = vmatprep.subr.mxu0 0.0
  %2602 = vmatpush1.msra.mxu0 %v275
  %2603 = vmatprep.subr.mxu0 0.0
  %2604 = vmatpush1.msra.mxu0 %v276
  %2605 = vmatprep.subr.mxu0 0.0
  %2606 = vmatpush1.msra.mxu0 %v277
  %2607 = vmatprep.subr.mxu0 0.0
  %2608 = vmatpush1.msra.mxu0 %v278
  %2609 = vmatprep.subr.mxu0 0.0
  %2610 = vmatpush1.msra.mxu0 %v279
  %2611 = vmatprep.subr.mxu0 0.0
  %2612 = vmatpush1.msra.mxu0 %v280
  %2613 = vmatprep.subr.mxu0 0.0
  %2614 = vmatpush1.msra.mxu0 %v281
  %2615 = vmatprep.subr.mxu0 0.0
  %2616 = vmatpush1.msra.mxu0 %v282
  %2617 = vmatprep.subr.mxu0 0.0
  %2618 = vmatpush1.msra.mxu0 %v283
  %2619 = vmatprep.subr.mxu0 0.0
  %2620 = vmatpush1.msra.mxu0 %v284
  %2621 = vmatprep.subr.mxu0 0.0
  %2622 = vmatpush1.msra.mxu0 %v285
  %2623 = vmatprep.subr.mxu0 0.0
  %2624 = vmatpush1.msra.mxu0 0.0
  %2625 = vmatprep.subr.mxu0 0.0
  %2626 = vmatpush1.msra.mxu0 0.0
  %2627 = vmatprep.subr.mxu0 0.0
  %2628 = vmatpush1.msra.mxu0 0.0
  %2629 = vmatprep.subr.mxu0 0.0
  %2630 = vmatpush1.msra.mxu0 0.0
  %2631 = vmatprep.subr.mxu0 0.0
  %2632 = vmatpush1.msra.mxu0 0.0
  %2633 = vmatprep.subr.mxu0 0.0
  %2634 = vmatpush1.msra.mxu0 0.0
  %2635 = vmatprep.subr.mxu0 0.0
  %2636 = vmatpush1.msra.mxu0 0.0
  %2637 = vmatprep.subr.mxu0 0.0
  %2638 = vmatpush1.msra.mxu0 0.0
  %2639 = vmatprep.subr.mxu0 0.0
  %2640 = vmatpush1.msra.mxu0 0.0
  %2641 = vmatprep.subr.mxu0 0.0
  %2642 = vmatpush1.msra.mxu0 0.0
  %2643 = vmatprep.subr.mxu0 0.0
  %2644 = vmatpush1.msra.mxu0 0.0
  %2645 = vmatprep.subr.mxu0 0.0
  %2646 = vmatpush1.msra.mxu0 0.0
  %2647 = vmatprep.subr.mxu0 0.0
  %2648 = vmatpush1.msra.mxu0 0.0
  %2649 = vmatprep.subr.mxu0 0.0
  %2650 = vmatpush1.msra.mxu0 0.0
  %2651 = vmatprep.subr.mxu0 0.0
  %2652 = vmatpush1.msra.mxu0 0.0
  %2653 = vmatprep.subr.mxu0 0.0
  %2654 = vmatpush1.msra.mxu0 0.0
  %2655 = vmatprep.mubr.f32.mxu0 0.0
  %2656 = vmatmul.mubr.f32.gmra.mrb[0].mxu0 %v2587
  %v2657 = vpop.f32.mrb[0].mxu0
  %v2658 = vadd.f32 0.0, %v2657
  %v2659 = vpop.f32.mrb[0].mxu0
  %2660 = vmatprep.mubr.f32.mxu0 0.0
  %2661 = vmatmul.mubr.f32.gmra.mrb[0].mxu0 %v2588
  %v2662 = vpop.f32.mrb[0].mxu0
  %v2663 = vadd.f32 0.0, %v2662
  %v2664 = vpop.f32.mrb[0].mxu0
  %2665 = vmatprep.mubr.f32.mxu0 0.0
  %2666 = vmatmul.mubr.f32.gmra.mrb[0].mxu0 %v2589
  %v2667 = vpop.f32.mrb[0].mxu0
  %v2668 = vadd.f32 0.0, %v2667
  %v2669 = vpop.f32.mrb[0].mxu0
  %2670 = vmatprep.mubr.f32.mxu0 0.0
  %2671 = vmatmul.mubr.f32.gmra.mrb[0].mxu0 %v2590
  %v2672 = vpop.f32.mrb[0].mxu0
  %v2673 = vadd.f32 0.0, %v2672
  %v2674 = vpop.f32.mrb[0].mxu0
  %2675 = vdwg.mxu0
  %v2677 = vsel %vm481, %v2658, 0
  %v2680 = vsel %vm481, %v2663, 0
  %v2683 = vsel %vm481, %v2668, 0
  %v2686 = vsel %vm481, %v2673, 0
  %2688 = vmatprep.subr.mxu0 0.0
  %2689 = vmatpush1.msra.mxu0 %v298
  %2690 = vmatprep.subr.mxu0 0.0
  %2691 = vmatpush1.msra.mxu0 0.0
  %2692 = vmatprep.subr.mxu0 0.0
  %2693 = vmatpush1.msra.mxu0 0.0
  %2694 = vmatprep.subr.mxu0 0.0
  %2695 = vmatpush1.msra.mxu0 0.0
  %2696 = vmatprep.subr.mxu0 0.0
  %2697 = vmatpush1.msra.mxu0 0.0
  %2698 = vmatprep.subr.mxu0 0.0
  %2699 = vmatpush1.msra.mxu0 0.0
  %2700 = vmatprep.subr.mxu0 0.0
  %2701 = vmatpush1.msra.mxu0 0.0
  %2702 = vmatprep.subr.mxu0 0.0
  %2703 = vmatpush1.msra.mxu0 0.0
  %2704 = vmatprep.subr.mxu0 0.0
  %2705 = vmatpush1.msra.mxu0 0.0
  %2706 = vmatprep.subr.mxu0 0.0
  %2707 = vmatpush1.msra.mxu0 0.0
  %2708 = vmatprep.subr.mxu0 0.0
  %2709 = vmatpush1.msra.mxu0 0.0
  %2710 = vmatprep.subr.mxu0 0.0
  %2711 = vmatpush1.msra.mxu0 0.0
  %2712 = vmatprep.subr.mxu0 0.0
  %2713 = vmatpush1.msra.mxu0 0.0
  %2714 = vmatprep.subr.mxu0 0.0
  %2715 = vmatpush1.msra.mxu0 0.0
  %2716 = vmatprep.subr.mxu0 0.0
  %2717 = vmatpush1.msra.mxu0 0.0
  %2718 = vmatprep.subr.mxu0 0.0
  %2719 = vmatpush1.msra.mxu0 0.0
  %2720 = vmatprep.subr.mxu0 0.0
  %2721 = vmatpush1.msra.mxu0 0.0
  %2722 = vmatprep.subr.mxu0 0.0
  %2723 = vmatpush1.msra.mxu0 0.0
  %2724 = vmatprep.subr.mxu0 0.0
  %2725 = vmatpush1.msra.mxu0 0.0
  %2726 = vmatprep.subr.mxu0 0.0
  %2727 = vmatpush1.msra.mxu0 0.0
  %2728 = vmatprep.subr.mxu0 0.0
  %2729 = vmatpush1.msra.mxu0 0.0
  %2730 = vmatprep.subr.mxu0 0.0
  %2731 = vmatpush1.msra.mxu0 0.0
  %2732 = vmatprep.subr.mxu0 0.0
  %2733 = vmatpush1.msra.mxu0 0.0
  %2734 = vmatprep.subr.mxu0 0.0
  %2735 = vmatpush1.msra.mxu0 0.0
  %2736 = vmatprep.subr.mxu0 0.0
  %2737 = vmatpush1.msra.mxu0 0.0
  %2738 = vmatprep.subr.mxu0 0.0
  %2739 = vmatpush1.msra.mxu0 0.0
  %2740 = vmatprep.subr.mxu0 0.0
  %2741 = vmatpush1.msra.mxu0 0.0
  %2742 = vmatprep.subr.mxu0 0.0
  %2743 = vmatpush1.msra.mxu0 0.0
  %2744 = vmatprep.subr.mxu0 0.0
  %2745 = vmatpush1.msra.mxu0 0.0
  %2746 = vmatprep.subr.mxu0 0.0
  %2747 = vmatpush1.msra.mxu0 0.0
  %2748 = vmatprep.subr.mxu0 0.0
  %2749 = vmatpush1.msra.mxu0 0.0
  %2750 = vmatprep.subr.mxu0 0.0
  %2751 = vmatpush1.msra.mxu0 0.0
  %2752 = vmatprep.mubr.f32.mxu0 0.0
  %2753 = vmatmul.mubr.f32.gmra.mrb[0].mxu0 %v2677
  %v2754 = vpop.f32.mrb[0].mxu0
  %v2755 = vadd.f32 0.0, %v2754
  %v2756 = vpop.f32.mrb[0].mxu0
  %2757 = vmatprep.mubr.f32.mxu0 0.0
  %2758 = vmatmul.mubr.f32.gmra.mrb[0].mxu0 %v2680
  %v2759 = vpop.f32.mrb[0].mxu0
  %v2760 = vadd.f32 0.0, %v2759
  %v2761 = vpop.f32.mrb[0].mxu0
  %2762 = vmatprep.mubr.f32.mxu0 0.0
  %2763 = vmatmul.mubr.f32.gmra.mrb[0].mxu0 %v2683
  %v2764 = vpop.f32.mrb[0].mxu0
  %v2765 = vadd.f32 0.0, %v2764
  %v2766 = vpop.f32.mrb[0].mxu0
  %2767 = vmatprep.mubr.f32.mxu0 0.0
  %2768 = vmatmul.mubr.f32.gmra.mrb[0].mxu0 %v2686
  %v2769 = vpop.f32.mrb[0].mxu0
  %v2770 = vadd.f32 0.0, %v2769
  %v2771 = vpop.f32.mrb[0].mxu0
  %2772 = vdwg.mxu0
  %v2773 = vadd.f32 %v2582, %v2755
  %v2774 = vadd.f32 %v2583, %v2760
  %v2775 = vadd.f32 %v2584, %v2765
  %v2776 = vadd.f32 %v2585, %v2770
  %s2777 = scalar_lea.vmem %s2, 416
  %v2778 = vld [vmem:[%s2777] sm:$0xff]
  %v2779 = vld [vmem:[%s2777 + $0x8] sm:$0xff]
  %v2780 = vld [vmem:[%s2777 + $0x10] sm:$0xff]
  %v2781 = vld [vmem:[%s2777 + $0x18] sm:$0xff]
  %2782 = vmatprep.subr.mxu0 0.0
  %2783 = vmatpush1.msra.mxu0 %v270
  %2784 = vmatprep.subr.mxu0 0.0
  %2785 = vmatpush1.msra.mxu0 %v271
  %2786 = vmatprep.subr.mxu0 0.0
  %2787 = vmatpush1.msra.mxu0 %v272
  %2788 = vmatprep.subr.mxu0 0.0
  %2789 = vmatpush1.msra.mxu0 %v273
  %2790 = vmatprep.subr.mxu0 0.0
  %2791 = vmatpush1.msra.mxu0 %v274
  %2792 = vmatprep.subr.mxu0 0.0
  %2793 = vmatpush1.msra.mxu0 %v275
  %2794 = vmatprep.subr.mxu0 0.0
  %2795 = vmatpush1.msra.mxu0 %v276
  %2796 = vmatprep.subr.mxu0 0.0
  %2797 = vmatpush1.msra.mxu0 %v277
  %2798 = vmatprep.subr.mxu0 0.0
  %2799 = vmatpush1.msra.mxu0 %v278
  %2800 = vmatprep.subr.mxu0 0.0
  %2801 = vmatpush1.msra.mxu0 %v279
  %2802 = vmatprep.subr.mxu0 0.0
  %2803 = vmatpush1.msra.mxu0 %v280
  %2804 = vmatprep.subr.mxu0 0.0
  %2805 = vmatpush1.msra.mxu0 %v281
  %2806 = vmatprep.subr.mxu0 0.0
  %2807 = vmatpush1.msra.mxu0 %v282
  %2808 = vmatprep.subr.mxu0 0.0
  %2809 = vmatpush1.msra.mxu0 %v283
  %2810 = vmatprep.subr.mxu0 0.0
  %2811 = vmatpush1.msra.mxu0 %v284
  %2812 = vmatprep.subr.mxu0 0.0
  %2813 = vmatpush1.msra.mxu0 %v285
  %2814 = vmatprep.subr.mxu0 0.0
  %2815 = vmatpush1.msra.mxu0 0.0
  %2816 = vmatprep.subr.mxu0 0.0
  %2817 = vmatpush1.msra.mxu0 0.0
  %2818 = vmatprep.subr.mxu0 0.0
  %2819 = vmatpush1.msra.mxu0 0.0
  %2820 = vmatprep.subr.mxu0 0.0
  %2821 = vmatpush1.msra.mxu0 0.0
  %2822 = vmatprep.subr.mxu0 0.0
  %2823 = vmatpush1.msra.mxu0 0.0
  %2824 = vmatprep.subr.mxu0 0.0
  %2825 = vmatpush1.msra.mxu0 0.0
  %2826 = vmatprep.subr.mxu0 0.0
  %2827 = vmatpush1.msra.mxu0 0.0
  %2828 = vmatprep.subr.mxu0 0.0
  %2829 = vmatpush1.msra.mxu0 0.0
  %2830 = vmatprep.subr.mxu0 0.0
  %2831 = vmatpush1.msra.mxu0 0.0
  %2832 = vmatprep.subr.mxu0 0.0
  %2833 = vmatpush1.msra.mxu0 0.0
  %2834 = vmatprep.subr.mxu0 0.0
  %2835 = vmatpush1.msra.mxu0 0.0
  %2836 = vmatprep.subr.mxu0 0.0
  %2837 = vmatpush1.msra.mxu0 0.0
  %2838 = vmatprep.subr.mxu0 0.0
  %2839 = vmatpush1.msra.mxu0 0.0
  %2840 = vmatprep.subr.mxu0 0.0
  %2841 = vmatpush1.msra.mxu0 0.0
  %2842 = vmatprep.subr.mxu0 0.0
  %2843 = vmatpush1.msra.mxu0 0.0
  %2844 = vmatprep.subr.mxu0 0.0
  %2845 = vmatpush1.msra.mxu0 0.0
  %2846 = vmatprep.mubr.f32.mxu0 0.0
  %2847 = vmatmul.mubr.f32.gmra.mrb[0].mxu0 %v2778
  %v2848 = vpop.f32.mrb[0].mxu0
  %v2849 = vadd.f32 0.0, %v2848
  %v2850 = vpop.f32.mrb[0].mxu0
  %2851 = vmatprep.mubr.f32.mxu0 0.0
  %2852 = vmatmul.mubr.f32.gmra.mrb[0].mxu0 %v2779
  %v2853 = vpop.f32.mrb[0].mxu0
  %v2854 = vadd.f32 0.0, %v2853
  %v2855 = vpop.f32.mrb[0].mxu0
  %2856 = vmatprep.mubr.f32.mxu0 0.0
  %2857 = vmatmul.mubr.f32.gmra.mrb[0].mxu0 %v2780
  %v2858 = vpop.f32.mrb[0].mxu0
  %v2859 = vadd.f32 0.0, %v2858
  %v2860 = vpop.f32.mrb[0].mxu0
  %2861 = vmatprep.mubr.f32.mxu0 0.0
  %2862 = vmatmul.mubr.f32.gmra.mrb[0].mxu0 %v2781
  %v2863 = vpop.f32.mrb[0].mxu0
  %v2864 = vadd.f32 0.0, %v2863
  %v2865 = vpop.f32.mrb[0].mxu0
  %2866 = vdwg.mxu0
  %v2868 = vsel %vm481, %v2849, 0
  %v2871 = vsel %vm481, %v2854, 0
  %v2874 = vsel %vm481, %v2859, 0
  %v2877 = vsel %vm481, %v2864, 0
  %2879 = vmatprep.subr.mxu0 0.0
  %2880 = vmatpush1.msra.mxu0 %v299
  %2881 = vmatprep.subr.mxu0 0.0
  %2882 = vmatpush1.msra.mxu0 0.0
  %2883 = vmatprep.subr.mxu0 0.0
  %2884 = vmatpush1.msra.mxu0 0.0
  %2885 = vmatprep.subr.mxu0 0.0
  %2886 = vmatpush1.msra.mxu0 0.0
  %2887 = vmatprep.subr.mxu0 0.0
  %2888 = vmatpush1.msra.mxu0 0.0
  %2889 = vmatprep.subr.mxu0 0.0
  %2890 = vmatpush1.msra.mxu0 0.0
  %2891 = vmatprep.subr.mxu0 0.0
  %2892 = vmatpush1.msra.mxu0 0.0
  %2893 = vmatprep.subr.mxu0 0.0
  %2894 = vmatpush1.msra.mxu0 0.0
  %2895 = vmatprep.subr.mxu0 0.0
  %2896 = vmatpush1.msra.mxu0 0.0
  %2897 = vmatprep.subr.mxu0 0.0
  %2898 = vmatpush1.msra.mxu0 0.0
  %2899 = vmatprep.subr.mxu0 0.0
  %2900 = vmatpush1.msra.mxu0 0.0
  %2901 = vmatprep.subr.mxu0 0.0
  %2902 = vmatpush1.msra.mxu0 0.0
  %2903 = vmatprep.subr.mxu0 0.0
  %2904 = vmatpush1.msra.mxu0 0.0
  %2905 = vmatprep.subr.mxu0 0.0
  %2906 = vmatpush1.msra.mxu0 0.0
  %2907 = vmatprep.subr.mxu0 0.0
  %2908 = vmatpush1.msra.mxu0 0.0
  %2909 = vmatprep.subr.mxu0 0.0
  %2910 = vmatpush1.msra.mxu0 0.0
  %2911 = vmatprep.subr.mxu0 0.0
  %2912 = vmatpush1.msra.mxu0 0.0
  %2913 = vmatprep.subr.mxu0 0.0
  %2914 = vmatpush1.msra.mxu0 0.0
  %2915 = vmatprep.subr.mxu0 0.0
  %2916 = vmatpush1.msra.mxu0 0.0
  %2917 = vmatprep.subr.mxu0 0.0
  %2918 = vmatpush1.msra.mxu0 0.0
  %2919 = vmatprep.subr.mxu0 0.0
  %2920 = vmatpush1.msra.mxu0 0.0
  %2921 = vmatprep.subr.mxu0 0.0
  %2922 = vmatpush1.msra.mxu0 0.0
  %2923 = vmatprep.subr.mxu0 0.0
  %2924 = vmatpush1.msra.mxu0 0.0
  %2925 = vmatprep.subr.mxu0 0.0
  %2926 = vmatpush1.msra.mxu0 0.0
  %2927 = vmatprep.subr.mxu0 0.0
  %2928 = vmatpush1.msra.mxu0 0.0
  %2929 = vmatprep.subr.mxu0 0.0
  %2930 = vmatpush1.msra.mxu0 0.0
  %2931 = vmatprep.subr.mxu0 0.0
  %2932 = vmatpush1.msra.mxu0 0.0
  %2933 = vmatprep.subr.mxu0 0.0
  %2934 = vmatpush1.msra.mxu0 0.0
  %2935 = vmatprep.subr.mxu0 0.0
  %2936 = vmatpush1.msra.mxu0 0.0
  %2937 = vmatprep.subr.mxu0 0.0
  %2938 = vmatpush1.msra.mxu0 0.0
  %2939 = vmatprep.subr.mxu0 0.0
  %2940 = vmatpush1.msra.mxu0 0.0
  %2941 = vmatprep.subr.mxu0 0.0
  %2942 = vmatpush1.msra.mxu0 0.0
  %2943 = vmatprep.mubr.f32.mxu0 0.0
  %2944 = vmatmul.mubr.f32.gmra.mrb[0].mxu0 %v2868
  %v2945 = vpop.f32.mrb[0].mxu0
  %v2946 = vadd.f32 0.0, %v2945
  %v2947 = vpop.f32.mrb[0].mxu0
  %2948 = vmatprep.mubr.f32.mxu0 0.0
  %2949 = vmatmul.mubr.f32.gmra.mrb[0].mxu0 %v2871
  %v2950 = vpop.f32.mrb[0].mxu0
  %v2951 = vadd.f32 0.0, %v2950
  %v2952 = vpop.f32.mrb[0].mxu0
  %2953 = vmatprep.mubr.f32.mxu0 0.0
  %2954 = vmatmul.mubr.f32.gmra.mrb[0].mxu0 %v2874
  %v2955 = vpop.f32.mrb[0].mxu0
  %v2956 = vadd.f32 0.0, %v2955
  %v2957 = vpop.f32.mrb[0].mxu0
  %2958 = vmatprep.mubr.f32.mxu0 0.0
  %2959 = vmatmul.mubr.f32.gmra.mrb[0].mxu0 %v2877
  %v2960 = vpop.f32.mrb[0].mxu0
  %v2961 = vadd.f32 0.0, %v2960
  %v2962 = vpop.f32.mrb[0].mxu0
  %2963 = vdwg.mxu0
  %v2964 = vadd.f32 %v2773, %v2946
  %v2965 = vadd.f32 %v2774, %v2951
  %v2966 = vadd.f32 %v2775, %v2956
  %v2967 = vadd.f32 %v2776, %v2961
  %s2968 = scalar_lea.vmem %s2, 448
  %v2969 = vld [vmem:[%s2968] sm:$0xff]
  %v2970 = vld [vmem:[%s2968 + $0x8] sm:$0xff]
  %v2971 = vld [vmem:[%s2968 + $0x10] sm:$0xff]
  %v2972 = vld [vmem:[%s2968 + $0x18] sm:$0xff]
  %2973 = vmatprep.subr.mxu0 0.0
  %2974 = vmatpush1.msra.mxu0 %v270
  %2975 = vmatprep.subr.mxu0 0.0
  %2976 = vmatpush1.msra.mxu0 %v271
  %2977 = vmatprep.subr.mxu0 0.0
  %2978 = vmatpush1.msra.mxu0 %v272
  %2979 = vmatprep.subr.mxu0 0.0
  %2980 = vmatpush1.msra.mxu0 %v273
  %2981 = vmatprep.subr.mxu0 0.0
  %2982 = vmatpush1.msra.mxu0 %v274
  %2983 = vmatprep.subr.mxu0 0.0
  %2984 = vmatpush1.msra.mxu0 %v275
  %2985 = vmatprep.subr.mxu0 0.0
  %2986 = vmatpush1.msra.mxu0 %v276
  %2987 = vmatprep.subr.mxu0 0.0
  %2988 = vmatpush1.msra.mxu0 %v277
  %2989 = vmatprep.subr.mxu0 0.0
  %2990 = vmatpush1.msra.mxu0 %v278
  %2991 = vmatprep.subr.mxu0 0.0
  %2992 = vmatpush1.msra.mxu0 %v279
  %2993 = vmatprep.subr.mxu0 0.0
  %2994 = vmatpush1.msra.mxu0 %v280
  %2995 = vmatprep.subr.mxu0 0.0
  %2996 = vmatpush1.msra.mxu0 %v281
  %2997 = vmatprep.subr.mxu0 0.0
  %2998 = vmatpush1.msra.mxu0 %v282
  %2999 = vmatprep.subr.mxu0 0.0
  %3000 = vmatpush1.msra.mxu0 %v283
  %3001 = vmatprep.subr.mxu0 0.0
  %3002 = vmatpush1.msra.mxu0 %v284
  %3003 = vmatprep.subr.mxu0 0.0
  %3004 = vmatpush1.msra.mxu0 %v285
  %3005 = vmatprep.subr.mxu0 0.0
  %3006 = vmatpush1.msra.mxu0 0.0
  %3007 = vmatprep.subr.mxu0 0.0
  %3008 = vmatpush1.msra.mxu0 0.0
  %3009 = vmatprep.subr.mxu0 0.0
  %3010 = vmatpush1.msra.mxu0 0.0
  %3011 = vmatprep.subr.mxu0 0.0
  %3012 = vmatpush1.msra.mxu0 0.0
  %3013 = vmatprep.subr.mxu0 0.0
  %3014 = vmatpush1.msra.mxu0 0.0
  %3015 = vmatprep.subr.mxu0 0.0
  %3016 = vmatpush1.msra.mxu0 0.0
  %3017 = vmatprep.subr.mxu0 0.0
  %3018 = vmatpush1.msra.mxu0 0.0
  %3019 = vmatprep.subr.mxu0 0.0
  %3020 = vmatpush1.msra.mxu0 0.0
  %3021 = vmatprep.subr.mxu0 0.0
  %3022 = vmatpush1.msra.mxu0 0.0
  %3023 = vmatprep.subr.mxu0 0.0
  %3024 = vmatpush1.msra.mxu0 0.0
  %3025 = vmatprep.subr.mxu0 0.0
  %3026 = vmatpush1.msra.mxu0 0.0
  %3027 = vmatprep.subr.mxu0 0.0
  %3028 = vmatpush1.msra.mxu0 0.0
  %3029 = vmatprep.subr.mxu0 0.0
  %3030 = vmatpush1.msra.mxu0 0.0
  %3031 = vmatprep.subr.mxu0 0.0
  %3032 = vmatpush1.msra.mxu0 0.0
  %3033 = vmatprep.subr.mxu0 0.0
  %3034 = vmatpush1.msra.mxu0 0.0
  %3035 = vmatprep.subr.mxu0 0.0
  %3036 = vmatpush1.msra.mxu0 0.0
  %3037 = vmatprep.mubr.f32.mxu0 0.0
  %3038 = vmatmul.mubr.f32.gmra.mrb[0].mxu0 %v2969
  %v3039 = vpop.f32.mrb[0].mxu0
  %v3040 = vadd.f32 0.0, %v3039
  %v3041 = vpop.f32.mrb[0].mxu0
  %3042 = vmatprep.mubr.f32.mxu0 0.0
  %3043 = vmatmul.mubr.f32.gmra.mrb[0].mxu0 %v2970
  %v3044 = vpop.f32.mrb[0].mxu0
  %v3045 = vadd.f32 0.0, %v3044
  %v3046 = vpop.f32.mrb[0].mxu0
  %3047 = vmatprep.mubr.f32.mxu0 0.0
  %3048 = vmatmul.mubr.f32.gmra.mrb[0].mxu0 %v2971
  %v3049 = vpop.f32.mrb[0].mxu0
  %v3050 = vadd.f32 0.0, %v3049
  %v3051 = vpop.f32.mrb[0].mxu0
  %3052 = vmatprep.mubr.f32.mxu0 0.0
  %3053 = vmatmul.mubr.f32.gmra.mrb[0].mxu0 %v2972
  %v3054 = vpop.f32.mrb[0].mxu0
  %v3055 = vadd.f32 0.0, %v3054
  %v3056 = vpop.f32.mrb[0].mxu0
  %3057 = vdwg.mxu0
  %v3059 = vsel %vm481, %v3040, 0
  %v3062 = vsel %vm481, %v3045, 0
  %v3065 = vsel %vm481, %v3050, 0
  %v3068 = vsel %vm481, %v3055, 0
  %3070 = vmatprep.subr.mxu0 0.0
  %3071 = vmatpush1.msra.mxu0 %v300
  %3072 = vmatprep.subr.mxu0 0.0
  %3073 = vmatpush1.msra.mxu0 0.0
  %3074 = vmatprep.subr.mxu0 0.0
  %3075 = vmatpush1.msra.mxu0 0.0
  %3076 = vmatprep.subr.mxu0 0.0
  %3077 = vmatpush1.msra.mxu0 0.0
  %3078 = vmatprep.subr.mxu0 0.0
  %3079 = vmatpush1.msra.mxu0 0.0
  %3080 = vmatprep.subr.mxu0 0.0
  %3081 = vmatpush1.msra.mxu0 0.0
  %3082 = vmatprep.subr.mxu0 0.0
  %3083 = vmatpush1.msra.mxu0 0.0
  %3084 = vmatprep.subr.mxu0 0.0
  %3085 = vmatpush1.msra.mxu0 0.0
  %3086 = vmatprep.subr.mxu0 0.0
  %3087 = vmatpush1.msra.mxu0 0.0
  %3088 = vmatprep.subr.mxu0 0.0
  %3089 = vmatpush1.msra.mxu0 0.0
  %3090 = vmatprep.subr.mxu0 0.0
  %3091 = vmatpush1.msra.mxu0 0.0
  %3092 = vmatprep.subr.mxu0 0.0
  %3093 = vmatpush1.msra.mxu0 0.0
  %3094 = vmatprep.subr.mxu0 0.0
  %3095 = vmatpush1.msra.mxu0 0.0
  %3096 = vmatprep.subr.mxu0 0.0
  %3097 = vmatpush1.msra.mxu0 0.0
  %3098 = vmatprep.subr.mxu0 0.0
  %3099 = vmatpush1.msra.mxu0 0.0
  %3100 = vmatprep.subr.mxu0 0.0
  %3101 = vmatpush1.msra.mxu0 0.0
  %3102 = vmatprep.subr.mxu0 0.0
  %3103 = vmatpush1.msra.mxu0 0.0
  %3104 = vmatprep.subr.mxu0 0.0
  %3105 = vmatpush1.msra.mxu0 0.0
  %3106 = vmatprep.subr.mxu0 0.0
  %3107 = vmatpush1.msra.mxu0 0.0
  %3108 = vmatprep.subr.mxu0 0.0
  %3109 = vmatpush1.msra.mxu0 0.0
  %3110 = vmatprep.subr.mxu0 0.0
  %3111 = vmatpush1.msra.mxu0 0.0
  %3112 = vmatprep.subr.mxu0 0.0
  %3113 = vmatpush1.msra.mxu0 0.0
  %3114 = vmatprep.subr.mxu0 0.0
  %3115 = vmatpush1.msra.mxu0 0.0
  %3116 = vmatprep.subr.mxu0 0.0
  %3117 = vmatpush1.msra.mxu0 0.0
  %3118 = vmatprep.subr.mxu0 0.0
  %3119 = vmatpush1.msra.mxu0 0.0
  %3120 = vmatprep.subr.mxu0 0.0
  %3121 = vmatpush1.msra.mxu0 0.0
  %3122 = vmatprep.subr.mxu0 0.0
  %3123 = vmatpush1.msra.mxu0 0.0
  %3124 = vmatprep.subr.mxu0 0.0
  %3125 = vmatpush1.msra.mxu0 0.0
  %3126 = vmatprep.subr.mxu0 0.0
  %3127 = vmatpush1.msra.mxu0 0.0
  %3128 = vmatprep.subr.mxu0 0.0
  %3129 = vmatpush1.msra.mxu0 0.0
  %3130 = vmatprep.subr.mxu0 0.0
  %3131 = vmatpush1.msra.mxu0 0.0
  %3132 = vmatprep.subr.mxu0 0.0
  %3133 = vmatpush1.msra.mxu0 0.0
  %3134 = vmatprep.mubr.f32.mxu0 0.0
  %3135 = vmatmul.mubr.f32.gmra.mrb[0].mxu0 %v3059
  %v3136 = vpop.f32.mrb[0].mxu0
  %v3137 = vadd.f32 0.0, %v3136
  %v3138 = vpop.f32.mrb[0].mxu0
  %3139 = vmatprep.mubr.f32.mxu0 0.0
  %3140 = vmatmul.mubr.f32.gmra.mrb[0].mxu0 %v3062
  %v3141 = vpop.f32.mrb[0].mxu0
  %v3142 = vadd.f32 0.0, %v3141
  %v3143 = vpop.f32.mrb[0].mxu0
  %3144 = vmatprep.mubr.f32.mxu0 0.0
  %3145 = vmatmul.mubr.f32.gmra.mrb[0].mxu0 %v3065
  %v3146 = vpop.f32.mrb[0].mxu0
  %v3147 = vadd.f32 0.0, %v3146
  %v3148 = vpop.f32.mrb[0].mxu0
  %3149 = vmatprep.mubr.f32.mxu0 0.0
  %3150 = vmatmul.mubr.f32.gmra.mrb[0].mxu0 %v3068
  %v3151 = vpop.f32.mrb[0].mxu0
  %v3152 = vadd.f32 0.0, %v3151
  %v3153 = vpop.f32.mrb[0].mxu0
  %3154 = vdwg.mxu0
  %v3155 = vadd.f32 %v2964, %v3137
  %v3156 = vadd.f32 %v2965, %v3142
  %v3157 = vadd.f32 %v2966, %v3147
  %v3158 = vadd.f32 %v2967, %v3152
  %s3159 = scalar_lea.vmem %s2, 480
  %v3160 = vld [vmem:[%s3159] sm:$0xff]
  %v3161 = vld [vmem:[%s3159 + $0x8] sm:$0xff]
  %v3162 = vld [vmem:[%s3159 + $0x10] sm:$0xff]
  %v3163 = vld [vmem:[%s3159 + $0x18] sm:$0xff]
  %3164 = vmatprep.subr.mxu0 0.0
  %3165 = vmatpush1.msra.mxu0 %v270
  %3166 = vmatprep.subr.mxu0 0.0
  %3167 = vmatpush1.msra.mxu0 %v271
  %3168 = vmatprep.subr.mxu0 0.0
  %3169 = vmatpush1.msra.mxu0 %v272
  %3170 = vmatprep.subr.mxu0 0.0
  %3171 = vmatpush1.msra.mxu0 %v273
  %3172 = vmatprep.subr.mxu0 0.0
  %3173 = vmatpush1.msra.mxu0 %v274
  %3174 = vmatprep.subr.mxu0 0.0
  %3175 = vmatpush1.msra.mxu0 %v275
  %3176 = vmatprep.subr.mxu0 0.0
  %3177 = vmatpush1.msra.mxu0 %v276
  %3178 = vmatprep.subr.mxu0 0.0
  %3179 = vmatpush1.msra.mxu0 %v277
  %3180 = vmatprep.subr.mxu0 0.0
  %3181 = vmatpush1.msra.mxu0 %v278
  %3182 = vmatprep.subr.mxu0 0.0
  %3183 = vmatpush1.msra.mxu0 %v279
  %3184 = vmatprep.subr.mxu0 0.0
  %3185 = vmatpush1.msra.mxu0 %v280
  %3186 = vmatprep.subr.mxu0 0.0
  %3187 = vmatpush1.msra.mxu0 %v281
  %3188 = vmatprep.subr.mxu0 0.0
  %3189 = vmatpush1.msra.mxu0 %v282
  %3190 = vmatprep.subr.mxu0 0.0
  %3191 = vmatpush1.msra.mxu0 %v283
  %3192 = vmatprep.subr.mxu0 0.0
  %3193 = vmatpush1.msra.mxu0 %v284
  %3194 = vmatprep.subr.mxu0 0.0
  %3195 = vmatpush1.msra.mxu0 %v285
  %3196 = vmatprep.subr.mxu0 0.0
  %3197 = vmatpush1.msra.mxu0 0.0
  %3198 = vmatprep.subr.mxu0 0.0
  %3199 = vmatpush1.msra.mxu0 0.0
  %3200 = vmatprep.subr.mxu0 0.0
  %3201 = vmatpush1.msra.mxu0 0.0
  %3202 = vmatprep.subr.mxu0 0.0
  %3203 = vmatpush1.msra.mxu0 0.0
  %3204 = vmatprep.subr.mxu0 0.0
  %3205 = vmatpush1.msra.mxu0 0.0
  %3206 = vmatprep.subr.mxu0 0.0
  %3207 = vmatpush1.msra.mxu0 0.0
  %3208 = vmatprep.subr.mxu0 0.0
  %3209 = vmatpush1.msra.mxu0 0.0
  %3210 = vmatprep.subr.mxu0 0.0
  %3211 = vmatpush1.msra.mxu0 0.0
  %3212 = vmatprep.subr.mxu0 0.0
  %3213 = vmatpush1.msra.mxu0 0.0
  %3214 = vmatprep.subr.mxu0 0.0
  %3215 = vmatpush1.msra.mxu0 0.0
  %3216 = vmatprep.subr.mxu0 0.0
  %3217 = vmatpush1.msra.mxu0 0.0
  %3218 = vmatprep.subr.mxu0 0.0
  %3219 = vmatpush1.msra.mxu0 0.0
  %3220 = vmatprep.subr.mxu0 0.0
  %3221 = vmatpush1.msra.mxu0 0.0
  %3222 = vmatprep.subr.mxu0 0.0
  %3223 = vmatpush1.msra.mxu0 0.0
  %3224 = vmatprep.subr.mxu0 0.0
  %3225 = vmatpush1.msra.mxu0 0.0
  %3226 = vmatprep.subr.mxu0 0.0
  %3227 = vmatpush1.msra.mxu0 0.0
  %3228 = vmatprep.mubr.f32.mxu0 0.0
  %3229 = vmatmul.mubr.f32.gmra.mrb[0].mxu0 %v3160
  %v3230 = vpop.f32.mrb[0].mxu0
  %v3231 = vadd.f32 0.0, %v3230
  %v3232 = vpop.f32.mrb[0].mxu0
  %3233 = vmatprep.mubr.f32.mxu0 0.0
  %3234 = vmatmul.mubr.f32.gmra.mrb[0].mxu0 %v3161
  %v3235 = vpop.f32.mrb[0].mxu0
  %v3236 = vadd.f32 0.0, %v3235
  %v3237 = vpop.f32.mrb[0].mxu0
  %3238 = vmatprep.mubr.f32.mxu0 0.0
  %3239 = vmatmul.mubr.f32.gmra.mrb[0].mxu0 %v3162
  %v3240 = vpop.f32.mrb[0].mxu0
  %v3241 = vadd.f32 0.0, %v3240
  %v3242 = vpop.f32.mrb[0].mxu0
  %3243 = vmatprep.mubr.f32.mxu0 0.0
  %3244 = vmatmul.mubr.f32.gmra.mrb[0].mxu0 %v3163
  %v3245 = vpop.f32.mrb[0].mxu0
  %v3246 = vadd.f32 0.0, %v3245
  %v3247 = vpop.f32.mrb[0].mxu0
  %3248 = vdwg.mxu0
  %v3250 = vsel %vm481, %v3231, 0
  %v3253 = vsel %vm481, %v3236, 0
  %v3256 = vsel %vm481, %v3241, 0
  %v3259 = vsel %vm481, %v3246, 0
  %3261 = vmatprep.subr.mxu0 0.0
  %3262 = vmatpush1.msra.mxu0 %v301
  %3263 = vmatprep.subr.mxu0 0.0
  %3264 = vmatpush1.msra.mxu0 0.0
  %3265 = vmatprep.subr.mxu0 0.0
  %3266 = vmatpush1.msra.mxu0 0.0
  %3267 = vmatprep.subr.mxu0 0.0
  %3268 = vmatpush1.msra.mxu0 0.0
  %3269 = vmatprep.subr.mxu0 0.0
  %3270 = vmatpush1.msra.mxu0 0.0
  %3271 = vmatprep.subr.mxu0 0.0
  %3272 = vmatpush1.msra.mxu0 0.0
  %3273 = vmatprep.subr.mxu0 0.0
  %3274 = vmatpush1.msra.mxu0 0.0
  %3275 = vmatprep.subr.mxu0 0.0
  %3276 = vmatpush1.msra.mxu0 0.0
  %3277 = vmatprep.subr.mxu0 0.0
  %3278 = vmatpush1.msra.mxu0 0.0
  %3279 = vmatprep.subr.mxu0 0.0
  %3280 = vmatpush1.msra.mxu0 0.0
  %3281 = vmatprep.subr.mxu0 0.0
  %3282 = vmatpush1.msra.mxu0 0.0
  %3283 = vmatprep.subr.mxu0 0.0
  %3284 = vmatpush1.msra.mxu0 0.0
  %3285 = vmatprep.subr.mxu0 0.0
  %3286 = vmatpush1.msra.mxu0 0.0
  %3287 = vmatprep.subr.mxu0 0.0
  %3288 = vmatpush1.msra.mxu0 0.0
  %3289 = vmatprep.subr.mxu0 0.0
  %3290 = vmatpush1.msra.mxu0 0.0
  %3291 = vmatprep.subr.mxu0 0.0
  %3292 = vmatpush1.msra.mxu0 0.0
  %3293 = vmatprep.subr.mxu0 0.0
  %3294 = vmatpush1.msra.mxu0 0.0
  %3295 = vmatprep.subr.mxu0 0.0
  %3296 = vmatpush1.msra.mxu0 0.0
  %3297 = vmatprep.subr.mxu0 0.0
  %3298 = vmatpush1.msra.mxu0 0.0
  %3299 = vmatprep.subr.mxu0 0.0
  %3300 = vmatpush1.msra.mxu0 0.0
  %3301 = vmatprep.subr.mxu0 0.0
  %3302 = vmatpush1.msra.mxu0 0.0
  %3303 = vmatprep.subr.mxu0 0.0
  %3304 = vmatpush1.msra.mxu0 0.0
  %3305 = vmatprep.subr.mxu0 0.0
  %3306 = vmatpush1.msra.mxu0 0.0
  %3307 = vmatprep.subr.mxu0 0.0
  %3308 = vmatpush1.msra.mxu0 0.0
  %3309 = vmatprep.subr.mxu0 0.0
  %3310 = vmatpush1.msra.mxu0 0.0
  %3311 = vmatprep.subr.mxu0 0.0
  %3312 = vmatpush1.msra.mxu0 0.0
  %3313 = vmatprep.subr.mxu0 0.0
  %3314 = vmatpush1.msra.mxu0 0.0
  %3315 = vmatprep.subr.mxu0 0.0
  %3316 = vmatpush1.msra.mxu0 0.0
  %3317 = vmatprep.subr.mxu0 0.0
  %3318 = vmatpush1.msra.mxu0 0.0
  %3319 = vmatprep.subr.mxu0 0.0
  %3320 = vmatpush1.msra.mxu0 0.0
  %3321 = vmatprep.subr.mxu0 0.0
  %3322 = vmatpush1.msra.mxu0 0.0
  %3323 = vmatprep.subr.mxu0 0.0
  %3324 = vmatpush1.msra.mxu0 0.0
  %3325 = vmatprep.mubr.f32.mxu0 0.0
  %3326 = vmatmul.mubr.f32.gmra.mrb[0].mxu0 %v3250
  %v3327 = vpop.f32.mrb[0].mxu0
  %v3328 = vadd.f32 0.0, %v3327
  %v3329 = vpop.f32.mrb[0].mxu0
  %3330 = vmatprep.mubr.f32.mxu0 0.0
  %3331 = vmatmul.mubr.f32.gmra.mrb[0].mxu0 %v3253
  %v3332 = vpop.f32.mrb[0].mxu0
  %v3333 = vadd.f32 0.0, %v3332
  %v3334 = vpop.f32.mrb[0].mxu0
  %3335 = vmatprep.mubr.f32.mxu0 0.0
  %3336 = vmatmul.mubr.f32.gmra.mrb[0].mxu0 %v3256
  %v3337 = vpop.f32.mrb[0].mxu0
  %v3338 = vadd.f32 0.0, %v3337
  %v3339 = vpop.f32.mrb[0].mxu0
  %3340 = vmatprep.mubr.f32.mxu0 0.0
  %3341 = vmatmul.mubr.f32.gmra.mrb[0].mxu0 %v3259
  %v3342 = vpop.f32.mrb[0].mxu0
  %v3343 = vadd.f32 0.0, %v3342
  %v3344 = vpop.f32.mrb[0].mxu0
  %3345 = vdwg.mxu0
  %v3346 = vadd.f32 %v3155, %v3328
  %v3347 = vadd.f32 %v3156, %v3333
  %v3348 = vadd.f32 %v3157, %v3338
  %v3349 = vadd.f32 %v3158, %v3343
  %vm3350 = vcmask 130048
  %v3351 = vsel %vm3350, %v3346, 0.0
  %v3352 = vsel %vm3350, %v3347, 0.0
  %v3353 = vadd.f32 %v3351, %v3352
  %v3354 = vsel %vm3350, %v3348, 0.0
  %v3355 = vadd.f32 %v3353, %v3354
  %v3356 = vsel %vm3350, %v3349, 0.0
  %v3357 = vadd.f32 %v3355, %v3356
  %v3358 = vrot.slane %v3357, 4
  %v3359 = vadd.f32 %v3357, %v3358
  %v3360 = vrot.slane %v3359, 2
  %v3361 = vadd.f32 %v3359, %v3360
  %v3362 = vrot.slane %v3361, 1
  %v3363 = vadd.f32 %v3361, %v3362
  %v3364 = vrcp.pop 32.0
  %v3365 = vmul.f32 %v3363, %v3364
  %v3366 = vmul.f32 %v3346, %v3346
  %v3367 = vmul.f32 %v3347, %v3347
  %v3368 = vmul.f32 %v3348, %v3348
  %v3369 = vmul.f32 %v3349, %v3349
  %v3370 = vsel %vm3350, %v3366, 0.0
  %v3371 = vsel %vm3350, %v3367, 0.0
  %v3372 = vadd.f32 %v3370, %v3371
  %v3373 = vsel %vm3350, %v3368, 0.0
  %v3374 = vadd.f32 %v3372, %v3373
  %v3375 = vsel %vm3350, %v3369, 0.0
  %v3376 = vadd.f32 %v3374, %v3375
  %v3377 = vrot.slane %v3376, 4
  %v3378 = vadd.f32 %v3376, %v3377
  %v3379 = vrot.slane %v3378, 2
  %v3380 = vadd.f32 %v3378, %v3379
  %v3381 = vrot.slane %v3380, 1
  %v3382 = vadd.f32 %v3380, %v3381
  %v3383 = vmul.f32 %v3382, %v3364
  %v3384 = vmul.f32 %v3365, %v3365
  %v3385 = vsub.f32 %v3383, %v3384
  %v3386 = vmax.f32 %v3385, 0.0
  %v3387 = vsub.f32 %v3346, %v3365
  %v3388 = vsub.f32 %v3347, %v3365
  %v3389 = vsub.f32 %v3348, %v3365
  %v3390 = vsub.f32 %v3349, %v3365
  %v3391 = vadd.f32 %v3386, 1e-05
  %v3392 = vrsqrt.pop %v3391
  %v3393 = vmul.f32 %v3387, %v3392
  %v3394 = vmul.f32 %v3388, %v3392
  %v3395 = vmul.f32 %v3389, %v3392
  %v3396 = vmul.f32 %v3390, %v3392
  %vm3397 = vcmp.ge.f32.partialorder %v3393, 0.0
  %vm3398 = vcmp.ge.f32.partialorder %v3394, 0.0
  %vm3399 = vcmp.ge.f32.partialorder %v3395, 0.0
  %vm3400 = vcmp.ge.f32.partialorder %v3396, 0.0
  %v3401 = vmul.f32 %v3393, 0.2
  %v3402 = vmul.f32 %v3394, 0.2
  %v3403 = vmul.f32 %v3395, 0.2
  %v3404 = vmul.f32 %v3396, 0.2
  %v3405 = vsel %vm3397, %v3393, %v3401
  %v3406 = vsel %vm3398, %v3394, %v3402
  %v3407 = vsel %vm3399, %v3395, %v3403
  %v3408 = vsel %vm3400, %v3396, %v3404
  %v3409 = vld [vmem:[%s4] sm:$0xff]
  %v3410 = vld [vmem:[%s4 + $0x8] sm:$0xff]
  %v3411 = vmul.f32 %v3405, %v3409
  %v3412 = vmul.f32 %v3406, %v3410
  %v3413 = vsel %vm3350, %v3411, 0.0
  %3414 = vadd.xlane.f32.xlu0 %v3413
  %v3415 = vpop.xlane.xlu0 %3414
  %v3416 = vsel %vm3350, %v3412, 0.0
  %3417 = vadd.xlane.f32.xlu0 %v3416
  %v3418 = vpop.xlane.xlu0 %3417
  %v3419 = vadd.f32 %v3415, %v3418
  %v3420 = vrot.slane %v3419, 4
  %v3421 = vadd.f32 %v3419, %v3420
  %v3422 = vrot.slane %v3421, 2
  %v3423 = vadd.f32 %v3421, %v3422
  %v3424 = vrot.slane %v3423, 1
  %v3425 = vadd.f32 %v3423, %v3424
  %v3426 = vsub.f32 0.0, %v3425
  %v3427 = vmul.f32 %v3426, 1.442695
  %v3428 = vpow.pop %v3427
  %v3429 = vadd.f32 %v3428, 1.0
  %v3430 = vrcp.pop %v3429
  %v3431 = vmul.f32 1.0, %v3430
  %v3432 = vmul.f32 %v3407, %v3409
  %v3433 = vmul.f32 %v3408, %v3410
  %v3434 = vsel %vm3350, %v3432, 0.0
  %3435 = vadd.xlane.f32.xlu0 %v3434
  %v3436 = vpop.xlane.xlu0 %3435
  %v3437 = vsel %vm3350, %v3433, 0.0
  %3438 = vadd.xlane.f32.xlu0 %v3437
  %v3439 = vpop.xlane.xlu0 %3438
  %v3440 = vadd.f32 %v3436, %v3439
  %v3441 = vrot.slane %v3440, 4
  %v3442 = vadd.f32 %v3440, %v3441
  %v3443 = vrot.slane %v3442, 2
  %v3444 = vadd.f32 %v3442, %v3443
  %v3445 = vrot.slane %v3444, 1
  %v3446 = vadd.f32 %v3444, %v3445
  %v3447 = vsub.f32 0.0, %v3446
  %v3448 = vmul.f32 %v3447, 1.442695
  %v3449 = vpow.pop %v3448
  %v3450 = vadd.f32 %v3449, 1.0
  %v3451 = vrcp.pop %v3450
  %v3452 = vmul.f32 1.0, %v3451
  %vm3453 = vcmask 1040384
  %v3454 = vsel %vm3453, %v3431, %v3452
  %vm3455 = vcmask 1024
  %3456 = vst.msk [vmem:[%s5] sm:$0x3] %vm3455, %v3454
  // Predicated region
  $region22: #{netlocalD_forward.1} parent=0 // pred_check
    _
  $region23: #{netlocalD_forward.1} parent=0 // pred_check_branch
    %3458 = sbr.rel (0) target = $region25
  $region24: #{netlocalD_forward.1} parent=0 // pred_region
    _
  $region25: #{netlocalD_forward.1} parent=0 // pred_fallthru
    _
  // Predicated region
  $region26: #{netlocalD_forward.1} parent=0 // pred_check
    _
  $region27: #{netlocalD_forward.1} parent=0 // pred_check_branch
    %3460 = sbr.rel (0) target = $region29
  $region28: #{netlocalD_forward.1} parent=0 // pred_region
    _
  $region29: #{netlocalD_forward.1} parent=0 // pred_fallthru
    _

</llo_original>
